<compile_context>
chip_gen: v7x
topology: tpu7x:2x2x1
jax: 0.10.0
libtpu: 0.0.40
codegen_flags: <defaults>
</compile_context>

<pallas_src>
import functools
import math

import numpy as np
import jax
import jax.numpy as jnp
from jax.experimental import pallas as pl
from jax.experimental.pallas import tpu as pltpu

NHEAD = 8                      # nn.TransformerEncoderLayer(nhead=8)
DFF = 2048                     # default dim_feedforward
LN_EPS = 1e-5
BN_EPS = 1e-5
NEG_INF = -1e30

_VMEM_LIMIT = 32 * 1024 * 1024
_CP = pltpu.CompilerParams(vmem_limit_bytes=_VMEM_LIMIT)
_KEYS = list(jax.random.split(jax.random.PRNGKey(0), 512))


def _k():
    return _KEYS.pop()


def _vspecs(n):
    return [pl.BlockSpec(memory_space=pltpu.MemorySpace.VMEM) for _ in range(n)]


def _ospec():
    return pl.BlockSpec(memory_space=pltpu.MemorySpace.VMEM)


# ----------------------------- conv (fused im2col + BN + residual + ReLU) -----------------------------

def _conv_bn_kernel(*refs, k2, Ho, Wo, relu, has_res):
    """One frame per grid step.  Accumulates k2*k2 unit-stride taps as bf16 MXU
    matmuls into an f32 accumulator; fuses BN affine, optional residual, ReLU."""
    if has_res:
        x_ref, w_ref, s_ref, b_ref, res_ref, o_ref = refs
    else:
        x_ref, w_ref, s_ref, b_ref, o_ref = refs
        res_ref = None
    x = x_ref[0, :, :, :]                          # [Hs, Ws, Cin2]  bf16
    cin2 = x.shape[-1]
    cout = w_ref.shape[-1]
    acc = jnp.zeros((Ho * Wo, cout), jnp.float32)
    for a in range(k2):
        for b in range(k2):
            tap = jax.lax.slice(x, (a, b, 0), (a + Ho, b + Wo, cin2))    # unit-stride window
            acc = acc + jnp.dot(tap.reshape(Ho * Wo, cin2), w_ref[a * k2 + b],
                                preferred_element_type=jnp.float32)
    y = acc * s_ref[...] + b_ref[...]              # eval-mode BN affine (f32)
    if has_res:
        y = y + res_ref[0, :, :].astype(jnp.float32)   # fused residual add
    if relu:
        y = jnp.maximum(y, 0.0)
    o_ref[0, :, :] = y.astype(o_ref.dtype)


def _space_to_depth(x, s):
    """[T,H,W,C] -> [T,H/s,W/s,s*s*C]; channel order (di, dj, c)."""
    if s == 1:
        return x
    T, H, W, C = x.shape
    x = x.reshape(T, H // s, s, W // s, s, C)
    x = x.transpose(0, 1, 3, 2, 4, 5)
    return x.reshape(T, H // s, W // s, s * s * C)


def _pad_even(x, pad, s):
    T, H, W, C = x.shape
    Hp, Wp = H + 2 * pad, W + 2 * pad
    eh, ew = (-Hp) % s, (-Wp) % s
    return jnp.pad(x, ((0, 0), (pad, pad + eh), (pad, pad + ew), (0, 0)))


def _prep_conv_weight(w, s):
    """torch conv weight [Cout,Cin,k,k] -> stride-1 weight over the space-to-depth
    input: [k2*k2, s*s*Cin, Cout] bf16, k2 = ceil(k/s)."""
    cout, cin, k, _ = w.shape
    k2 = (k + s - 1) // s
    wp = jnp.zeros((cout, cin, k2 * s, k2 * s), w.dtype).at[:, :, :k, :k].set(w)
    wp = wp.reshape(cout, cin, k2, s, k2, s)       # [co, ci, a, di, b, dj]
    wp = wp.transpose(2, 4, 3, 5, 1, 0)            # [a, b, di, dj, ci, co]
    return wp.reshape(k2 * k2, s * s * cin, cout).astype(jnp.bfloat16)


def conv_bn(x, w, bn, stride, pad, relu, residual=None):
    """conv2d (no bias) + folded eval-mode BN [+ residual] [+ ReLU].
    x: [T,H,W,Cin] bf16 NHWC -> [T,Ho,Wo,Cout] bf16."""
    T, H, W, cin = x.shape
    cout, _, k, _ = w.shape
    s = stride
    k2 = (k + s - 1) // s
    Ho = (H + 2 * pad - k) // s + 1
    Wo = (W + 2 * pad - k) // s + 1
    xs = _space_to_depth(_pad_even(x, pad, s), s)            # [T, Hs, Ws, s*s*cin]
    w2 = _prep_conv_weight(w, s)
    scale, shift = bn
    _, Hs, Ws, cin2 = xs.shape

    in_specs = [
        pl.BlockSpec((1, Hs, Ws, cin2), lambda t: (t, 0, 0, 0)),
        pl.BlockSpec((k2 * k2, cin2, cout), lambda t: (0, 0, 0)),   # fetched once (constant index)
        pl.BlockSpec((1, cout), lambda t: (0, 0)),
        pl.BlockSpec((1, cout), lambda t: (0, 0)),
    ]
    args = [xs, w2, scale.reshape(1, cout), shift.reshape(1, cout)]
    if residual is not None:
        in_specs.append(pl.BlockSpec((1, Ho * Wo, cout), lambda t: (t, 0, 0)))
        args.append(residual.reshape(T, Ho * Wo, cout))

    out = pl.pallas_call(
        functools.partial(_conv_bn_kernel, k2=k2, Ho=Ho, Wo=Wo, relu=relu,
                          has_res=residual is not None),
        out_shape=jax.ShapeDtypeStruct((T, Ho * Wo, cout), jnp.bfloat16),
        grid=(T,),
        in_specs=in_specs,
        out_specs=pl.BlockSpec((1, Ho * Wo, cout), lambda t: (t, 0, 0)),
        compiler_params=pltpu.CompilerParams(
            dimension_semantics=("parallel",), vmem_limit_bytes=_VMEM_LIMIT),
    )(*args)
    return out.reshape(T, Ho, Wo, cout)


# ----------------------------- maxpool 3x3 stride 2 pad 1 -----------------------------

def _maxpool_kernel(x_ref, o_ref, *, Ho, Wo, C):
    x = x_ref[0, :, :, :]                          # [Hs, Ws, 4*C] (space-to-depth, s=2)
    r = None
    for i in range(3):
        for j in range(3):
            a, di = divmod(i, 2)
            b, dj = divmod(j, 2)
            g = di * 2 + dj
            tap = jax.lax.slice(x, (a, b, g * C), (a + Ho, b + Wo, (g + 1) * C))
            r = tap if r is None else jnp.maximum(r, tap)
    o_ref[0, :, :, :] = r


def maxpool3x3s2(x):
    """x: [T,H,W,C] bf16 (post-ReLU, so zero padding == -inf padding)."""
    T, H, W, C = x.shape
    Ho = (H + 2 - 3) // 2 + 1
    Wo = (W + 2 - 3) // 2 + 1
    xs = _space_to_depth(_pad_even(x, 1, 2), 2)              # [T, Hs, Ws, 4C]
    _, Hs, Ws, C4 = xs.shape
    return pl.pallas_call(
        functools.partial(_maxpool_kernel, Ho=Ho, Wo=Wo, C=C),
        out_shape=jax.ShapeDtypeStruct((T, Ho, Wo, C), jnp.bfloat16),
        grid=(T,),
        in_specs=[pl.BlockSpec((1, Hs, Ws, C4), lambda t: (t, 0, 0, 0))],
        out_specs=pl.BlockSpec((1, Ho, Wo, C), lambda t: (t, 0, 0, 0)),
        compiler_params=pltpu.CompilerParams(
            dimension_semantics=("parallel",), vmem_limit_bytes=_VMEM_LIMIT),
    )(xs)


# ----------------------------- avgpool + resnet.fc (fused) -----------------------------

def _pool_fc_kernel(x_ref, w_ref, b_ref, o_ref):
    pooled = jnp.mean(x_ref[...].astype(jnp.float32), axis=1)           # [T, C]
    o_ref[...] = jnp.dot(pooled.astype(jnp.bfloat16), w_ref[...],
                         preferred_element_type=jnp.float32) + b_ref[...]


def pool_fc(x, w, b):
    """Global avgpool over H*W fused with resnet.fc.  x: [T, HW, C] bf16 -> [T, hidden] f32."""
    T, HW, C = x.shape
    hidden = w.shape[1]
    return pl.pallas_call(
        _pool_fc_kernel,
        out_shape=jax.ShapeDtypeStruct((T, hidden), jnp.float32),
        in_specs=_vspecs(3), out_specs=_ospec(), compiler_params=_CP,
    )(x, w.astype(jnp.bfloat16), b.reshape(1, hidden))


# ----------------------------- fused transformer encoder layer -----------------------------

def _encoder_layer_kernel(x_ref, bias_ref, wqkv_ref, bqkv_ref, wo_ref, bo_ref,
                          g1_ref, be1_ref, w1_ref, b1_ref, w2_ref, b2_ref,
                          g2_ref, be2_ref, o_ref, *, nhead, scale):
    """Post-norm nn.TransformerEncoderLayer (ReLU FFN, eval-mode dropout=identity).
    x: [N*S, E]; bias: [N*S, N*S] additive mask (cross-sequence + padded keys = -1e30)."""
    E = x_ref.shape[1]
    D = E // nhead
    x2 = x_ref[...]                                                   # f32
    qkv = jnp.dot(x2.astype(jnp.bfloat16), wqkv_ref[...],
                  preferred_element_type=jnp.float32) + bqkv_ref[...]  # [NS, 3E]
    bias = bias_ref[...]
    attn = jnp.zeros_like(x2)
    for h in range(nhead):                                            # D=4 -> VPU/tiny-MXU work
        qh = qkv[:, h * D:(h + 1) * D]
        kh = qkv[:, E + h * D:E + (h + 1) * D]
        vh = qkv[:, 2 * E + h * D:2 * E + (h + 1) * D]
        s = jnp.einsum('qd,kd->qk', qh, kh,
                       preferred_element_type=jnp.float32) * scale + bias
        m = jnp.max(s, axis=-1, keepdims=True)
        p = jnp.exp(s - m)
        p = p * pl.reciprocal(jnp.sum(p, axis=-1, keepdims=True), approx=True)
        oh = jnp.dot(p, vh, preferred_element_type=jnp.float32)        # [NS, D]
        # out_proj accumulated per head (avoids concat): sum_h oh @ Wout[hD:(h+1)D, :]
        attn = attn + jnp.dot(oh.astype(jnp.bfloat16),
                              wo_ref[h * D:(h + 1) * D, :],
                              preferred_element_type=jnp.float32)
    x2 = x2 + attn + bo_ref[...]
    mu = jnp.mean(x2, axis=-1, keepdims=True)
    xc = x2 - mu
    var = jnp.mean(xc * xc, axis=-1, keepdims=True)
    x2 = xc * jax.lax.rsqrt(var + LN_EPS) * g1_ref[...] + be1_ref[...]
    h1 = jnp.dot(x2.astype(jnp.bfloat16), w1_ref[...],
                 preferred_element_type=jnp.float32) + b1_ref[...]
    h1 = jnp.maximum(h1, 0.0)
    ff = jnp.dot(h1.astype(jnp.bfloat16), w2_ref[...],
                 preferred_element_type=jnp.float32) + b2_ref[...]
    x2 = x2 + ff
    mu = jnp.mean(x2, axis=-1, keepdims=True)
    xc = x2 - mu
    var = jnp.mean(xc * xc, axis=-1, keepdims=True)
    o_ref[...] = xc * jax.lax.rsqrt(var + LN_EPS) * g2_ref[...] + be2_ref[...]


def encoder_layer(x2, bias, p):
    NS, E = x2.shape
    wqkv, bqkv = p['in_proj']
    wo, bo = p['out_proj']
    w1, b1 = p['lin1']
    w2, b2 = p['lin2']
    g1, be1 = p['ln1']
    g2, be2 = p['ln2']
    return pl.pallas_call(
        functools.partial(_encoder_layer_kernel, nhead=NHEAD,
                          scale=1.0 / math.sqrt(E // NHEAD)),
        out_shape=jax.ShapeDtypeStruct((NS, E), jnp.float32),
        in_specs=_vspecs(14), out_specs=_ospec(), compiler_params=_CP,
    )(x2, bias,
      wqkv.astype(jnp.bfloat16), bqkv.reshape(1, 3 * E),
      wo.astype(jnp.bfloat16), bo.reshape(1, E),
      g1.reshape(1, E), be1.reshape(1, E),
      w1.astype(jnp.bfloat16), b1.reshape(1, DFF),
      w2.astype(jnp.bfloat16), b2.reshape(1, E),
      g2.reshape(1, E), be2.reshape(1, E))


# ----------------------------- masked mean + fc2 + fc1 (fused head) -----------------------------

def _head_kernel(x_ref, m_ref, w2_ref, b2_ref, w1_ref, b1_ref, out_ref, hs_ref):
    x = x_ref[...]                                 # [N, S, E]
    m = m_ref[...]                                 # [N, S, 1]
    num = jnp.sum(x * m, axis=1)                   # [N, E]
    den = jnp.maximum(jnp.sum(m, axis=1), 1.0)     # guard zero-length sequences
    h_all = num / den
    h_s = jnp.dot(h_all, w2_ref[...], preferred_element_type=jnp.float32) + b2_ref[...]
    out = jnp.dot(h_s, w1_ref[...], preferred_element_type=jnp.float32) + b1_ref[...]
    hs_ref[...] = h_s
    out_ref[...] = out


def head(x3, mask, fc2, fc1):
    N, S, E = x3.shape
    w2, b2 = fc2
    w1, b1 = fc1
    return pl.pallas_call(
        _head_kernel,
        out_shape=(jax.ShapeDtypeStruct((N, w1.shape[1]), jnp.float32),
                   jax.ShapeDtypeStruct((N, w2.shape[1]), jnp.float32)),
        in_specs=_vspecs(6), out_specs=(_ospec(), _ospec()), compiler_params=_CP,
    )(x3, mask, w2, b2.reshape(1, -1), w1, b1.reshape(1, -1))


# ----------------------------- parameter init ------------------------------

def init_conv(cout, cin, k):
    std = math.sqrt(2.0 / (cin * k * k))
    return jax.random.normal(_k(), (cout, cin, k, k), jnp.float32) * std


def init_bn(c):
    gamma = 1.0 + 0.1 * jax.random.normal(_k(), (c,), jnp.float32)
    beta = 0.05 * jax.random.normal(_k(), (c,), jnp.float32)
    mean = 0.05 * jax.random.normal(_k(), (c,), jnp.float32)
    var = 1.0 + 0.1 * jax.random.uniform(_k(), (c,), jnp.float32)
    scale = gamma / jnp.sqrt(var + BN_EPS)
    shift = beta - mean * scale
    return scale, shift


def init_linear(cin, cout):
    bound = 1.0 / math.sqrt(cin)
    w = jax.random.uniform(_k(), (cin, cout), jnp.float32, -bound, bound)   # stored [in, out]
    b = jax.random.uniform(_k(), (cout,), jnp.float32, -bound, bound)
    return w, b


def init_resnet18(hidden):
    p = {'conv1': init_conv(64, 3, 7), 'bn1': init_bn(64)}
    layers = []
    cin = 64
    for li, cout in enumerate([64, 128, 256, 512]):
        blocks = []
        for bi in range(2):
            stride = 2 if (li > 0 and bi == 0) else 1
            b = {'conv1': init_conv(cout, cin, 3), 'bn1': init_bn(cout),
                 'conv2': init_conv(cout, cout, 3), 'bn2': init_bn(cout),
                 'stride': stride}
            if stride != 1 or cin != cout:
                b['down_conv'] = init_conv(cout, cin, 1)
                b['down_bn'] = init_bn(cout)
            blocks.append(b)
            cin = cout
        layers.append(blocks)
    p['layers'] = layers
    p['fc'] = init_linear(512, hidden)        # resnet.fc replaced by Linear(512, hidden)
    return p


def init_encoder_layer(E):
    return {'in_proj': init_linear(E, 3 * E),
            'out_proj': init_linear(E, E),
            'lin1': init_linear(E, DFF),
            'lin2': init_linear(DFF, E),
            'ln1': (jnp.ones((E,), jnp.float32), jnp.zeros((E,), jnp.float32)),
            'ln2': (jnp.ones((E,), jnp.float32), jnp.zeros((E,), jnp.float32))}


def positional_encoding(d_model, max_len=5000):
    position = jnp.arange(max_len, dtype=jnp.float32)[:, None]
    div_term = jnp.exp(jnp.arange(0, d_model, 2, dtype=jnp.float32)
                       * (-math.log(10000.0) / d_model))
    pe = jnp.zeros((max_len, d_model), jnp.float32)
    pe = pe.at[:, 0::2].set(jnp.sin(position * div_term))
    pe = pe.at[:, 1::2].set(jnp.cos(position * div_term))
    return pe                                  # [max_len, d_model]


def init_model(num_classes, hidden_feature_size=128):
    return {'hidden': hidden_feature_size,
            'resnet': init_resnet18(hidden_feature_size),
            'pe': positional_encoding(hidden_feature_size),
            'encoder_layers': [init_encoder_layer(hidden_feature_size) for _ in range(2)],
            'fc2': init_linear(hidden_feature_size, 8),
            'fc1': init_linear(8, num_classes)}


# ----------------------------- model forward ------------------------------

def resnet18_forward(x, p):
    """x: [T, H, W, 3] bf16 NHWC -> [T, hidden] f32."""
    x = conv_bn(x, p['conv1'], p['bn1'], stride=2, pad=3, relu=True)
    x = maxpool3x3s2(x)
    for blocks in p['layers']:
        for b in blocks:
            if 'down_conv' in b:
                idn = conv_bn(x, b['down_conv'], b['down_bn'],
                              stride=b['stride'], pad=0, relu=False)
            else:
                idn = x
            out = conv_bn(x, b['conv1'], b['bn1'], stride=b['stride'], pad=1, relu=True)
            # conv2 + BN + residual add + ReLU fused in one kernel
            x = conv_bn(out, b['conv2'], b['bn2'], stride=1, pad=1, relu=True,
                        residual=idn)
    T, H, W, C = x.shape
    w, bb = p['fc']
    return pool_fc(x.reshape(T, H * W, C), w, bb)


def forward(params, x_images, x_clinical=None):
    """x_images: list of [T_i, 3, H, W] image sequences (imgOnly: x_clinical unused)."""
    lens = [int(img.shape[0]) for img in x_images]
    # eval-mode ResNet is per-sample independent: one batched pass over the concatenation.
    x = jnp.concatenate(x_images, axis=0)
    x = jnp.transpose(x, (0, 2, 3, 1)).astype(jnp.bfloat16)          # NHWC bf16
    feats = resnet18_forward(x, params['resnet'])                    # [sum(T_i), E] f32

    N, S, E = len(lens), max(lens), params['hidden']
    # pack_sequence + pad_packed_sequence: one gather instead of N dynamic-update-slices
    starts = np.concatenate([[0], np.cumsum(lens)[:-1]])
    idx = np.stack([starts[n] + np.minimum(np.arange(S), lens[n] - 1) for n in range(N)])
    valid = np.stack([np.arange(S) < lens[n] for n in range(N)])     # [N, S] bool
    padded = jnp.where(jnp.asarray(valid)[:, :, None], feats[jnp.asarray(idx)], 0.0)

    # PositionalEncoding (dropout = identity in eval); batch-first layout [N, S, E]
    x2 = (padded + params['pe'][:S][None, :, :]).reshape(N * S, E)

    # Additive attention mask over the flattened (n, s) token axis:
    # 0 where key is in the same sequence and not padded, else -1e30.
    r = np.arange(N * S)
    same = (r[:, None] // S) == (r[None, :] // S)
    kvalid = valid.reshape(-1)[None, :]
    bias = jnp.asarray(np.where(same & kvalid, 0.0, NEG_INF), dtype=jnp.float32)

    for layer_p in params['encoder_layers']:
        x2 = encoder_layer(x2, bias, layer_p)

    mask = jnp.asarray(valid, jnp.float32)[:, :, None]               # [N, S, 1]
    outputs, h_s = head(x2.reshape(N, S, E), mask, params['fc2'], params['fc1'])
    return outputs, h_s


# ----------------------------- main ------------------------------

if __name__ == "__main__":
    num_classes = 5
    hidden = 32                      # hidden_feature_size (small, divisible by nhead=8)
    params = init_model(num_classes, hidden_feature_size=hidden)

    k1, k2 = jax.random.split(jax.random.PRNGKey(0))
    x_images = [jax.random.normal(k1, (3, 3, 32, 32), jnp.float32),   # sequence of 3 frames
                jax.random.normal(k2, (2, 3, 32, 32), jnp.float32)]   # sequence of 2 frames

    outputs, h_s = forward(params, x_images, x_clinical=None)
    outputs, h_s = jax.block_until_ready((outputs, h_s))

    assert outputs.shape == (2, num_classes), outputs.shape
    assert h_s.shape == (2, 8), h_s.shape
    assert bool(jnp.all(jnp.isfinite(outputs))) and bool(jnp.all(jnp.isfinite(h_s)))
    print("KERNEL_OK")
</pallas_src>

<mosaic_0001>
module attributes {stable_mosaic.version = 11 : i64} {
  func.func @_conv_bn_kernel(%arg0: i32, %arg1: memref<1x19x19x12xbf16, #tpu.memory_space<vmem>>, %arg2: memref<16x12x64xbf16, #tpu.memory_space<vmem>>, %arg3: memref<1x64xf32, #tpu.memory_space<vmem>>, %arg4: memref<1x64xf32, #tpu.memory_space<vmem>>, %arg5: memref<1x256x64xbf16, #tpu.memory_space<vmem>>) attributes {dimension_semantics = [#tpu.dimension_semantics<parallel>], iteration_bounds = array<i64: 5>, scalar_prefetch = 0 : i64, scratch_operands = 0 : i64, tpu.core_type = #tpu.core_type<tc>, window_params = [{transform_indices = @transform_0, window_bounds = array<i64: 1, 19, 19, 12>}, {pipeline_mode = #tpu.pipeline_mode<synchronous>, transform_indices = @transform_1, window_bounds = array<i64: 16, 12, 64>}, {pipeline_mode = #tpu.pipeline_mode<synchronous>, transform_indices = @transform_2, window_bounds = array<i64: 1, 64>}, {pipeline_mode = #tpu.pipeline_mode<synchronous>, transform_indices = @transform_3, window_bounds = array<i64: 1, 64>}, {transform_indices = @transform_4, window_bounds = array<i64: 1, 256, 64>}]} {
    %c0 = arith.constant 0 : index
    %c0_0 = arith.constant 0 : index
    %c0_1 = arith.constant 0 : index
    %c0_2 = arith.constant 0 : index
    %0 = vector.load %arg1[%c0, %c0_0, %c0_1, %c0_2] : memref<1x19x19x12xbf16, #tpu.memory_space<vmem>>, vector<1x19x19x12xbf16>
    %1 = vector.shape_cast %0 : vector<1x19x19x12xbf16> to vector<19x19x12xbf16>
    %cst = arith.constant 0.000000e+00 : f32
    %2 = vector.broadcast %cst : f32 to vector<256x64xf32>
    %3 = vector.extract_strided_slice %1 {offsets = [0, 0, 0], sizes = [16, 16, 12], strides = [1, 1, 1]} : vector<19x19x12xbf16> to vector<16x16x12xbf16>
    %4 = vector.shape_cast %3 : vector<16x16x12xbf16> to vector<256x12xbf16>
    %c0_3 = arith.constant 0 : index
    %c0_4 = arith.constant 0 : index
    %c0_5 = arith.constant 0 : index
    %5 = vector.load %arg2[%c0_3, %c0_4, %c0_5] : memref<16x12x64xbf16, #tpu.memory_space<vmem>>, vector<1x12x64xbf16>
    %6 = vector.shape_cast %5 : vector<1x12x64xbf16> to vector<12x64xbf16>
    %cst_6 = arith.constant dense<0.000000e+00> : vector<256x64xf32>
    %7 = tpu.matmul %4, %6, %cst_6 {dimension_numbers = #tpu.dot_dimension_numbers<[1], [0], [0], [1], [0, 0, 1, 1], [], []>} : vector<256x12xbf16>, vector<12x64xbf16>, vector<256x64xf32> -> vector<256x64xf32>
    %8 = arith.addf %2, %7 : vector<256x64xf32>
    %9 = vector.extract_strided_slice %1 {offsets = [0, 1, 0], sizes = [16, 16, 12], strides = [1, 1, 1]} : vector<19x19x12xbf16> to vector<16x16x12xbf16>
    %10 = vector.shape_cast %9 : vector<16x16x12xbf16> to vector<256x12xbf16>
    %c1 = arith.constant 1 : index
    %c0_7 = arith.constant 0 : index
    %c0_8 = arith.constant 0 : index
    %11 = vector.load %arg2[%c1, %c0_7, %c0_8] : memref<16x12x64xbf16, #tpu.memory_space<vmem>>, vector<1x12x64xbf16>
    %12 = vector.shape_cast %11 : vector<1x12x64xbf16> to vector<12x64xbf16>
    %cst_9 = arith.constant dense<0.000000e+00> : vector<256x64xf32>
    %13 = tpu.matmul %10, %12, %cst_9 {dimension_numbers = #tpu.dot_dimension_numbers<[1], [0], [0], [1], [0, 0, 1, 1], [], []>} : vector<256x12xbf16>, vector<12x64xbf16>, vector<256x64xf32> -> vector<256x64xf32>
    %14 = arith.addf %8, %13 : vector<256x64xf32>
    %15 = vector.extract_strided_slice %1 {offsets = [0, 2, 0], sizes = [16, 16, 12], strides = [1, 1, 1]} : vector<19x19x12xbf16> to vector<16x16x12xbf16>
    %16 = vector.shape_cast %15 : vector<16x16x12xbf16> to vector<256x12xbf16>
    %c2 = arith.constant 2 : index
    %c0_10 = arith.constant 0 : index
    %c0_11 = arith.constant 0 : index
    %17 = vector.load %arg2[%c2, %c0_10, %c0_11] : memref<16x12x64xbf16, #tpu.memory_space<vmem>>, vector<1x12x64xbf16>
    %18 = vector.shape_cast %17 : vector<1x12x64xbf16> to vector<12x64xbf16>
    %cst_12 = arith.constant dense<0.000000e+00> : vector<256x64xf32>
    %19 = tpu.matmul %16, %18, %cst_12 {dimension_numbers = #tpu.dot_dimension_numbers<[1], [0], [0], [1], [0, 0, 1, 1], [], []>} : vector<256x12xbf16>, vector<12x64xbf16>, vector<256x64xf32> -> vector<256x64xf32>
    %20 = arith.addf %14, %19 : vector<256x64xf32>
    %21 = vector.extract_strided_slice %1 {offsets = [0, 3, 0], sizes = [16, 16, 12], strides = [1, 1, 1]} : vector<19x19x12xbf16> to vector<16x16x12xbf16>
    %22 = vector.shape_cast %21 : vector<16x16x12xbf16> to vector<256x12xbf16>
    %c3 = arith.constant 3 : index
    %c0_13 = arith.constant 0 : index
    %c0_14 = arith.constant 0 : index
    %23 = vector.load %arg2[%c3, %c0_13, %c0_14] : memref<16x12x64xbf16, #tpu.memory_space<vmem>>, vector<1x12x64xbf16>
    %24 = vector.shape_cast %23 : vector<1x12x64xbf16> to vector<12x64xbf16>
    %cst_15 = arith.constant dense<0.000000e+00> : vector<256x64xf32>
    %25 = tpu.matmul %22, %24, %cst_15 {dimension_numbers = #tpu.dot_dimension_numbers<[1], [0], [0], [1], [0, 0, 1, 1], [], []>} : vector<256x12xbf16>, vector<12x64xbf16>, vector<256x64xf32> -> vector<256x64xf32>
    %26 = arith.addf %20, %25 : vector<256x64xf32>
    %27 = vector.extract_strided_slice %1 {offsets = [1, 0, 0], sizes = [16, 16, 12], strides = [1, 1, 1]} : vector<19x19x12xbf16> to vector<16x16x12xbf16>
    %28 = vector.shape_cast %27 : vector<16x16x12xbf16> to vector<256x12xbf16>
    %c4 = arith.constant 4 : index
    %c0_16 = arith.constant 0 : index
    %c0_17 = arith.constant 0 : index
    %29 = vector.load %arg2[%c4, %c0_16, %c0_17] : memref<16x12x64xbf16, #tpu.memory_space<vmem>>, vector<1x12x64xbf16>
    %30 = vector.shape_cast %29 : vector<1x12x64xbf16> to vector<12x64xbf16>
    %cst_18 = arith.constant dense<0.000000e+00> : vector<256x64xf32>
    %31 = tpu.matmul %28, %30, %cst_18 {dimension_numbers = #tpu.dot_dimension_numbers<[1], [0], [0], [1], [0, 0, 1, 1], [], []>} : vector<256x12xbf16>, vector<12x64xbf16>, vector<256x64xf32> -> vector<256x64xf32>
    %32 = arith.addf %26, %31 : vector<256x64xf32>
    %33 = vector.extract_strided_slice %1 {offsets = [1, 1, 0], sizes = [16, 16, 12], strides = [1, 1, 1]} : vector<19x19x12xbf16> to vector<16x16x12xbf16>
    %34 = vector.shape_cast %33 : vector<16x16x12xbf16> to vector<256x12xbf16>
    %c5 = arith.constant 5 : index
    %c0_19 = arith.constant 0 : index
    %c0_20 = arith.constant 0 : index
    %35 = vector.load %arg2[%c5, %c0_19, %c0_20] : memref<16x12x64xbf16, #tpu.memory_space<vmem>>, vector<1x12x64xbf16>
    %36 = vector.shape_cast %35 : vector<1x12x64xbf16> to vector<12x64xbf16>
    %cst_21 = arith.constant dense<0.000000e+00> : vector<256x64xf32>
    %37 = tpu.matmul %34, %36, %cst_21 {dimension_numbers = #tpu.dot_dimension_numbers<[1], [0], [0], [1], [0, 0, 1, 1], [], []>} : vector<256x12xbf16>, vector<12x64xbf16>, vector<256x64xf32> -> vector<256x64xf32>
    %38 = arith.addf %32, %37 : vector<256x64xf32>
    %39 = vector.extract_strided_slice %1 {offsets = [1, 2, 0], sizes = [16, 16, 12], strides = [1, 1, 1]} : vector<19x19x12xbf16> to vector<16x16x12xbf16>
    %40 = vector.shape_cast %39 : vector<16x16x12xbf16> to vector<256x12xbf16>
    %c6 = arith.constant 6 : index
    %c0_22 = arith.constant 0 : index
    %c0_23 = arith.constant 0 : index
    %41 = vector.load %arg2[%c6, %c0_22, %c0_23] : memref<16x12x64xbf16, #tpu.memory_space<vmem>>, vector<1x12x64xbf16>
    %42 = vector.shape_cast %41 : vector<1x12x64xbf16> to vector<12x64xbf16>
    %cst_24 = arith.constant dense<0.000000e+00> : vector<256x64xf32>
    %43 = tpu.matmul %40, %42, %cst_24 {dimension_numbers = #tpu.dot_dimension_numbers<[1], [0], [0], [1], [0, 0, 1, 1], [], []>} : vector<256x12xbf16>, vector<12x64xbf16>, vector<256x64xf32> -> vector<256x64xf32>
    %44 = arith.addf %38, %43 : vector<256x64xf32>
    %45 = vector.extract_strided_slice %1 {offsets = [1, 3, 0], sizes = [16, 16, 12], strides = [1, 1, 1]} : vector<19x19x12xbf16> to vector<16x16x12xbf16>
    %46 = vector.shape_cast %45 : vector<16x16x12xbf16> to vector<256x12xbf16>
    %c7 = arith.constant 7 : index
    %c0_25 = arith.constant 0 : index
    %c0_26 = arith.constant 0 : index
    %47 = vector.load %arg2[%c7, %c0_25, %c0_26] : memref<16x12x64xbf16, #tpu.memory_space<vmem>>, vector<1x12x64xbf16>
    %48 = vector.shape_cast %47 : vector<1x12x64xbf16> to vector<12x64xbf16>
    %cst_27 = arith.constant dense<0.000000e+00> : vector<256x64xf32>
    %49 = tpu.matmul %46, %48, %cst_27 {dimension_numbers = #tpu.dot_dimension_numbers<[1], [0], [0], [1], [0, 0, 1, 1], [], []>} : vector<256x12xbf16>, vector<12x64xbf16>, vector<256x64xf32> -> vector<256x64xf32>
    %50 = arith.addf %44, %49 : vector<256x64xf32>
    %51 = vector.extract_strided_slice %1 {offsets = [2, 0, 0], sizes = [16, 16, 12], strides = [1, 1, 1]} : vector<19x19x12xbf16> to vector<16x16x12xbf16>
    %52 = vector.shape_cast %51 : vector<16x16x12xbf16> to vector<256x12xbf16>
    %c8 = arith.constant 8 : index
    %c0_28 = arith.constant 0 : index
    %c0_29 = arith.constant 0 : index
    %53 = vector.load %arg2[%c8, %c0_28, %c0_29] : memref<16x12x64xbf16, #tpu.memory_space<vmem>>, vector<1x12x64xbf16>
    %54 = vector.shape_cast %53 : vector<1x12x64xbf16> to vector<12x64xbf16>
    %cst_30 = arith.constant dense<0.000000e+00> : vector<256x64xf32>
    %55 = tpu.matmul %52, %54, %cst_30 {dimension_numbers = #tpu.dot_dimension_numbers<[1], [0], [0], [1], [0, 0, 1, 1], [], []>} : vector<256x12xbf16>, vector<12x64xbf16>, vector<256x64xf32> -> vector<256x64xf32>
    %56 = arith.addf %50, %55 : vector<256x64xf32>
    %57 = vector.extract_strided_slice %1 {offsets = [2, 1, 0], sizes = [16, 16, 12], strides = [1, 1, 1]} : vector<19x19x12xbf16> to vector<16x16x12xbf16>
    %58 = vector.shape_cast %57 : vector<16x16x12xbf16> to vector<256x12xbf16>
    %c9 = arith.constant 9 : index
    %c0_31 = arith.constant 0 : index
    %c0_32 = arith.constant 0 : index
    %59 = vector.load %arg2[%c9, %c0_31, %c0_32] : memref<16x12x64xbf16, #tpu.memory_space<vmem>>, vector<1x12x64xbf16>
    %60 = vector.shape_cast %59 : vector<1x12x64xbf16> to vector<12x64xbf16>
    %cst_33 = arith.constant dense<0.000000e+00> : vector<256x64xf32>
    %61 = tpu.matmul %58, %60, %cst_33 {dimension_numbers = #tpu.dot_dimension_numbers<[1], [0], [0], [1], [0, 0, 1, 1], [], []>} : vector<256x12xbf16>, vector<12x64xbf16>, vector<256x64xf32> -> vector<256x64xf32>
    %62 = arith.addf %56, %61 : vector<256x64xf32>
    %63 = vector.extract_strided_slice %1 {offsets = [2, 2, 0], sizes = [16, 16, 12], strides = [1, 1, 1]} : vector<19x19x12xbf16> to vector<16x16x12xbf16>
    %64 = vector.shape_cast %63 : vector<16x16x12xbf16> to vector<256x12xbf16>
    %c10 = arith.constant 10 : index
    %c0_34 = arith.constant 0 : index
    %c0_35 = arith.constant 0 : index
    %65 = vector.load %arg2[%c10, %c0_34, %c0_35] : memref<16x12x64xbf16, #tpu.memory_space<vmem>>, vector<1x12x64xbf16>
    %66 = vector.shape_cast %65 : vector<1x12x64xbf16> to vector<12x64xbf16>
    %cst_36 = arith.constant dense<0.000000e+00> : vector<256x64xf32>
    %67 = tpu.matmul %64, %66, %cst_36 {dimension_numbers = #tpu.dot_dimension_numbers<[1], [0], [0], [1], [0, 0, 1, 1], [], []>} : vector<256x12xbf16>, vector<12x64xbf16>, vector<256x64xf32> -> vector<256x64xf32>
    %68 = arith.addf %62, %67 : vector<256x64xf32>
    %69 = vector.extract_strided_slice %1 {offsets = [2, 3, 0], sizes = [16, 16, 12], strides = [1, 1, 1]} : vector<19x19x12xbf16> to vector<16x16x12xbf16>
    %70 = vector.shape_cast %69 : vector<16x16x12xbf16> to vector<256x12xbf16>
    %c11 = arith.constant 11 : index
    %c0_37 = arith.constant 0 : index
    %c0_38 = arith.constant 0 : index
    %71 = vector.load %arg2[%c11, %c0_37, %c0_38] : memref<16x12x64xbf16, #tpu.memory_space<vmem>>, vector<1x12x64xbf16>
    %72 = vector.shape_cast %71 : vector<1x12x64xbf16> to vector<12x64xbf16>
    %cst_39 = arith.constant dense<0.000000e+00> : vector<256x64xf32>
    %73 = tpu.matmul %70, %72, %cst_39 {dimension_numbers = #tpu.dot_dimension_numbers<[1], [0], [0], [1], [0, 0, 1, 1], [], []>} : vector<256x12xbf16>, vector<12x64xbf16>, vector<256x64xf32> -> vector<256x64xf32>
    %74 = arith.addf %68, %73 : vector<256x64xf32>
    %75 = vector.extract_strided_slice %1 {offsets = [3, 0, 0], sizes = [16, 16, 12], strides = [1, 1, 1]} : vector<19x19x12xbf16> to vector<16x16x12xbf16>
    %76 = vector.shape_cast %75 : vector<16x16x12xbf16> to vector<256x12xbf16>
    %c12 = arith.constant 12 : index
    %c0_40 = arith.constant 0 : index
    %c0_41 = arith.constant 0 : index
    %77 = vector.load %arg2[%c12, %c0_40, %c0_41] : memref<16x12x64xbf16, #tpu.memory_space<vmem>>, vector<1x12x64xbf16>
    %78 = vector.shape_cast %77 : vector<1x12x64xbf16> to vector<12x64xbf16>
    %cst_42 = arith.constant dense<0.000000e+00> : vector<256x64xf32>
    %79 = tpu.matmul %76, %78, %cst_42 {dimension_numbers = #tpu.dot_dimension_numbers<[1], [0], [0], [1], [0, 0, 1, 1], [], []>} : vector<256x12xbf16>, vector<12x64xbf16>, vector<256x64xf32> -> vector<256x64xf32>
    %80 = arith.addf %74, %79 : vector<256x64xf32>
    %81 = vector.extract_strided_slice %1 {offsets = [3, 1, 0], sizes = [16, 16, 12], strides = [1, 1, 1]} : vector<19x19x12xbf16> to vector<16x16x12xbf16>
    %82 = vector.shape_cast %81 : vector<16x16x12xbf16> to vector<256x12xbf16>
    %c13 = arith.constant 13 : index
    %c0_43 = arith.constant 0 : index
    %c0_44 = arith.constant 0 : index
    %83 = vector.load %arg2[%c13, %c0_43, %c0_44] : memref<16x12x64xbf16, #tpu.memory_space<vmem>>, vector<1x12x64xbf16>
    %84 = vector.shape_cast %83 : vector<1x12x64xbf16> to vector<12x64xbf16>
    %cst_45 = arith.constant dense<0.000000e+00> : vector<256x64xf32>
    %85 = tpu.matmul %82, %84, %cst_45 {dimension_numbers = #tpu.dot_dimension_numbers<[1], [0], [0], [1], [0, 0, 1, 1], [], []>} : vector<256x12xbf16>, vector<12x64xbf16>, vector<256x64xf32> -> vector<256x64xf32>
    %86 = arith.addf %80, %85 : vector<256x64xf32>
    %87 = vector.extract_strided_slice %1 {offsets = [3, 2, 0], sizes = [16, 16, 12], strides = [1, 1, 1]} : vector<19x19x12xbf16> to vector<16x16x12xbf16>
    %88 = vector.shape_cast %87 : vector<16x16x12xbf16> to vector<256x12xbf16>
    %c14 = arith.constant 14 : index
    %c0_46 = arith.constant 0 : index
    %c0_47 = arith.constant 0 : index
    %89 = vector.load %arg2[%c14, %c0_46, %c0_47] : memref<16x12x64xbf16, #tpu.memory_space<vmem>>, vector<1x12x64xbf16>
    %90 = vector.shape_cast %89 : vector<1x12x64xbf16> to vector<12x64xbf16>
    %cst_48 = arith.constant dense<0.000000e+00> : vector<256x64xf32>
    %91 = tpu.matmul %88, %90, %cst_48 {dimension_numbers = #tpu.dot_dimension_numbers<[1], [0], [0], [1], [0, 0, 1, 1], [], []>} : vector<256x12xbf16>, vector<12x64xbf16>, vector<256x64xf32> -> vector<256x64xf32>
    %92 = arith.addf %86, %91 : vector<256x64xf32>
    %93 = vector.extract_strided_slice %1 {offsets = [3, 3, 0], sizes = [16, 16, 12], strides = [1, 1, 1]} : vector<19x19x12xbf16> to vector<16x16x12xbf16>
    %94 = vector.shape_cast %93 : vector<16x16x12xbf16> to vector<256x12xbf16>
    %c15 = arith.constant 15 : index
    %c0_49 = arith.constant 0 : index
    %c0_50 = arith.constant 0 : index
    %95 = vector.load %arg2[%c15, %c0_49, %c0_50] : memref<16x12x64xbf16, #tpu.memory_space<vmem>>, vector<1x12x64xbf16>
    %96 = vector.shape_cast %95 : vector<1x12x64xbf16> to vector<12x64xbf16>
    %cst_51 = arith.constant dense<0.000000e+00> : vector<256x64xf32>
    %97 = tpu.matmul %94, %96, %cst_51 {dimension_numbers = #tpu.dot_dimension_numbers<[1], [0], [0], [1], [0, 0, 1, 1], [], []>} : vector<256x12xbf16>, vector<12x64xbf16>, vector<256x64xf32> -> vector<256x64xf32>
    %98 = arith.addf %92, %97 : vector<256x64xf32>
    %c0_52 = arith.constant 0 : index
    %c0_53 = arith.constant 0 : index
    %99 = vector.load %arg3[%c0_52, %c0_53] : memref<1x64xf32, #tpu.memory_space<vmem>>, vector<1x64xf32>
    %100 = vector.broadcast %99 : vector<1x64xf32> to vector<256x64xf32>
    %101 = arith.mulf %98, %100 : vector<256x64xf32>
    %c0_54 = arith.constant 0 : index
    %c0_55 = arith.constant 0 : index
    %102 = vector.load %arg4[%c0_54, %c0_55] : memref<1x64xf32, #tpu.memory_space<vmem>>, vector<1x64xf32>
    %103 = vector.broadcast %102 : vector<1x64xf32> to vector<256x64xf32>
    %104 = arith.addf %101, %103 : vector<256x64xf32>
    %cst_56 = arith.constant 0.000000e+00 : f32
    %105 = vector.broadcast %cst_56 : f32 to vector<256x64xf32>
    %106 = arith.maximumf %104, %105 : vector<256x64xf32>
    %107 = arith.truncf %106 : vector<256x64xf32> to vector<256x64xbf16>
    %c0_57 = arith.constant 0 : index
    %c0_58 = arith.constant 0 : index
    %c0_59 = arith.constant 0 : index
    %108 = vector.load %arg5[%c0_57, %c0_58, %c0_59] : memref<1x256x64xbf16, #tpu.memory_space<vmem>>, vector<1x256x64xbf16>
    %109 = vector.shape_cast %108 : vector<1x256x64xbf16> to vector<256x64xbf16>
    %110 = vector.shape_cast %107 : vector<256x64xbf16> to vector<1x256x64xbf16>
    tpu.vector_store %arg5[%c0_57, %c0_58, %c0_59], %110 {strides = array<i32>} : memref<1x256x64xbf16, #tpu.memory_space<vmem>>, vector<1x256x64xbf16>,
    return
  }
  func.func @transform_0(%arg0: i32) -> (i32, i32, i32, i32) {
    %c0_i32 = arith.constant 0 : i32
    %c0_i32_0 = arith.constant 0 : i32
    %c0_i32_1 = arith.constant 0 : i32
    %c0_i32_2 = arith.constant 0 : i32
    return %arg0, %c0_i32, %c0_i32_0, %c0_i32_1 : i32, i32, i32, i32
  }
  func.func @transform_1(%arg0: i32) -> (i32, i32, i32) {
    %c0_i32 = arith.constant 0 : i32
    %c0_i32_0 = arith.constant 0 : i32
    %c0_i32_1 = arith.constant 0 : i32
    %c0_i32_2 = arith.constant 0 : i32
    return %c0_i32, %c0_i32_0, %c0_i32_1 : i32, i32, i32
  }
  func.func @transform_2(%arg0: i32) -> (i32, i32) {
    %c0_i32 = arith.constant 0 : i32
    %c0_i32_0 = arith.constant 0 : i32
    %c0_i32_1 = arith.constant 0 : i32
    return %c0_i32, %c0_i32_0 : i32, i32
  }
  func.func @transform_3(%arg0: i32) -> (i32, i32) {
    %c0_i32 = arith.constant 0 : i32
    %c0_i32_0 = arith.constant 0 : i32
    %c0_i32_1 = arith.constant 0 : i32
    return %c0_i32, %c0_i32_0 : i32, i32
  }
  func.func @transform_4(%arg0: i32) -> (i32, i32, i32) {
    %c0_i32 = arith.constant 0 : i32
    %c0_i32_0 = arith.constant 0 : i32
    %c0_i32_1 = arith.constant 0 : i32
    return %arg0, %c0_i32, %c0_i32_0 : i32, i32, i32
  }
}

</mosaic_0001>

<llo_original>
// kernel: tpu_custom_call.1
$region0: #{tpu_custom_call.1}
  #allocation0 [shape = 'u32[]', space=smem, size = 0x4, offset = 0x4, fixed_abs, tag = 'smem constant byte address 0x4 - core index']
  #allocation1 [shape = 'u32[144,128]{1,0:T(1,128)}', space=vmem, size = 0x12000, scoped, tag = 'internal scratch']
  %s0 = inlined_call_operand.vmem [shape: bf16[5,19,19,12], index: 0, kind: input, shape index: {}]
  %s1 = inlined_call_operand.vmem [shape: bf16[16,12,64], index: 1, kind: input, shape index: {}]
  %s2 = inlined_call_operand.vmem [shape: f32[1,64], index: 2, kind: input, shape index: {}]
  %s3 = inlined_call_operand.vmem [shape: f32[1,64], index: 3, kind: input, shape index: {}]
  %s4 = inlined_call_operand.vmem [shape: bf16[5,256,64], index: 4, kind: output, shape index: {}]
  %s5 = sld [smem:[#allocation0]]
  $region49: #{tpu_custom_call.1} parent=0
    _
  %s7 = ssub.s32 1, %s5
  %s8 = scalar_select 0, %s7, %s5
  loop: start=0, step=1, limit=7
  $region2: #{tpu_custom_call.1} parent=0 // loop_pre_header
    _
  $region3: #{tpu_custom_call.1} parent=0 // loop_header
    %s10 = sphi 0, %s14
    %p11 = scmp.ge.s32.totalorder %s10, 7
    %s20 = sphi 0, %s22
    %s23 = sphi 0, %s20
    %s24 = sphi 0, %s23
    %s40 = sphi 0, %s24
    %s44 = sphi 0, %s44
    %s46 = sphi 0, %s44
    %s47 = sphi 0, %s46
    %s61 = sphi 0, %s47
    %s65 = sphi 0, %s65
    %s67 = sphi 0, %s65
    %s68 = sphi 0, %s67
    %s82 = sphi 0, %s68
    %s86 = sphi 0, %s86
    %s88 = sphi 0, %s86
    %s89 = sphi 0, %s88
    %s103 = sphi 0, %s89
    %s109 = sphi 0, %s111
    %s112 = sphi 0, %s109
    %s113 = sphi 0, %s112
    %s129 = sphi 0, %s113
  $region4: #{tpu_custom_call.1} parent=0 // loop_header_branch
    %13 = sbr.rel (%p11) target = $region8
  $region5: #{tpu_custom_call.1} parent=0 // loop_body
    %s15 = ssub.s32 %s10, 1
    %s16 = ssub.s32 %s10, 2
    %s17 = sadd.s32 %s10, 1
    %s18 = ssub.s32 %s10, %s17
    %p19 = scmp.eq.s32.totalorder %s18, 0
    %s21 = sadd.s32 %s20, 1
    %s22 = scalar_select %p19, %s20, %s21
    %p25 = pneg %p19
    %p26 = scmp.eq.s32.totalorder %s10, 4
    %p27 = por %p25, %p26
    %p28 = scmp.ne.s32.totalorder %s20, %s23
    %p29 = scmp.eq.s32.totalorder %s10, 0
    %p30 = por %p28, %p29
    %p31 = scmp.ne.s32.totalorder %s20, %s23
    %p32 = scmp.eq.s32.totalorder %s15, 4
    %p33 = por %p31, %p32
    %p34 = scmp.ne.s32.totalorder %s23, %s24
    %p35 = scmp.eq.s32.totalorder %s15, 0
    %p36 = por %p34, %p35
    %p37 = scmp.ne.s32.totalorder %s23, %s24
    %p38 = scmp.eq.s32.totalorder %s16, 4
    %p39 = por %p37, %p38
    %p41 = scmp.ne.s32.totalorder %s24, %s40
    %p42 = scmp.eq.s32.totalorder %s16, 0
    %p43 = por %p41, %p42
    %s45 = sadd.s32 %s44, 1
    %p48 = scmp.eq.s32.totalorder %s10, 4
    %p49 = scmp.ne.s32.totalorder %s44, %s46
    %p50 = scmp.eq.s32.totalorder %s10, 0
    %p51 = por %p49, %p50
    %p52 = scmp.ne.s32.totalorder %s44, %s46
    %p53 = scmp.eq.s32.totalorder %s15, 4
    %p54 = por %p52, %p53
    %p55 = scmp.ne.s32.totalorder %s46, %s47
    %p56 = scmp.eq.s32.totalorder %s15, 0
    %p57 = por %p55, %p56
    %p58 = scmp.ne.s32.totalorder %s46, %s47
    %p59 = scmp.eq.s32.totalorder %s16, 4
    %p60 = por %p58, %p59
    %p62 = scmp.ne.s32.totalorder %s47, %s61
    %p63 = scmp.eq.s32.totalorder %s16, 0
    %p64 = por %p62, %p63
    %s66 = sadd.s32 %s65, 1
    %p69 = scmp.eq.s32.totalorder %s10, 4
    %p70 = scmp.ne.s32.totalorder %s65, %s67
    %p71 = scmp.eq.s32.totalorder %s10, 0
    %p72 = por %p70, %p71
    %p73 = scmp.ne.s32.totalorder %s65, %s67
    %p74 = scmp.eq.s32.totalorder %s15, 4
    %p75 = por %p73, %p74
    %p76 = scmp.ne.s32.totalorder %s67, %s68
    %p77 = scmp.eq.s32.totalorder %s15, 0
    %p78 = por %p76, %p77
    %p79 = scmp.ne.s32.totalorder %s67, %s68
    %p80 = scmp.eq.s32.totalorder %s16, 4
    %p81 = por %p79, %p80
    %p83 = scmp.ne.s32.totalorder %s68, %s82
    %p84 = scmp.eq.s32.totalorder %s16, 0
    %p85 = por %p83, %p84
    %s87 = sadd.s32 %s86, 1
    %p90 = scmp.eq.s32.totalorder %s10, 4
    %p91 = scmp.ne.s32.totalorder %s86, %s88
    %p92 = scmp.eq.s32.totalorder %s10, 0
    %p93 = por %p91, %p92
    %p94 = scmp.ne.s32.totalorder %s86, %s88
    %p95 = scmp.eq.s32.totalorder %s15, 4
    %p96 = por %p94, %p95
    %p97 = scmp.ne.s32.totalorder %s88, %s89
    %p98 = scmp.eq.s32.totalorder %s15, 0
    %p99 = por %p97, %p98
    %p100 = scmp.ne.s32.totalorder %s88, %s89
    %p101 = scmp.eq.s32.totalorder %s16, 4
    %p102 = por %p100, %p101
    %p104 = scmp.ne.s32.totalorder %s89, %s103
    %p105 = scmp.eq.s32.totalorder %s16, 0
    %p106 = por %p104, %p105
    %s107 = ssub.s32 %s10, %s17
    %p108 = scmp.eq.s32.totalorder %s107, 0
    %s110 = sadd.s32 %s109, 1
    %s111 = scalar_select %p108, %s109, %s110
    %p114 = pneg %p108
    %p115 = scmp.eq.s32.totalorder %s10, 4
    %p116 = por %p114, %p115
    %p117 = scmp.ne.s32.totalorder %s109, %s112
    %p118 = scmp.eq.s32.totalorder %s10, 0
    %p119 = por %p117, %p118
    %p120 = scmp.ne.s32.totalorder %s109, %s112
    %p121 = scmp.eq.s32.totalorder %s15, 4
    %p122 = por %p120, %p121
    %p123 = scmp.ne.s32.totalorder %s112, %s113
    %p124 = scmp.eq.s32.totalorder %s15, 0
    %p125 = por %p123, %p124
    %p126 = scmp.ne.s32.totalorder %s112, %s113
    %p127 = scmp.eq.s32.totalorder %s16, 4
    %p128 = por %p126, %p127
    %p130 = scmp.ne.s32.totalorder %s113, %s129
    %p131 = scmp.eq.s32.totalorder %s16, 0
    %p132 = por %p130, %p131
    %p133 = scmp.le.s32.totalorder 1, %s10
    %p134 = scmp.lt.s32.totalorder %s10, 6
    %p135 = pnand %p133, %p134
    %p136 = pneg %p135
    // Predicated region
    $region9: #{tpu_custom_call.1} parent=5 // pred_check
      _
    $region10: #{tpu_custom_call.1} parent=5 // pred_check_branch
      %138 = sbr.rel (%p135) target = $region12
    $region11: #{tpu_custom_call.1} parent=5 // pred_region
      %s139 = ssub.s32 %s10, 1
      // Predicated region
      $region13: #{tpu_custom_call.1} parent=11 // pred_check
        %p140 = pneg %p57
      $region14: #{tpu_custom_call.1} parent=11 // pred_check_branch
        %142 = sbr.rel (%p140) target = $region16
      $region15: #{tpu_custom_call.1} parent=11 // pred_region
        _
      $region16: #{tpu_custom_call.1} parent=11 // pred_fallthru
        _
      // Predicated region
      $region17: #{tpu_custom_call.1} parent=11 // pred_check
        %p143 = pneg %p78
      $region18: #{tpu_custom_call.1} parent=11 // pred_check_branch
        %145 = sbr.rel (%p143) target = $region20
      $region19: #{tpu_custom_call.1} parent=11 // pred_region
        _
      $region20: #{tpu_custom_call.1} parent=11 // pred_fallthru
        _
      // Predicated region
      $region21: #{tpu_custom_call.1} parent=11 // pred_check
        %p146 = pneg %p99
      $region22: #{tpu_custom_call.1} parent=11 // pred_check_branch
        %148 = sbr.rel (%p146) target = $region24
      $region23: #{tpu_custom_call.1} parent=11 // pred_region
        _
      $region24: #{tpu_custom_call.1} parent=11 // pred_fallthru
        _
    $region12: #{tpu_custom_call.1} parent=5 // pred_fallthru
      _
    %p149 = scmp.lt.s32.totalorder %s10, 5
    // Predicated region
    $region25: #{tpu_custom_call.1} parent=5 // pred_check
      %p150 = pneg %p149
    $region26: #{tpu_custom_call.1} parent=5 // pred_check_branch
      %152 = sbr.rel (%p150) target = $region28
    $region27: #{tpu_custom_call.1} parent=5 // pred_region
      // Predicated region
      $region29: #{tpu_custom_call.1} parent=27 // pred_check
        %p153 = pneg %p30
      $region30: #{tpu_custom_call.1} parent=27 // pred_check_branch
        %155 = sbr.rel (%p153) target = $region32
      $region31: #{tpu_custom_call.1} parent=27 // pred_region
        %p156 = scmp.lt.s32.totalorder %s10, 4
        %s157 = scalar_select %p156, %s10, 4
        %s158 = smul.addr %s157, 57
        %s159 = smul.addr %s158, 4
        %s160 = scalar_lea.vmem %s0, %s159
      $region32: #{tpu_custom_call.1} parent=27 // pred_fallthru
        _
    $region28: #{tpu_custom_call.1} parent=5 // pred_fallthru
      _
    %p161 = scmp.le.s32.totalorder 1, %s10
    %p162 = scmp.lt.s32.totalorder %s10, 6
    %p163 = pnand %p161, %p162
    %p164 = pneg %p163
    // Predicated region
    $region33: #{tpu_custom_call.1} parent=5 // pred_check
      _
    $region34: #{tpu_custom_call.1} parent=5 // pred_check_branch
      %166 = sbr.rel (%p163) target = $region36
    $region35: #{tpu_custom_call.1} parent=5 // pred_region
      %s167 = ssub.s32 %s10, 1
      %p168 = scmp.lt.s32.totalorder %s15, 4
      %s169 = scalar_select %p168, %s15, 4
      %s170 = smul.addr %s169, 57
      %s171 = smul.addr %s170, 4
      %s172 = scalar_lea.vmem %s0, %s171
      %p173 = pneg %p36
      %p174 = pneg %p33
      %p175 = pneg %p57
      %p176 = pneg %p54
      %p177 = pneg %p78
      %p178 = pneg %p75
      %p179 = pneg %p99
      %p180 = pneg %p96
      %p181 = pneg %p125
      %p182 = pneg %p122
      %p183 = scmp.lt.s32.totalorder %s15, 4
      %s184 = scalar_select %p183, %s15, 4
      %s185 = smul.addr %s184, 32
      %s186 = smul.addr %s185, 4
      %s187 = scalar_lea.vmem %s4, %s186
      %p188 = scmp.lt.s32.totalorder %s15, 4
      %s189 = scalar_select %p188, %s15, 4
      %s190 = smul.addr %s189, 57
      %s191 = smul.addr %s190, 4
      %s192 = scalar_lea.vmem %s0, %s191
      %p193 = scmp.lt.s32.totalorder %s15, 4
      %s194 = scalar_select %p193, %s15, 4
      %s195 = smul.addr %s194, 32
      %s196 = smul.addr %s195, 4
      %s197 = scalar_lea.vmem %s4, %s196
      %v199 = vld [vmem:[%s192] sm:$0xf]
      %v200 = vld [vmem:[%s192 + $0x4] sm:$0xf]
      %v201 = vld [vmem:[%s192 + $0x8] sm:$0x3]
      %v202 = vld [vmem:[%s192 + $0xc] sm:$0xf]
      %v203 = vld [vmem:[%s192 + $0x10] sm:$0xf]
      %v204 = vld [vmem:[%s192 + $0x14] sm:$0x3]
      %v205 = vld [vmem:[%s192 + $0x18] sm:$0xf]
      %v206 = vld [vmem:[%s192 + $0x1c] sm:$0xf]
      %v207 = vld [vmem:[%s192 + $0x20] sm:$0x3]
      %v208 = vld [vmem:[%s192 + $0x24] sm:$0xf]
      %v209 = vld [vmem:[%s192 + $0x28] sm:$0xf]
      %v210 = vld [vmem:[%s192 + $0x2c] sm:$0x3]
      %v211 = vld [vmem:[%s192 + $0x30] sm:$0xf]
      %v212 = vld [vmem:[%s192 + $0x34] sm:$0xf]
      %v213 = vld [vmem:[%s192 + $0x38] sm:$0x3]
      %v214 = vld [vmem:[%s192 + $0x3c] sm:$0xf]
      %v215 = vld [vmem:[%s192 + $0x40] sm:$0xf]
      %v216 = vld [vmem:[%s192 + $0x44] sm:$0x3]
      %v217 = vld [vmem:[%s192 + $0x48] sm:$0xf]
      %v218 = vld [vmem:[%s192 + $0x4c] sm:$0xf]
      %v219 = vld [vmem:[%s192 + $0x50] sm:$0x3]
      %v220 = vld [vmem:[%s192 + $0x54] sm:$0xf]
      %v221 = vld [vmem:[%s192 + $0x58] sm:$0xf]
      %v222 = vld [vmem:[%s192 + $0x5c] sm:$0x3]
      %v223 = vld [vmem:[%s192 + $0x60] sm:$0xf]
      %v224 = vld [vmem:[%s192 + $0x64] sm:$0xf]
      %v225 = vld [vmem:[%s192 + $0x68] sm:$0x3]
      %v226 = vld [vmem:[%s192 + $0x6c] sm:$0xf]
      %v227 = vld [vmem:[%s192 + $0x70] sm:$0xf]
      %v228 = vld [vmem:[%s192 + $0x74] sm:$0x3]
      %v229 = vld [vmem:[%s192 + $0x78] sm:$0xf]
      %v230 = vld [vmem:[%s192 + $0x7c] sm:$0xf]
      %v231 = vld [vmem:[%s192 + $0x80] sm:$0x3]
      %v232 = vld [vmem:[%s192 + $0x84] sm:$0xf]
      %v233 = vld [vmem:[%s192 + $0x88] sm:$0xf]
      %v234 = vld [vmem:[%s192 + $0x8c] sm:$0x3]
      %v235 = vld [vmem:[%s192 + $0x90] sm:$0xf]
      %v236 = vld [vmem:[%s192 + $0x94] sm:$0xf]
      %v237 = vld [vmem:[%s192 + $0x98] sm:$0x3]
      %v238 = vld [vmem:[%s192 + $0x9c] sm:$0xf]
      %v239 = vld [vmem:[%s192 + $0xa0] sm:$0xf]
      %v240 = vld [vmem:[%s192 + $0xa4] sm:$0x3]
      %v241 = vld [vmem:[%s192 + $0xa8] sm:$0xf]
      %v242 = vld [vmem:[%s192 + $0xac] sm:$0xf]
      %v243 = vld [vmem:[%s192 + $0xb0] sm:$0x3]
      %v244 = vld [vmem:[%s192 + $0xb4] sm:$0xf]
      %v245 = vld [vmem:[%s192 + $0xb8] sm:$0xf]
      %v246 = vld [vmem:[%s192 + $0xbc] sm:$0x3]
      %v247 = vld [vmem:[%s192 + $0xc0] sm:$0xf]
      %v248 = vld [vmem:[%s192 + $0xc4] sm:$0xf]
      %v249 = vld [vmem:[%s192 + $0xc8] sm:$0x3]
      %v250 = vld [vmem:[%s192 + $0xcc] sm:$0xf]
      %v251 = vld [vmem:[%s192 + $0xd0] sm:$0xf]
      %v252 = vld [vmem:[%s192 + $0xd4] sm:$0x3]
      %v253 = vld [vmem:[%s192 + $0xd8] sm:$0xf]
      %v254 = vld [vmem:[%s192 + $0xdc] sm:$0xf]
      %v255 = vld [vmem:[%s192 + $0xe0] sm:$0x3]
      %v256 = vld [vmem:[%s1] sm:$0xf]
      %v257 = vld [vmem:[%s1 + $0x4] sm:$0x3]
      %vm258 = vsmask.f32 3328
      %vm259 = vsmask.f32 7440
      %vm260 = vmor %vm258, %vm259
      %v262 = vshrl.u32 %v199, 16
      %v264 = vrot.slane %v262, 4
      %v265 = vshll.u32 %v199, 16
      %v267 = vrot.slane %v265, 5
      %v268 = vor.u32 %v264, %v267
      %v269 = vrot.slane %v268, 4
      %v271 = vshll.u32 %v200, 16
      %v273 = vrot.slane %v271, 5
      %v274 = vsel %vm260, %v269, %v273
      %v275 = vshrl.u32 %v200, 16
      %v277 = vrot.slane %v275, 4
      %v278 = vor.u32 %v277, %v273
      %v279 = vrot.slane %v278, 4
      %v281 = vshll.u32 %v201, 16
      %v283 = vrot.slane %v281, 5
      %v284 = vsel %vm260, %v279, %v283
      %v286 = vshrl.u32 %v202, 16
      %v288 = vrot.slane %v286, 4
      %v289 = vshll.u32 %v202, 16
      %v291 = vrot.slane %v289, 5
      %v292 = vor.u32 %v288, %v291
      %v293 = vrot.slane %v292, 4
      %v295 = vshll.u32 %v203, 16
      %v297 = vrot.slane %v295, 5
      %v298 = vsel %vm260, %v293, %v297
      %v299 = vshrl.u32 %v203, 16
      %v301 = vrot.slane %v299, 4
      %v302 = vor.u32 %v301, %v297
      %v303 = vrot.slane %v302, 4
      %v305 = vshll.u32 %v204, 16
      %v307 = vrot.slane %v305, 5
      %v308 = vsel %vm260, %v303, %v307
      %v310 = vshrl.u32 %v205, 16
      %v312 = vrot.slane %v310, 4
      %v313 = vshll.u32 %v205, 16
      %v315 = vrot.slane %v313, 5
      %v316 = vor.u32 %v312, %v315
      %v317 = vrot.slane %v316, 4
      %v319 = vshll.u32 %v206, 16
      %v321 = vrot.slane %v319, 5
      %v322 = vsel %vm260, %v317, %v321
      %v323 = vshrl.u32 %v206, 16
      %v325 = vrot.slane %v323, 4
      %v326 = vor.u32 %v325, %v321
      %v327 = vrot.slane %v326, 4
      %v329 = vshll.u32 %v207, 16
      %v331 = vrot.slane %v329, 5
      %v332 = vsel %vm260, %v327, %v331
      %v334 = vshrl.u32 %v208, 16
      %v336 = vrot.slane %v334, 4
      %v337 = vshll.u32 %v208, 16
      %v339 = vrot.slane %v337, 5
      %v340 = vor.u32 %v336, %v339
      %v341 = vrot.slane %v340, 4
      %v343 = vshll.u32 %v209, 16
      %v345 = vrot.slane %v343, 5
      %v346 = vsel %vm260, %v341, %v345
      %v347 = vshrl.u32 %v209, 16
      %v349 = vrot.slane %v347, 4
      %v350 = vor.u32 %v349, %v345
      %v351 = vrot.slane %v350, 4
      %v353 = vshll.u32 %v210, 16
      %v355 = vrot.slane %v353, 5
      %v356 = vsel %vm260, %v351, %v355
      %v358 = vshrl.u32 %v211, 16
      %v360 = vrot.slane %v358, 4
      %v361 = vshll.u32 %v211, 16
      %v363 = vrot.slane %v361, 5
      %v364 = vor.u32 %v360, %v363
      %v365 = vrot.slane %v364, 4
      %v367 = vshll.u32 %v212, 16
      %v369 = vrot.slane %v367, 5
      %v370 = vsel %vm260, %v365, %v369
      %v371 = vshrl.u32 %v212, 16
      %v373 = vrot.slane %v371, 4
      %v374 = vor.u32 %v373, %v369
      %v375 = vrot.slane %v374, 4
      %v377 = vshll.u32 %v213, 16
      %v379 = vrot.slane %v377, 5
      %v380 = vsel %vm260, %v375, %v379
      %v382 = vshrl.u32 %v214, 16
      %v384 = vrot.slane %v382, 4
      %v385 = vshll.u32 %v214, 16
      %v387 = vrot.slane %v385, 5
      %v388 = vor.u32 %v384, %v387
      %v389 = vrot.slane %v388, 4
      %v391 = vshll.u32 %v215, 16
      %v393 = vrot.slane %v391, 5
      %v394 = vsel %vm260, %v389, %v393
      %v395 = vshrl.u32 %v215, 16
      %v397 = vrot.slane %v395, 4
      %v398 = vor.u32 %v397, %v393
      %v399 = vrot.slane %v398, 4
      %v401 = vshll.u32 %v216, 16
      %v403 = vrot.slane %v401, 5
      %v404 = vsel %vm260, %v399, %v403
      %v406 = vshrl.u32 %v217, 16
      %v408 = vrot.slane %v406, 4
      %v409 = vshll.u32 %v217, 16
      %v411 = vrot.slane %v409, 5
      %v412 = vor.u32 %v408, %v411
      %v413 = vrot.slane %v412, 4
      %v415 = vshll.u32 %v218, 16
      %v417 = vrot.slane %v415, 5
      %v418 = vsel %vm260, %v413, %v417
      %v419 = vshrl.u32 %v218, 16
      %v421 = vrot.slane %v419, 4
      %v422 = vor.u32 %v421, %v417
      %v423 = vrot.slane %v422, 4
      %v425 = vshll.u32 %v219, 16
      %v427 = vrot.slane %v425, 5
      %v428 = vsel %vm260, %v423, %v427
      %v430 = vshrl.u32 %v220, 16
      %v432 = vrot.slane %v430, 4
      %v433 = vshll.u32 %v220, 16
      %v435 = vrot.slane %v433, 5
      %v436 = vor.u32 %v432, %v435
      %v437 = vrot.slane %v436, 4
      %v439 = vshll.u32 %v221, 16
      %v441 = vrot.slane %v439, 5
      %v442 = vsel %vm260, %v437, %v441
      %v443 = vshrl.u32 %v221, 16
      %v445 = vrot.slane %v443, 4
      %v446 = vor.u32 %v445, %v441
      %v447 = vrot.slane %v446, 4
      %v449 = vshll.u32 %v222, 16
      %v451 = vrot.slane %v449, 5
      %v452 = vsel %vm260, %v447, %v451
      %v454 = vshrl.u32 %v223, 16
      %v456 = vrot.slane %v454, 4
      %v457 = vshll.u32 %v223, 16
      %v459 = vrot.slane %v457, 5
      %v460 = vor.u32 %v456, %v459
      %v461 = vrot.slane %v460, 4
      %v463 = vshll.u32 %v224, 16
      %v465 = vrot.slane %v463, 5
      %v466 = vsel %vm260, %v461, %v465
      %v467 = vshrl.u32 %v224, 16
      %v469 = vrot.slane %v467, 4
      %v470 = vor.u32 %v469, %v465
      %v471 = vrot.slane %v470, 4
      %v473 = vshll.u32 %v225, 16
      %v475 = vrot.slane %v473, 5
      %v476 = vsel %vm260, %v471, %v475
      %v478 = vshrl.u32 %v226, 16
      %v480 = vrot.slane %v478, 4
      %v481 = vshll.u32 %v226, 16
      %v483 = vrot.slane %v481, 5
      %v484 = vor.u32 %v480, %v483
      %v485 = vrot.slane %v484, 4
      %v487 = vshll.u32 %v227, 16
      %v489 = vrot.slane %v487, 5
      %v490 = vsel %vm260, %v485, %v489
      %v491 = vshrl.u32 %v227, 16
      %v493 = vrot.slane %v491, 4
      %v494 = vor.u32 %v493, %v489
      %v495 = vrot.slane %v494, 4
      %v497 = vshll.u32 %v228, 16
      %v499 = vrot.slane %v497, 5
      %v500 = vsel %vm260, %v495, %v499
      %v502 = vshrl.u32 %v229, 16
      %v504 = vrot.slane %v502, 4
      %v505 = vshll.u32 %v229, 16
      %v507 = vrot.slane %v505, 5
      %v508 = vor.u32 %v504, %v507
      %v509 = vrot.slane %v508, 4
      %v511 = vshll.u32 %v230, 16
      %v513 = vrot.slane %v511, 5
      %v514 = vsel %vm260, %v509, %v513
      %v515 = vshrl.u32 %v230, 16
      %v517 = vrot.slane %v515, 4
      %v518 = vor.u32 %v517, %v513
      %v519 = vrot.slane %v518, 4
      %v521 = vshll.u32 %v231, 16
      %v523 = vrot.slane %v521, 5
      %v524 = vsel %vm260, %v519, %v523
      %v526 = vshrl.u32 %v232, 16
      %v528 = vrot.slane %v526, 4
      %v529 = vshll.u32 %v232, 16
      %v531 = vrot.slane %v529, 5
      %v532 = vor.u32 %v528, %v531
      %v533 = vrot.slane %v532, 4
      %v535 = vshll.u32 %v233, 16
      %v537 = vrot.slane %v535, 5
      %v538 = vsel %vm260, %v533, %v537
      %v539 = vshrl.u32 %v233, 16
      %v541 = vrot.slane %v539, 4
      %v542 = vor.u32 %v541, %v537
      %v543 = vrot.slane %v542, 4
      %v545 = vshll.u32 %v234, 16
      %v547 = vrot.slane %v545, 5
      %v548 = vsel %vm260, %v543, %v547
      %v550 = vshrl.u32 %v235, 16
      %v552 = vrot.slane %v550, 4
      %v553 = vshll.u32 %v235, 16
      %v555 = vrot.slane %v553, 5
      %v556 = vor.u32 %v552, %v555
      %v557 = vrot.slane %v556, 4
      %v559 = vshll.u32 %v236, 16
      %v561 = vrot.slane %v559, 5
      %v562 = vsel %vm260, %v557, %v561
      %v563 = vshrl.u32 %v236, 16
      %v565 = vrot.slane %v563, 4
      %v566 = vor.u32 %v565, %v561
      %v567 = vrot.slane %v566, 4
      %v569 = vshll.u32 %v237, 16
      %v571 = vrot.slane %v569, 5
      %v572 = vsel %vm260, %v567, %v571
      %v574 = vshrl.u32 %v238, 16
      %v576 = vrot.slane %v574, 4
      %v577 = vshll.u32 %v238, 16
      %v579 = vrot.slane %v577, 5
      %v580 = vor.u32 %v576, %v579
      %v581 = vrot.slane %v580, 4
      %v583 = vshll.u32 %v239, 16
      %v585 = vrot.slane %v583, 5
      %v586 = vsel %vm260, %v581, %v585
      %v587 = vshrl.u32 %v239, 16
      %v589 = vrot.slane %v587, 4
      %v590 = vor.u32 %v589, %v585
      %v591 = vrot.slane %v590, 4
      %v593 = vshll.u32 %v240, 16
      %v595 = vrot.slane %v593, 5
      %v596 = vsel %vm260, %v591, %v595
      %v598 = vshrl.u32 %v241, 16
      %v600 = vrot.slane %v598, 4
      %v601 = vshll.u32 %v241, 16
      %v603 = vrot.slane %v601, 5
      %v604 = vor.u32 %v600, %v603
      %v605 = vrot.slane %v604, 4
      %v607 = vshll.u32 %v242, 16
      %v609 = vrot.slane %v607, 5
      %v610 = vsel %vm260, %v605, %v609
      %v611 = vshrl.u32 %v242, 16
      %v613 = vrot.slane %v611, 4
      %v614 = vor.u32 %v613, %v609
      %v615 = vrot.slane %v614, 4
      %v617 = vshll.u32 %v243, 16
      %v619 = vrot.slane %v617, 5
      %v620 = vsel %vm260, %v615, %v619
      %v622 = vshrl.u32 %v244, 16
      %v624 = vrot.slane %v622, 4
      %v625 = vshll.u32 %v244, 16
      %v627 = vrot.slane %v625, 5
      %v628 = vor.u32 %v624, %v627
      %v629 = vrot.slane %v628, 4
      %v631 = vshll.u32 %v245, 16
      %v633 = vrot.slane %v631, 5
      %v634 = vsel %vm260, %v629, %v633
      %v635 = vshrl.u32 %v245, 16
      %v637 = vrot.slane %v635, 4
      %v638 = vor.u32 %v637, %v633
      %v639 = vrot.slane %v638, 4
      %v641 = vshll.u32 %v246, 16
      %v643 = vrot.slane %v641, 5
      %v644 = vsel %vm260, %v639, %v643
      %s645 = scalar_lea.vmem %s1, 8
      %v646 = vld [vmem:[%s645] sm:$0xf]
      %v647 = vld [vmem:[%s645 + $0x4] sm:$0x3]
      %v648 = vunpack.c.l.b16 %v274
      %v649 = vunpack.c.l.b16 %v284
      %v650 = vunpack.c.l.b16 %v298
      %v651 = vunpack.c.l.b16 %v308
      %v652 = vunpack.c.l.b16 %v322
      %v653 = vunpack.c.l.b16 %v332
      %v654 = vunpack.c.l.b16 %v346
      %v655 = vunpack.c.l.b16 %v356
      %v656 = vunpack.c.l.b16 %v370
      %v657 = vunpack.c.l.b16 %v380
      %v658 = vunpack.c.l.b16 %v394
      %v659 = vunpack.c.l.b16 %v404
      %v660 = vunpack.c.l.b16 %v418
      %v661 = vunpack.c.l.b16 %v428
      %v662 = vunpack.c.l.b16 %v442
      %v663 = vunpack.c.l.b16 %v452
      %v664 = vunpack.c.l.b16 %v466
      %v665 = vunpack.c.l.b16 %v476
      %v666 = vunpack.c.l.b16 %v490
      %v667 = vunpack.c.l.b16 %v500
      %v668 = vunpack.c.l.b16 %v514
      %v669 = vunpack.c.l.b16 %v524
      %v670 = vunpack.c.l.b16 %v538
      %v671 = vunpack.c.l.b16 %v548
      %v672 = vunpack.c.l.b16 %v562
      %v673 = vunpack.c.l.b16 %v572
      %v674 = vunpack.c.l.b16 %v586
      %v675 = vunpack.c.l.b16 %v596
      %v676 = vunpack.c.l.b16 %v610
      %v677 = vunpack.c.l.b16 %v620
      %v678 = vunpack.c.l.b16 %v634
      %v679 = vunpack.c.l.b16 %v644
      %v680 = vpack.c.b16 %v649, %v648
      %v681 = vpack.c.b16 %v651, %v650
      %v682 = vpack.c.b16 %v653, %v652
      %v683 = vpack.c.b16 %v655, %v654
      %v684 = vpack.c.b16 %v657, %v656
      %v685 = vpack.c.b16 %v659, %v658
      %v686 = vpack.c.b16 %v661, %v660
      %v687 = vpack.c.b16 %v663, %v662
      %v688 = vpack.c.b16 %v665, %v664
      %v689 = vpack.c.b16 %v667, %v666
      %v690 = vpack.c.b16 %v669, %v668
      %v691 = vpack.c.b16 %v671, %v670
      %v692 = vpack.c.b16 %v673, %v672
      %v693 = vpack.c.b16 %v675, %v674
      %v694 = vpack.c.b16 %v677, %v676
      %v695 = vpack.c.b16 %v679, %v678
      %v698 = vunpack.c.l.b16 %v646
      %v699 = vunpack.c.l.b16 %v647
      %v700 = vpack.c.b16 %v699, %v698
      %vm701 = vcmask 97280
      %v703 = vsel %vm701, %v680, 0
      %v706 = vsel %vm701, %v681, 0
      %v709 = vsel %vm701, %v682, 0
      %v712 = vsel %vm701, %v683, 0
      %v715 = vsel %vm701, %v684, 0
      %v718 = vsel %vm701, %v685, 0
      %v721 = vsel %vm701, %v686, 0
      %v724 = vsel %vm701, %v687, 0
      %v727 = vsel %vm701, %v688, 0
      %v730 = vsel %vm701, %v689, 0
      %v733 = vsel %vm701, %v690, 0
      %v736 = vsel %vm701, %v691, 0
      %v739 = vsel %vm701, %v692, 0
      %v742 = vsel %vm701, %v693, 0
      %v745 = vsel %vm701, %v694, 0
      %v748 = vsel %vm701, %v695, 0
      %vm750 = vcmask 1045504
      %v752 = vsel %vm750, %v700, 0
      %754 = vmatprep.subr.bf16.mxu0 0
      %755 = vmatpush1.bf16.msra.mxu0 %v752
      %756 = vmatprep.subr.bf16.mxu0 0
      %757 = vmatpush1.bf16.msra.mxu0 0
      %758 = vmatprep.subr.bf16.mxu0 0
      %759 = vmatpush1.bf16.msra.mxu0 0
      %760 = vmatprep.subr.bf16.mxu0 0
      %761 = vmatpush1.bf16.msra.mxu0 0
      %762 = vmatprep.subr.bf16.mxu0 0
      %763 = vmatpush1.bf16.msra.mxu0 0
      %764 = vmatprep.subr.bf16.mxu0 0
      %765 = vmatpush1.bf16.msra.mxu0 0
      %766 = vmatprep.subr.bf16.mxu0 0
      %767 = vmatpush1.bf16.msra.mxu0 0
      %768 = vmatprep.subr.bf16.mxu0 0
      %769 = vmatpush1.bf16.msra.mxu0 0
      %770 = vmatprep.subr.bf16.mxu0 0
      %771 = vmatpush1.bf16.msra.mxu0 0
      %772 = vmatprep.subr.bf16.mxu0 0
      %773 = vmatpush1.bf16.msra.mxu0 0
      %774 = vmatprep.subr.bf16.mxu0 0
      %775 = vmatpush1.bf16.msra.mxu0 0
      %776 = vmatprep.subr.bf16.mxu0 0
      %777 = vmatpush1.bf16.msra.mxu0 0
      %778 = vmatprep.subr.bf16.mxu0 0
      %779 = vmatpush1.bf16.msra.mxu0 0
      %780 = vmatprep.subr.bf16.mxu0 0
      %781 = vmatpush1.bf16.msra.mxu0 0
      %782 = vmatprep.subr.bf16.mxu0 0
      %783 = vmatpush1.bf16.msra.mxu0 0
      %784 = vmatprep.subr.bf16.mxu0 0
      %785 = vmatpush1.bf16.msra.mxu0 0
      %786 = vmatprep.mubr.bf16.mxu0 0
      %787 = vmatmul.mubr.bf16.gmra.mrb[0].mxu0 %v703
      %v788 = vpop.f32.mrb[0].mxu0
      %v789 = vadd.f32 0.0, %v788
      %v790 = vpop.f32.mrb[0].mxu0
      %v791 = vpop.f32.mrb[0].mxu0
      %v792 = vadd.f32 0.0, %v791
      %v793 = vpop.f32.mrb[0].mxu0
      %794 = vmatprep.mubr.bf16.mxu0 0
      %795 = vmatmul.mubr.bf16.gmra.mrb[0].mxu0 %v706
      %v796 = vpop.f32.mrb[0].mxu0
      %v797 = vadd.f32 0.0, %v796
      %v798 = vpop.f32.mrb[0].mxu0
      %v799 = vpop.f32.mrb[0].mxu0
      %v800 = vadd.f32 0.0, %v799
      %v801 = vpop.f32.mrb[0].mxu0
      %802 = vmatprep.mubr.bf16.mxu0 0
      %803 = vmatmul.mubr.bf16.gmra.mrb[0].mxu0 %v709
      %v804 = vpop.f32.mrb[0].mxu0
      %v805 = vadd.f32 0.0, %v804
      %v806 = vpop.f32.mrb[0].mxu0
      %v807 = vpop.f32.mrb[0].mxu0
      %v808 = vadd.f32 0.0, %v807
      %v809 = vpop.f32.mrb[0].mxu0
      %810 = vmatprep.mubr.bf16.mxu0 0
      %811 = vmatmul.mubr.bf16.gmra.mrb[0].mxu0 %v712
      %v812 = vpop.f32.mrb[0].mxu0
      %v813 = vadd.f32 0.0, %v812
      %v814 = vpop.f32.mrb[0].mxu0
      %v815 = vpop.f32.mrb[0].mxu0
      %v816 = vadd.f32 0.0, %v815
      %v817 = vpop.f32.mrb[0].mxu0
      %818 = vmatprep.mubr.bf16.mxu0 0
      %819 = vmatmul.mubr.bf16.gmra.mrb[0].mxu0 %v715
      %v820 = vpop.f32.mrb[0].mxu0
      %v821 = vadd.f32 0.0, %v820
      %v822 = vpop.f32.mrb[0].mxu0
      %v823 = vpop.f32.mrb[0].mxu0
      %v824 = vadd.f32 0.0, %v823
      %v825 = vpop.f32.mrb[0].mxu0
      %826 = vmatprep.mubr.bf16.mxu0 0
      %827 = vmatmul.mubr.bf16.gmra.mrb[0].mxu0 %v718
      %v828 = vpop.f32.mrb[0].mxu0
      %v829 = vadd.f32 0.0, %v828
      %v830 = vpop.f32.mrb[0].mxu0
      %v831 = vpop.f32.mrb[0].mxu0
      %v832 = vadd.f32 0.0, %v831
      %v833 = vpop.f32.mrb[0].mxu0
      %834 = vmatprep.mubr.bf16.mxu0 0
      %835 = vmatmul.mubr.bf16.gmra.mrb[0].mxu0 %v721
      %v836 = vpop.f32.mrb[0].mxu0
      %v837 = vadd.f32 0.0, %v836
      %v838 = vpop.f32.mrb[0].mxu0
      %v839 = vpop.f32.mrb[0].mxu0
      %v840 = vadd.f32 0.0, %v839
      %v841 = vpop.f32.mrb[0].mxu0
      %842 = vmatprep.mubr.bf16.mxu0 0
      %843 = vmatmul.mubr.bf16.gmra.mrb[0].mxu0 %v724
      %v844 = vpop.f32.mrb[0].mxu0
      %v845 = vadd.f32 0.0, %v844
      %v846 = vpop.f32.mrb[0].mxu0
      %v847 = vpop.f32.mrb[0].mxu0
      %v848 = vadd.f32 0.0, %v847
      %v849 = vpop.f32.mrb[0].mxu0
      %850 = vmatprep.mubr.bf16.mxu0 0
      %851 = vmatmul.mubr.bf16.gmra.mrb[0].mxu0 %v727
      %v852 = vpop.f32.mrb[0].mxu0
      %v853 = vadd.f32 0.0, %v852
      %v854 = vpop.f32.mrb[0].mxu0
      %v855 = vpop.f32.mrb[0].mxu0
      %v856 = vadd.f32 0.0, %v855
      %v857 = vpop.f32.mrb[0].mxu0
      %858 = vmatprep.mubr.bf16.mxu0 0
      %859 = vmatmul.mubr.bf16.gmra.mrb[0].mxu0 %v730
      %v860 = vpop.f32.mrb[0].mxu0
      %v861 = vadd.f32 0.0, %v860
      %v862 = vpop.f32.mrb[0].mxu0
      %v863 = vpop.f32.mrb[0].mxu0
      %v864 = vadd.f32 0.0, %v863
      %v865 = vpop.f32.mrb[0].mxu0
      %866 = vmatprep.mubr.bf16.mxu0 0
      %867 = vmatmul.mubr.bf16.gmra.mrb[0].mxu0 %v733
      %v868 = vpop.f32.mrb[0].mxu0
      %v869 = vadd.f32 0.0, %v868
      %v870 = vpop.f32.mrb[0].mxu0
      %v871 = vpop.f32.mrb[0].mxu0
      %v872 = vadd.f32 0.0, %v871
      %v873 = vpop.f32.mrb[0].mxu0
      %874 = vmatprep.mubr.bf16.mxu0 0
      %875 = vmatmul.mubr.bf16.gmra.mrb[0].mxu0 %v736
      %v876 = vpop.f32.mrb[0].mxu0
      %v877 = vadd.f32 0.0, %v876
      %v878 = vpop.f32.mrb[0].mxu0
      %v879 = vpop.f32.mrb[0].mxu0
      %v880 = vadd.f32 0.0, %v879
      %v881 = vpop.f32.mrb[0].mxu0
      %882 = vmatprep.mubr.bf16.mxu0 0
      %883 = vmatmul.mubr.bf16.gmra.mrb[0].mxu0 %v739
      %v884 = vpop.f32.mrb[0].mxu0
      %v885 = vadd.f32 0.0, %v884
      %v886 = vpop.f32.mrb[0].mxu0
      %v887 = vpop.f32.mrb[0].mxu0
      %v888 = vadd.f32 0.0, %v887
      %v889 = vpop.f32.mrb[0].mxu0
      %890 = vmatprep.mubr.bf16.mxu0 0
      %891 = vmatmul.mubr.bf16.gmra.mrb[0].mxu0 %v742
      %v892 = vpop.f32.mrb[0].mxu0
      %v893 = vadd.f32 0.0, %v892
      %v894 = vpop.f32.mrb[0].mxu0
      %v895 = vpop.f32.mrb[0].mxu0
      %v896 = vadd.f32 0.0, %v895
      %v897 = vpop.f32.mrb[0].mxu0
      %898 = vmatprep.mubr.bf16.mxu0 0
      %899 = vmatmul.mubr.bf16.gmra.mrb[0].mxu0 %v745
      %v900 = vpop.f32.mrb[0].mxu0
      %v901 = vadd.f32 0.0, %v900
      %v902 = vpop.f32.mrb[0].mxu0
      %v903 = vpop.f32.mrb[0].mxu0
      %v904 = vadd.f32 0.0, %v903
      %v905 = vpop.f32.mrb[0].mxu0
      %906 = vmatprep.mubr.bf16.mxu0 0
      %907 = vmatmul.mubr.bf16.gmra.mrb[0].mxu0 %v748
      %v908 = vpop.f32.mrb[0].mxu0
      %v909 = vadd.f32 0.0, %v908
      %v910 = vpop.f32.mrb[0].mxu0
      %v911 = vpop.f32.mrb[0].mxu0
      %v912 = vadd.f32 0.0, %v911
      %v913 = vpop.f32.mrb[0].mxu0
      %914 = vdwg.mxu0
      %v947 = vunpack.c.l.b16 %v199
      %v948 = vunpack.c.l.b16 %v200
      %v949 = vunpack.c.l.b16 %v202
      %v950 = vunpack.c.l.b16 %v203
      %v951 = vunpack.c.l.b16 %v205
      %v952 = vunpack.c.l.b16 %v206
      %v953 = vunpack.c.l.b16 %v208
      %v954 = vunpack.c.l.b16 %v209
      %v955 = vunpack.c.l.b16 %v211
      %v956 = vunpack.c.l.b16 %v212
      %v957 = vunpack.c.l.b16 %v214
      %v958 = vunpack.c.l.b16 %v215
      %v959 = vunpack.c.l.b16 %v217
      %v960 = vunpack.c.l.b16 %v218
      %v961 = vunpack.c.l.b16 %v220
      %v962 = vunpack.c.l.b16 %v221
      %v963 = vunpack.c.l.b16 %v223
      %v964 = vunpack.c.l.b16 %v224
      %v965 = vunpack.c.l.b16 %v226
      %v966 = vunpack.c.l.b16 %v227
      %v967 = vunpack.c.l.b16 %v229
      %v968 = vunpack.c.l.b16 %v230
      %v969 = vunpack.c.l.b16 %v232
      %v970 = vunpack.c.l.b16 %v233
      %v971 = vunpack.c.l.b16 %v235
      %v972 = vunpack.c.l.b16 %v236
      %v973 = vunpack.c.l.b16 %v238
      %v974 = vunpack.c.l.b16 %v239
      %v975 = vunpack.c.l.b16 %v241
      %v976 = vunpack.c.l.b16 %v242
      %v977 = vunpack.c.l.b16 %v244
      %v978 = vunpack.c.l.b16 %v245
      %v979 = vpack.c.b16 %v948, %v947
      %v980 = vpack.c.b16 %v950, %v949
      %v981 = vpack.c.b16 %v952, %v951
      %v982 = vpack.c.b16 %v954, %v953
      %v983 = vpack.c.b16 %v956, %v955
      %v984 = vpack.c.b16 %v958, %v957
      %v985 = vpack.c.b16 %v960, %v959
      %v986 = vpack.c.b16 %v962, %v961
      %v987 = vpack.c.b16 %v964, %v963
      %v988 = vpack.c.b16 %v966, %v965
      %v989 = vpack.c.b16 %v968, %v967
      %v990 = vpack.c.b16 %v970, %v969
      %v991 = vpack.c.b16 %v972, %v971
      %v992 = vpack.c.b16 %v974, %v973
      %v993 = vpack.c.b16 %v976, %v975
      %v994 = vpack.c.b16 %v978, %v977
      %v997 = vunpack.c.l.b16 %v256
      %v998 = vunpack.c.l.b16 %v257
      %v999 = vpack.c.b16 %v998, %v997
      %v1001 = vsel %vm701, %v979, 0
      %v1004 = vsel %vm701, %v980, 0
      %v1007 = vsel %vm701, %v981, 0
      %v1010 = vsel %vm701, %v982, 0
      %v1013 = vsel %vm701, %v983, 0
      %v1016 = vsel %vm701, %v984, 0
      %v1019 = vsel %vm701, %v985, 0
      %v1022 = vsel %vm701, %v986, 0
      %v1025 = vsel %vm701, %v987, 0
      %v1028 = vsel %vm701, %v988, 0
      %v1031 = vsel %vm701, %v989, 0
      %v1034 = vsel %vm701, %v990, 0
      %v1037 = vsel %vm701, %v991, 0
      %v1040 = vsel %vm701, %v992, 0
      %v1043 = vsel %vm701, %v993, 0
      %v1046 = vsel %vm701, %v994, 0
      %v1049 = vsel %vm750, %v999, 0
      %1051 = vmatprep.subr.bf16.mxu0 0
      %1052 = vmatpush1.bf16.msra.mxu0 %v1049
      %1053 = vmatprep.subr.bf16.mxu0 0
      %1054 = vmatpush1.bf16.msra.mxu0 0
      %1055 = vmatprep.subr.bf16.mxu0 0
      %1056 = vmatpush1.bf16.msra.mxu0 0
      %1057 = vmatprep.subr.bf16.mxu0 0
      %1058 = vmatpush1.bf16.msra.mxu0 0
      %1059 = vmatprep.subr.bf16.mxu0 0
      %1060 = vmatpush1.bf16.msra.mxu0 0
      %1061 = vmatprep.subr.bf16.mxu0 0
      %1062 = vmatpush1.bf16.msra.mxu0 0
      %1063 = vmatprep.subr.bf16.mxu0 0
      %1064 = vmatpush1.bf16.msra.mxu0 0
      %1065 = vmatprep.subr.bf16.mxu0 0
      %1066 = vmatpush1.bf16.msra.mxu0 0
      %1067 = vmatprep.subr.bf16.mxu0 0
      %1068 = vmatpush1.bf16.msra.mxu0 0
      %1069 = vmatprep.subr.bf16.mxu0 0
      %1070 = vmatpush1.bf16.msra.mxu0 0
      %1071 = vmatprep.subr.bf16.mxu0 0
      %1072 = vmatpush1.bf16.msra.mxu0 0
      %1073 = vmatprep.subr.bf16.mxu0 0
      %1074 = vmatpush1.bf16.msra.mxu0 0
      %1075 = vmatprep.subr.bf16.mxu0 0
      %1076 = vmatpush1.bf16.msra.mxu0 0
      %1077 = vmatprep.subr.bf16.mxu0 0
      %1078 = vmatpush1.bf16.msra.mxu0 0
      %1079 = vmatprep.subr.bf16.mxu0 0
      %1080 = vmatpush1.bf16.msra.mxu0 0
      %1081 = vmatprep.subr.bf16.mxu0 0
      %1082 = vmatpush1.bf16.msra.mxu0 0
      %1083 = vmatprep.mubr.bf16.mxu0 0
      %1084 = vmatmul.mubr.bf16.gmra.mrb[0].mxu0 %v1001
      %v1085 = vpop.f32.mrb[0].mxu0
      %v1086 = vadd.f32 %v789, %v1085
      %v1087 = vpop.f32.mrb[0].mxu0
      %v1088 = vpop.f32.mrb[0].mxu0
      %v1089 = vadd.f32 %v792, %v1088
      %v1090 = vpop.f32.mrb[0].mxu0
      %1091 = vmatprep.mubr.bf16.mxu0 0
      %1092 = vmatmul.mubr.bf16.gmra.mrb[0].mxu0 %v1004
      %v1093 = vpop.f32.mrb[0].mxu0
      %v1094 = vadd.f32 %v797, %v1093
      %v1095 = vpop.f32.mrb[0].mxu0
      %v1096 = vpop.f32.mrb[0].mxu0
      %v1097 = vadd.f32 %v800, %v1096
      %v1098 = vpop.f32.mrb[0].mxu0
      %1099 = vmatprep.mubr.bf16.mxu0 0
      %1100 = vmatmul.mubr.bf16.gmra.mrb[0].mxu0 %v1007
      %v1101 = vpop.f32.mrb[0].mxu0
      %v1102 = vadd.f32 %v805, %v1101
      %v1103 = vpop.f32.mrb[0].mxu0
      %v1104 = vpop.f32.mrb[0].mxu0
      %v1105 = vadd.f32 %v808, %v1104
      %v1106 = vpop.f32.mrb[0].mxu0
      %1107 = vmatprep.mubr.bf16.mxu0 0
      %1108 = vmatmul.mubr.bf16.gmra.mrb[0].mxu0 %v1010
      %v1109 = vpop.f32.mrb[0].mxu0
      %v1110 = vadd.f32 %v813, %v1109
      %v1111 = vpop.f32.mrb[0].mxu0
      %v1112 = vpop.f32.mrb[0].mxu0
      %v1113 = vadd.f32 %v816, %v1112
      %v1114 = vpop.f32.mrb[0].mxu0
      %1115 = vmatprep.mubr.bf16.mxu0 0
      %1116 = vmatmul.mubr.bf16.gmra.mrb[0].mxu0 %v1013
      %v1117 = vpop.f32.mrb[0].mxu0
      %v1118 = vadd.f32 %v821, %v1117
      %v1119 = vpop.f32.mrb[0].mxu0
      %v1120 = vpop.f32.mrb[0].mxu0
      %v1121 = vadd.f32 %v824, %v1120
      %v1122 = vpop.f32.mrb[0].mxu0
      %1123 = vmatprep.mubr.bf16.mxu0 0
      %1124 = vmatmul.mubr.bf16.gmra.mrb[0].mxu0 %v1016
      %v1125 = vpop.f32.mrb[0].mxu0
      %v1126 = vadd.f32 %v829, %v1125
      %v1127 = vpop.f32.mrb[0].mxu0
      %v1128 = vpop.f32.mrb[0].mxu0
      %v1129 = vadd.f32 %v832, %v1128
      %v1130 = vpop.f32.mrb[0].mxu0
      %1131 = vmatprep.mubr.bf16.mxu0 0
      %1132 = vmatmul.mubr.bf16.gmra.mrb[0].mxu0 %v1019
      %v1133 = vpop.f32.mrb[0].mxu0
      %v1134 = vadd.f32 %v837, %v1133
      %v1135 = vpop.f32.mrb[0].mxu0
      %v1136 = vpop.f32.mrb[0].mxu0
      %v1137 = vadd.f32 %v840, %v1136
      %v1138 = vpop.f32.mrb[0].mxu0
      %1139 = vmatprep.mubr.bf16.mxu0 0
      %1140 = vmatmul.mubr.bf16.gmra.mrb[0].mxu0 %v1022
      %v1141 = vpop.f32.mrb[0].mxu0
      %v1142 = vadd.f32 %v845, %v1141
      %v1143 = vpop.f32.mrb[0].mxu0
      %v1144 = vpop.f32.mrb[0].mxu0
      %v1145 = vadd.f32 %v848, %v1144
      %v1146 = vpop.f32.mrb[0].mxu0
      %1147 = vmatprep.mubr.bf16.mxu0 0
      %1148 = vmatmul.mubr.bf16.gmra.mrb[0].mxu0 %v1025
      %v1149 = vpop.f32.mrb[0].mxu0
      %v1150 = vadd.f32 %v853, %v1149
      %v1151 = vpop.f32.mrb[0].mxu0
      %v1152 = vpop.f32.mrb[0].mxu0
      %v1153 = vadd.f32 %v856, %v1152
      %v1154 = vpop.f32.mrb[0].mxu0
      %1155 = vmatprep.mubr.bf16.mxu0 0
      %1156 = vmatmul.mubr.bf16.gmra.mrb[0].mxu0 %v1028
      %v1157 = vpop.f32.mrb[0].mxu0
      %v1158 = vadd.f32 %v861, %v1157
      %v1159 = vpop.f32.mrb[0].mxu0
      %v1160 = vpop.f32.mrb[0].mxu0
      %v1161 = vadd.f32 %v864, %v1160
      %v1162 = vpop.f32.mrb[0].mxu0
      %1163 = vmatprep.mubr.bf16.mxu0 0
      %1164 = vmatmul.mubr.bf16.gmra.mrb[0].mxu0 %v1031
      %v1165 = vpop.f32.mrb[0].mxu0
      %v1166 = vadd.f32 %v869, %v1165
      %v1167 = vpop.f32.mrb[0].mxu0
      %v1168 = vpop.f32.mrb[0].mxu0
      %v1169 = vadd.f32 %v872, %v1168
      %v1170 = vpop.f32.mrb[0].mxu0
      %1171 = vmatprep.mubr.bf16.mxu0 0
      %1172 = vmatmul.mubr.bf16.gmra.mrb[0].mxu0 %v1034
      %v1173 = vpop.f32.mrb[0].mxu0
      %v1174 = vadd.f32 %v877, %v1173
      %v1175 = vpop.f32.mrb[0].mxu0
      %v1176 = vpop.f32.mrb[0].mxu0
      %v1177 = vadd.f32 %v880, %v1176
      %v1178 = vpop.f32.mrb[0].mxu0
      %1179 = vmatprep.mubr.bf16.mxu0 0
      %1180 = vmatmul.mubr.bf16.gmra.mrb[0].mxu0 %v1037
      %v1181 = vpop.f32.mrb[0].mxu0
      %v1182 = vadd.f32 %v885, %v1181
      %v1183 = vpop.f32.mrb[0].mxu0
      %v1184 = vpop.f32.mrb[0].mxu0
      %v1185 = vadd.f32 %v888, %v1184
      %v1186 = vpop.f32.mrb[0].mxu0
      %1187 = vmatprep.mubr.bf16.mxu0 0
      %1188 = vmatmul.mubr.bf16.gmra.mrb[0].mxu0 %v1040
      %v1189 = vpop.f32.mrb[0].mxu0
      %v1190 = vadd.f32 %v893, %v1189
      %v1191 = vpop.f32.mrb[0].mxu0
      %v1192 = vpop.f32.mrb[0].mxu0
      %v1193 = vadd.f32 %v896, %v1192
      %v1194 = vpop.f32.mrb[0].mxu0
      %1195 = vmatprep.mubr.bf16.mxu0 0
      %1196 = vmatmul.mubr.bf16.gmra.mrb[0].mxu0 %v1043
      %v1197 = vpop.f32.mrb[0].mxu0
      %v1198 = vadd.f32 %v901, %v1197
      %v1199 = vpop.f32.mrb[0].mxu0
      %v1200 = vpop.f32.mrb[0].mxu0
      %v1201 = vadd.f32 %v904, %v1200
      %v1202 = vpop.f32.mrb[0].mxu0
      %1203 = vmatprep.mubr.bf16.mxu0 0
      %1204 = vmatmul.mubr.bf16.gmra.mrb[0].mxu0 %v1046
      %v1205 = vpop.f32.mrb[0].mxu0
      %v1206 = vadd.f32 %v909, %v1205
      %v1207 = vpop.f32.mrb[0].mxu0
      %v1208 = vpop.f32.mrb[0].mxu0
      %v1209 = vadd.f32 %v912, %v1208
      %v1210 = vpop.f32.mrb[0].mxu0
      %1211 = vdwg.mxu0
      %vm1228 = vcmask 1042432
      %vm1229 = vcmask 1046532
      %vm1230 = vmor %vm1228, %vm1229
      %v1231 = vrot.slane %v199, 5
      %v1232 = vrot.slane %v1231, 4
      %v1233 = vrot.slane %v200, 5
      %v1234 = vsel %vm1230, %v1232, %v1233
      %v1235 = vrot.slane %v1233, 4
      %v1236 = vrot.slane %v201, 5
      %v1237 = vsel %vm1230, %v1235, %v1236
      %v1238 = vrot.slane %v202, 5
      %v1239 = vrot.slane %v1238, 4
      %v1240 = vrot.slane %v203, 5
      %v1241 = vsel %vm1230, %v1239, %v1240
      %v1242 = vrot.slane %v1240, 4
      %v1243 = vrot.slane %v204, 5
      %v1244 = vsel %vm1230, %v1242, %v1243
      %v1245 = vrot.slane %v205, 5
      %v1246 = vrot.slane %v1245, 4
      %v1247 = vrot.slane %v206, 5
      %v1248 = vsel %vm1230, %v1246, %v1247
      %v1249 = vrot.slane %v1247, 4
      %v1250 = vrot.slane %v207, 5
      %v1251 = vsel %vm1230, %v1249, %v1250
      %v1252 = vrot.slane %v208, 5
      %v1253 = vrot.slane %v1252, 4
      %v1254 = vrot.slane %v209, 5
      %v1255 = vsel %vm1230, %v1253, %v1254
      %v1256 = vrot.slane %v1254, 4
      %v1257 = vrot.slane %v210, 5
      %v1258 = vsel %vm1230, %v1256, %v1257
      %v1259 = vrot.slane %v211, 5
      %v1260 = vrot.slane %v1259, 4
      %v1261 = vrot.slane %v212, 5
      %v1262 = vsel %vm1230, %v1260, %v1261
      %v1263 = vrot.slane %v1261, 4
      %v1264 = vrot.slane %v213, 5
      %v1265 = vsel %vm1230, %v1263, %v1264
      %v1266 = vrot.slane %v214, 5
      %v1267 = vrot.slane %v1266, 4
      %v1268 = vrot.slane %v215, 5
      %v1269 = vsel %vm1230, %v1267, %v1268
      %v1270 = vrot.slane %v1268, 4
      %v1271 = vrot.slane %v216, 5
      %v1272 = vsel %vm1230, %v1270, %v1271
      %v1273 = vrot.slane %v217, 5
      %v1274 = vrot.slane %v1273, 4
      %v1275 = vrot.slane %v218, 5
      %v1276 = vsel %vm1230, %v1274, %v1275
      %v1277 = vrot.slane %v1275, 4
      %v1278 = vrot.slane %v219, 5
      %v1279 = vsel %vm1230, %v1277, %v1278
      %v1280 = vrot.slane %v220, 5
      %v1281 = vrot.slane %v1280, 4
      %v1282 = vrot.slane %v221, 5
      %v1283 = vsel %vm1230, %v1281, %v1282
      %v1284 = vrot.slane %v1282, 4
      %v1285 = vrot.slane %v222, 5
      %v1286 = vsel %vm1230, %v1284, %v1285
      %v1287 = vrot.slane %v223, 5
      %v1288 = vrot.slane %v1287, 4
      %v1289 = vrot.slane %v224, 5
      %v1290 = vsel %vm1230, %v1288, %v1289
      %v1291 = vrot.slane %v1289, 4
      %v1292 = vrot.slane %v225, 5
      %v1293 = vsel %vm1230, %v1291, %v1292
      %v1294 = vrot.slane %v226, 5
      %v1295 = vrot.slane %v1294, 4
      %v1296 = vrot.slane %v227, 5
      %v1297 = vsel %vm1230, %v1295, %v1296
      %v1298 = vrot.slane %v1296, 4
      %v1299 = vrot.slane %v228, 5
      %v1300 = vsel %vm1230, %v1298, %v1299
      %v1301 = vrot.slane %v229, 5
      %v1302 = vrot.slane %v1301, 4
      %v1303 = vrot.slane %v230, 5
      %v1304 = vsel %vm1230, %v1302, %v1303
      %v1305 = vrot.slane %v1303, 4
      %v1306 = vrot.slane %v231, 5
      %v1307 = vsel %vm1230, %v1305, %v1306
      %v1308 = vrot.slane %v232, 5
      %v1309 = vrot.slane %v1308, 4
      %v1310 = vrot.slane %v233, 5
      %v1311 = vsel %vm1230, %v1309, %v1310
      %v1312 = vrot.slane %v1310, 4
      %v1313 = vrot.slane %v234, 5
      %v1314 = vsel %vm1230, %v1312, %v1313
      %v1315 = vrot.slane %v235, 5
      %v1316 = vrot.slane %v1315, 4
      %v1317 = vrot.slane %v236, 5
      %v1318 = vsel %vm1230, %v1316, %v1317
      %v1319 = vrot.slane %v1317, 4
      %v1320 = vrot.slane %v237, 5
      %v1321 = vsel %vm1230, %v1319, %v1320
      %v1322 = vrot.slane %v238, 5
      %v1323 = vrot.slane %v1322, 4
      %v1324 = vrot.slane %v239, 5
      %v1325 = vsel %vm1230, %v1323, %v1324
      %v1326 = vrot.slane %v1324, 4
      %v1327 = vrot.slane %v240, 5
      %v1328 = vsel %vm1230, %v1326, %v1327
      %v1329 = vrot.slane %v241, 5
      %v1330 = vrot.slane %v1329, 4
      %v1331 = vrot.slane %v242, 5
      %v1332 = vsel %vm1230, %v1330, %v1331
      %v1333 = vrot.slane %v1331, 4
      %v1334 = vrot.slane %v243, 5
      %v1335 = vsel %vm1230, %v1333, %v1334
      %v1336 = vrot.slane %v244, 5
      %v1337 = vrot.slane %v1336, 4
      %v1338 = vrot.slane %v245, 5
      %v1339 = vsel %vm1230, %v1337, %v1338
      %v1340 = vrot.slane %v1338, 4
      %v1341 = vrot.slane %v246, 5
      %v1342 = vsel %vm1230, %v1340, %v1341
      %s1343 = scalar_lea.vmem %s1, 16
      %v1344 = vld [vmem:[%s1343] sm:$0xf]
      %v1345 = vld [vmem:[%s1343 + $0x4] sm:$0x3]
      %v1346 = vunpack.c.l.b16 %v1234
      %v1347 = vunpack.c.l.b16 %v1237
      %v1348 = vunpack.c.l.b16 %v1241
      %v1349 = vunpack.c.l.b16 %v1244
      %v1350 = vunpack.c.l.b16 %v1248
      %v1351 = vunpack.c.l.b16 %v1251
      %v1352 = vunpack.c.l.b16 %v1255
      %v1353 = vunpack.c.l.b16 %v1258
      %v1354 = vunpack.c.l.b16 %v1262
      %v1355 = vunpack.c.l.b16 %v1265
      %v1356 = vunpack.c.l.b16 %v1269
      %v1357 = vunpack.c.l.b16 %v1272
      %v1358 = vunpack.c.l.b16 %v1276
      %v1359 = vunpack.c.l.b16 %v1279
      %v1360 = vunpack.c.l.b16 %v1283
      %v1361 = vunpack.c.l.b16 %v1286
      %v1362 = vunpack.c.l.b16 %v1290
      %v1363 = vunpack.c.l.b16 %v1293
      %v1364 = vunpack.c.l.b16 %v1297
      %v1365 = vunpack.c.l.b16 %v1300
      %v1366 = vunpack.c.l.b16 %v1304
      %v1367 = vunpack.c.l.b16 %v1307
      %v1368 = vunpack.c.l.b16 %v1311
      %v1369 = vunpack.c.l.b16 %v1314
      %v1370 = vunpack.c.l.b16 %v1318
      %v1371 = vunpack.c.l.b16 %v1321
      %v1372 = vunpack.c.l.b16 %v1325
      %v1373 = vunpack.c.l.b16 %v1328
      %v1374 = vunpack.c.l.b16 %v1332
      %v1375 = vunpack.c.l.b16 %v1335
      %v1376 = vunpack.c.l.b16 %v1339
      %v1377 = vunpack.c.l.b16 %v1342
      %v1378 = vpack.c.b16 %v1347, %v1346
      %v1379 = vpack.c.b16 %v1349, %v1348
      %v1380 = vpack.c.b16 %v1351, %v1350
      %v1381 = vpack.c.b16 %v1353, %v1352
      %v1382 = vpack.c.b16 %v1355, %v1354
      %v1383 = vpack.c.b16 %v1357, %v1356
      %v1384 = vpack.c.b16 %v1359, %v1358
      %v1385 = vpack.c.b16 %v1361, %v1360
      %v1386 = vpack.c.b16 %v1363, %v1362
      %v1387 = vpack.c.b16 %v1365, %v1364
      %v1388 = vpack.c.b16 %v1367, %v1366
      %v1389 = vpack.c.b16 %v1369, %v1368
      %v1390 = vpack.c.b16 %v1371, %v1370
      %v1391 = vpack.c.b16 %v1373, %v1372
      %v1392 = vpack.c.b16 %v1375, %v1374
      %v1393 = vpack.c.b16 %v1377, %v1376
      %v1396 = vunpack.c.l.b16 %v1344
      %v1397 = vunpack.c.l.b16 %v1345
      %v1398 = vpack.c.b16 %v1397, %v1396
      %v1400 = vsel %vm701, %v1378, 0
      %v1403 = vsel %vm701, %v1379, 0
      %v1406 = vsel %vm701, %v1380, 0
      %v1409 = vsel %vm701, %v1381, 0
      %v1412 = vsel %vm701, %v1382, 0
      %v1415 = vsel %vm701, %v1383, 0
      %v1418 = vsel %vm701, %v1384, 0
      %v1421 = vsel %vm701, %v1385, 0
      %v1424 = vsel %vm701, %v1386, 0
      %v1427 = vsel %vm701, %v1387, 0
      %v1430 = vsel %vm701, %v1388, 0
      %v1433 = vsel %vm701, %v1389, 0
      %v1436 = vsel %vm701, %v1390, 0
      %v1439 = vsel %vm701, %v1391, 0
      %v1442 = vsel %vm701, %v1392, 0
      %v1445 = vsel %vm701, %v1393, 0
      %v1448 = vsel %vm750, %v1398, 0
      %1450 = vmatprep.subr.bf16.mxu0 0
      %1451 = vmatpush1.bf16.msra.mxu0 %v1448
      %1452 = vmatprep.subr.bf16.mxu0 0
      %1453 = vmatpush1.bf16.msra.mxu0 0
      %1454 = vmatprep.subr.bf16.mxu0 0
      %1455 = vmatpush1.bf16.msra.mxu0 0
      %1456 = vmatprep.subr.bf16.mxu0 0
      %1457 = vmatpush1.bf16.msra.mxu0 0
      %1458 = vmatprep.subr.bf16.mxu0 0
      %1459 = vmatpush1.bf16.msra.mxu0 0
      %1460 = vmatprep.subr.bf16.mxu0 0
      %1461 = vmatpush1.bf16.msra.mxu0 0
      %1462 = vmatprep.subr.bf16.mxu0 0
      %1463 = vmatpush1.bf16.msra.mxu0 0
      %1464 = vmatprep.subr.bf16.mxu0 0
      %1465 = vmatpush1.bf16.msra.mxu0 0
      %1466 = vmatprep.subr.bf16.mxu0 0
      %1467 = vmatpush1.bf16.msra.mxu0 0
      %1468 = vmatprep.subr.bf16.mxu0 0
      %1469 = vmatpush1.bf16.msra.mxu0 0
      %1470 = vmatprep.subr.bf16.mxu0 0
      %1471 = vmatpush1.bf16.msra.mxu0 0
      %1472 = vmatprep.subr.bf16.mxu0 0
      %1473 = vmatpush1.bf16.msra.mxu0 0
      %1474 = vmatprep.subr.bf16.mxu0 0
      %1475 = vmatpush1.bf16.msra.mxu0 0
      %1476 = vmatprep.subr.bf16.mxu0 0
      %1477 = vmatpush1.bf16.msra.mxu0 0
      %1478 = vmatprep.subr.bf16.mxu0 0
      %1479 = vmatpush1.bf16.msra.mxu0 0
      %1480 = vmatprep.subr.bf16.mxu0 0
      %1481 = vmatpush1.bf16.msra.mxu0 0
      %1482 = vmatprep.mubr.bf16.mxu0 0
      %1483 = vmatmul.mubr.bf16.gmra.mrb[0].mxu0 %v1400
      %v1484 = vpop.f32.mrb[0].mxu0
      %v1485 = vadd.f32 0.0, %v1484
      %v1486 = vpop.f32.mrb[0].mxu0
      %v1487 = vpop.f32.mrb[0].mxu0
      %v1488 = vadd.f32 0.0, %v1487
      %v1489 = vpop.f32.mrb[0].mxu0
      %1490 = vmatprep.mubr.bf16.mxu0 0
      %1491 = vmatmul.mubr.bf16.gmra.mrb[0].mxu0 %v1403
      %v1492 = vpop.f32.mrb[0].mxu0
      %v1493 = vadd.f32 0.0, %v1492
      %v1494 = vpop.f32.mrb[0].mxu0
      %v1495 = vpop.f32.mrb[0].mxu0
      %v1496 = vadd.f32 0.0, %v1495
      %v1497 = vpop.f32.mrb[0].mxu0
      %1498 = vmatprep.mubr.bf16.mxu0 0
      %1499 = vmatmul.mubr.bf16.gmra.mrb[0].mxu0 %v1406
      %v1500 = vpop.f32.mrb[0].mxu0
      %v1501 = vadd.f32 0.0, %v1500
      %v1502 = vpop.f32.mrb[0].mxu0
      %v1503 = vpop.f32.mrb[0].mxu0
      %v1504 = vadd.f32 0.0, %v1503
      %v1505 = vpop.f32.mrb[0].mxu0
      %1506 = vmatprep.mubr.bf16.mxu0 0
      %1507 = vmatmul.mubr.bf16.gmra.mrb[0].mxu0 %v1409
      %v1508 = vpop.f32.mrb[0].mxu0
      %v1509 = vadd.f32 0.0, %v1508
      %v1510 = vpop.f32.mrb[0].mxu0
      %v1511 = vpop.f32.mrb[0].mxu0
      %v1512 = vadd.f32 0.0, %v1511
      %v1513 = vpop.f32.mrb[0].mxu0
      %1514 = vmatprep.mubr.bf16.mxu0 0
      %1515 = vmatmul.mubr.bf16.gmra.mrb[0].mxu0 %v1412
      %v1516 = vpop.f32.mrb[0].mxu0
      %v1517 = vadd.f32 0.0, %v1516
      %v1518 = vpop.f32.mrb[0].mxu0
      %v1519 = vpop.f32.mrb[0].mxu0
      %v1520 = vadd.f32 0.0, %v1519
      %v1521 = vpop.f32.mrb[0].mxu0
      %1522 = vmatprep.mubr.bf16.mxu0 0
      %1523 = vmatmul.mubr.bf16.gmra.mrb[0].mxu0 %v1415
      %v1524 = vpop.f32.mrb[0].mxu0
      %v1525 = vadd.f32 0.0, %v1524
      %v1526 = vpop.f32.mrb[0].mxu0
      %v1527 = vpop.f32.mrb[0].mxu0
      %v1528 = vadd.f32 0.0, %v1527
      %v1529 = vpop.f32.mrb[0].mxu0
      %1530 = vmatprep.mubr.bf16.mxu0 0
      %1531 = vmatmul.mubr.bf16.gmra.mrb[0].mxu0 %v1418
      %v1532 = vpop.f32.mrb[0].mxu0
      %v1533 = vadd.f32 0.0, %v1532
      %v1534 = vpop.f32.mrb[0].mxu0
      %v1535 = vpop.f32.mrb[0].mxu0
      %v1536 = vadd.f32 0.0, %v1535
      %v1537 = vpop.f32.mrb[0].mxu0
      %1538 = vmatprep.mubr.bf16.mxu0 0
      %1539 = vmatmul.mubr.bf16.gmra.mrb[0].mxu0 %v1421
      %v1540 = vpop.f32.mrb[0].mxu0
      %v1541 = vadd.f32 0.0, %v1540
      %v1542 = vpop.f32.mrb[0].mxu0
      %v1543 = vpop.f32.mrb[0].mxu0
      %v1544 = vadd.f32 0.0, %v1543
      %v1545 = vpop.f32.mrb[0].mxu0
      %1546 = vmatprep.mubr.bf16.mxu0 0
      %1547 = vmatmul.mubr.bf16.gmra.mrb[0].mxu0 %v1424
      %v1548 = vpop.f32.mrb[0].mxu0
      %v1549 = vadd.f32 0.0, %v1548
      %v1550 = vpop.f32.mrb[0].mxu0
      %v1551 = vpop.f32.mrb[0].mxu0
      %v1552 = vadd.f32 0.0, %v1551
      %v1553 = vpop.f32.mrb[0].mxu0
      %1554 = vmatprep.mubr.bf16.mxu0 0
      %1555 = vmatmul.mubr.bf16.gmra.mrb[0].mxu0 %v1427
      %v1556 = vpop.f32.mrb[0].mxu0
      %v1557 = vadd.f32 0.0, %v1556
      %v1558 = vpop.f32.mrb[0].mxu0
      %v1559 = vpop.f32.mrb[0].mxu0
      %v1560 = vadd.f32 0.0, %v1559
      %v1561 = vpop.f32.mrb[0].mxu0
      %1562 = vmatprep.mubr.bf16.mxu0 0
      %1563 = vmatmul.mubr.bf16.gmra.mrb[0].mxu0 %v1430
      %v1564 = vpop.f32.mrb[0].mxu0
      %v1565 = vadd.f32 0.0, %v1564
      %v1566 = vpop.f32.mrb[0].mxu0
      %v1567 = vpop.f32.mrb[0].mxu0
      %v1568 = vadd.f32 0.0, %v1567
      %v1569 = vpop.f32.mrb[0].mxu0
      %1570 = vmatprep.mubr.bf16.mxu0 0
      %1571 = vmatmul.mubr.bf16.gmra.mrb[0].mxu0 %v1433
      %v1572 = vpop.f32.mrb[0].mxu0
      %v1573 = vadd.f32 0.0, %v1572
      %v1574 = vpop.f32.mrb[0].mxu0
      %v1575 = vpop.f32.mrb[0].mxu0
      %v1576 = vadd.f32 0.0, %v1575
      %v1577 = vpop.f32.mrb[0].mxu0
      %1578 = vmatprep.mubr.bf16.mxu0 0
      %1579 = vmatmul.mubr.bf16.gmra.mrb[0].mxu0 %v1436
      %v1580 = vpop.f32.mrb[0].mxu0
      %v1581 = vadd.f32 0.0, %v1580
      %v1582 = vpop.f32.mrb[0].mxu0
      %v1583 = vpop.f32.mrb[0].mxu0
      %v1584 = vadd.f32 0.0, %v1583
      %v1585 = vpop.f32.mrb[0].mxu0
      %1586 = vmatprep.mubr.bf16.mxu0 0
      %1587 = vmatmul.mubr.bf16.gmra.mrb[0].mxu0 %v1439
      %v1588 = vpop.f32.mrb[0].mxu0
      %v1589 = vadd.f32 0.0, %v1588
      %v1590 = vpop.f32.mrb[0].mxu0
      %v1591 = vpop.f32.mrb[0].mxu0
      %v1592 = vadd.f32 0.0, %v1591
      %v1593 = vpop.f32.mrb[0].mxu0
      %1594 = vmatprep.mubr.bf16.mxu0 0
      %1595 = vmatmul.mubr.bf16.gmra.mrb[0].mxu0 %v1442
      %v1596 = vpop.f32.mrb[0].mxu0
      %v1597 = vadd.f32 0.0, %v1596
      %v1598 = vpop.f32.mrb[0].mxu0
      %v1599 = vpop.f32.mrb[0].mxu0
      %v1600 = vadd.f32 0.0, %v1599
      %v1601 = vpop.f32.mrb[0].mxu0
      %1602 = vmatprep.mubr.bf16.mxu0 0
      %1603 = vmatmul.mubr.bf16.gmra.mrb[0].mxu0 %v1445
      %v1604 = vpop.f32.mrb[0].mxu0
      %v1605 = vadd.f32 0.0, %v1604
      %v1606 = vpop.f32.mrb[0].mxu0
      %v1607 = vpop.f32.mrb[0].mxu0
      %v1608 = vadd.f32 0.0, %v1607
      %v1609 = vpop.f32.mrb[0].mxu0
      %1610 = vdwg.mxu0
      %v1611 = vadd.f32 %v1086, %v1485
      %v1612 = vadd.f32 %v1089, %v1488
      %v1613 = vadd.f32 %v1094, %v1493
      %v1614 = vadd.f32 %v1097, %v1496
      %v1615 = vadd.f32 %v1102, %v1501
      %v1616 = vadd.f32 %v1105, %v1504
      %v1617 = vadd.f32 %v1110, %v1509
      %v1618 = vadd.f32 %v1113, %v1512
      %v1619 = vadd.f32 %v1118, %v1517
      %v1620 = vadd.f32 %v1121, %v1520
      %v1621 = vadd.f32 %v1126, %v1525
      %v1622 = vadd.f32 %v1129, %v1528
      %v1623 = vadd.f32 %v1134, %v1533
      %v1624 = vadd.f32 %v1137, %v1536
      %v1625 = vadd.f32 %v1142, %v1541
      %v1626 = vadd.f32 %v1145, %v1544
      %v1627 = vadd.f32 %v1150, %v1549
      %v1628 = vadd.f32 %v1153, %v1552
      %v1629 = vadd.f32 %v1158, %v1557
      %v1630 = vadd.f32 %v1161, %v1560
      %v1631 = vadd.f32 %v1166, %v1565
      %v1632 = vadd.f32 %v1169, %v1568
      %v1633 = vadd.f32 %v1174, %v1573
      %v1634 = vadd.f32 %v1177, %v1576
      %v1635 = vadd.f32 %v1182, %v1581
      %v1636 = vadd.f32 %v1185, %v1584
      %v1637 = vadd.f32 %v1190, %v1589
      %v1638 = vadd.f32 %v1193, %v1592
      %v1639 = vadd.f32 %v1198, %v1597
      %v1640 = vadd.f32 %v1201, %v1600
      %v1641 = vadd.f32 %v1206, %v1605
      %v1642 = vadd.f32 %v1209, %v1608
      %vm1643 = vsmask.f32 2304
      %vm1644 = vsmask.f32 6416
      %vm1645 = vmor %vm1643, %vm1644
      %v1646 = vrot.slane %v262, 5
      %v1647 = vrot.slane %v265, 6
      %v1648 = vor.u32 %v1646, %v1647
      %v1649 = vrot.slane %v1648, 4
      %v1650 = vrot.slane %v275, 5
      %v1651 = vrot.slane %v271, 6
      %v1652 = vor.u32 %v1650, %v1651
      %v1653 = vsel %vm1645, %v1649, %v1652
      %v1654 = vrot.slane %v1652, 4
      %v1655 = vshrl.u32 %v201, 16
      %v1657 = vrot.slane %v1655, 5
      %v1658 = vrot.slane %v281, 6
      %v1659 = vor.u32 %v1657, %v1658
      %v1660 = vsel %vm1645, %v1654, %v1659
      %v1661 = vrot.slane %v286, 5
      %v1662 = vrot.slane %v289, 6
      %v1663 = vor.u32 %v1661, %v1662
      %v1664 = vrot.slane %v1663, 4
      %v1665 = vrot.slane %v299, 5
      %v1666 = vrot.slane %v295, 6
      %v1667 = vor.u32 %v1665, %v1666
      %v1668 = vsel %vm1645, %v1664, %v1667
      %v1669 = vrot.slane %v1667, 4
      %v1670 = vshrl.u32 %v204, 16
      %v1672 = vrot.slane %v1670, 5
      %v1673 = vrot.slane %v305, 6
      %v1674 = vor.u32 %v1672, %v1673
      %v1675 = vsel %vm1645, %v1669, %v1674
      %v1676 = vrot.slane %v310, 5
      %v1677 = vrot.slane %v313, 6
      %v1678 = vor.u32 %v1676, %v1677
      %v1679 = vrot.slane %v1678, 4
      %v1680 = vrot.slane %v323, 5
      %v1681 = vrot.slane %v319, 6
      %v1682 = vor.u32 %v1680, %v1681
      %v1683 = vsel %vm1645, %v1679, %v1682
      %v1684 = vrot.slane %v1682, 4
      %v1685 = vshrl.u32 %v207, 16
      %v1687 = vrot.slane %v1685, 5
      %v1688 = vrot.slane %v329, 6
      %v1689 = vor.u32 %v1687, %v1688
      %v1690 = vsel %vm1645, %v1684, %v1689
      %v1691 = vrot.slane %v334, 5
      %v1692 = vrot.slane %v337, 6
      %v1693 = vor.u32 %v1691, %v1692
      %v1694 = vrot.slane %v1693, 4
      %v1695 = vrot.slane %v347, 5
      %v1696 = vrot.slane %v343, 6
      %v1697 = vor.u32 %v1695, %v1696
      %v1698 = vsel %vm1645, %v1694, %v1697
      %v1699 = vrot.slane %v1697, 4
      %v1700 = vshrl.u32 %v210, 16
      %v1702 = vrot.slane %v1700, 5
      %v1703 = vrot.slane %v353, 6
      %v1704 = vor.u32 %v1702, %v1703
      %v1705 = vsel %vm1645, %v1699, %v1704
      %v1706 = vrot.slane %v358, 5
      %v1707 = vrot.slane %v361, 6
      %v1708 = vor.u32 %v1706, %v1707
      %v1709 = vrot.slane %v1708, 4
      %v1710 = vrot.slane %v371, 5
      %v1711 = vrot.slane %v367, 6
      %v1712 = vor.u32 %v1710, %v1711
      %v1713 = vsel %vm1645, %v1709, %v1712
      %v1714 = vrot.slane %v1712, 4
      %v1715 = vshrl.u32 %v213, 16
      %v1717 = vrot.slane %v1715, 5
      %v1718 = vrot.slane %v377, 6
      %v1719 = vor.u32 %v1717, %v1718
      %v1720 = vsel %vm1645, %v1714, %v1719
      %v1721 = vrot.slane %v382, 5
      %v1722 = vrot.slane %v385, 6
      %v1723 = vor.u32 %v1721, %v1722
      %v1724 = vrot.slane %v1723, 4
      %v1725 = vrot.slane %v395, 5
      %v1726 = vrot.slane %v391, 6
      %v1727 = vor.u32 %v1725, %v1726
      %v1728 = vsel %vm1645, %v1724, %v1727
      %v1729 = vrot.slane %v1727, 4
      %v1730 = vshrl.u32 %v216, 16
      %v1732 = vrot.slane %v1730, 5
      %v1733 = vrot.slane %v401, 6
      %v1734 = vor.u32 %v1732, %v1733
      %v1735 = vsel %vm1645, %v1729, %v1734
      %v1736 = vrot.slane %v406, 5
      %v1737 = vrot.slane %v409, 6
      %v1738 = vor.u32 %v1736, %v1737
      %v1739 = vrot.slane %v1738, 4
      %v1740 = vrot.slane %v419, 5
      %v1741 = vrot.slane %v415, 6
      %v1742 = vor.u32 %v1740, %v1741
      %v1743 = vsel %vm1645, %v1739, %v1742
      %v1744 = vrot.slane %v1742, 4
      %v1745 = vshrl.u32 %v219, 16
      %v1747 = vrot.slane %v1745, 5
      %v1748 = vrot.slane %v425, 6
      %v1749 = vor.u32 %v1747, %v1748
      %v1750 = vsel %vm1645, %v1744, %v1749
      %v1751 = vrot.slane %v430, 5
      %v1752 = vrot.slane %v433, 6
      %v1753 = vor.u32 %v1751, %v1752
      %v1754 = vrot.slane %v1753, 4
      %v1755 = vrot.slane %v443, 5
      %v1756 = vrot.slane %v439, 6
      %v1757 = vor.u32 %v1755, %v1756
      %v1758 = vsel %vm1645, %v1754, %v1757
      %v1759 = vrot.slane %v1757, 4
      %v1760 = vshrl.u32 %v222, 16
      %v1762 = vrot.slane %v1760, 5
      %v1763 = vrot.slane %v449, 6
      %v1764 = vor.u32 %v1762, %v1763
      %v1765 = vsel %vm1645, %v1759, %v1764
      %v1766 = vrot.slane %v454, 5
      %v1767 = vrot.slane %v457, 6
      %v1768 = vor.u32 %v1766, %v1767
      %v1769 = vrot.slane %v1768, 4
      %v1770 = vrot.slane %v467, 5
      %v1771 = vrot.slane %v463, 6
      %v1772 = vor.u32 %v1770, %v1771
      %v1773 = vsel %vm1645, %v1769, %v1772
      %v1774 = vrot.slane %v1772, 4
      %v1775 = vshrl.u32 %v225, 16
      %v1777 = vrot.slane %v1775, 5
      %v1778 = vrot.slane %v473, 6
      %v1779 = vor.u32 %v1777, %v1778
      %v1780 = vsel %vm1645, %v1774, %v1779
      %v1781 = vrot.slane %v478, 5
      %v1782 = vrot.slane %v481, 6
      %v1783 = vor.u32 %v1781, %v1782
      %v1784 = vrot.slane %v1783, 4
      %v1785 = vrot.slane %v491, 5
      %v1786 = vrot.slane %v487, 6
      %v1787 = vor.u32 %v1785, %v1786
      %v1788 = vsel %vm1645, %v1784, %v1787
      %v1789 = vrot.slane %v1787, 4
      %v1790 = vshrl.u32 %v228, 16
      %v1792 = vrot.slane %v1790, 5
      %v1793 = vrot.slane %v497, 6
      %v1794 = vor.u32 %v1792, %v1793
      %v1795 = vsel %vm1645, %v1789, %v1794
      %v1796 = vrot.slane %v502, 5
      %v1797 = vrot.slane %v505, 6
      %v1798 = vor.u32 %v1796, %v1797
      %v1799 = vrot.slane %v1798, 4
      %v1800 = vrot.slane %v515, 5
      %v1801 = vrot.slane %v511, 6
      %v1802 = vor.u32 %v1800, %v1801
      %v1803 = vsel %vm1645, %v1799, %v1802
      %v1804 = vrot.slane %v1802, 4
      %v1805 = vshrl.u32 %v231, 16
      %v1807 = vrot.slane %v1805, 5
      %v1808 = vrot.slane %v521, 6
      %v1809 = vor.u32 %v1807, %v1808
      %v1810 = vsel %vm1645, %v1804, %v1809
      %v1811 = vrot.slane %v526, 5
      %v1812 = vrot.slane %v529, 6
      %v1813 = vor.u32 %v1811, %v1812
      %v1814 = vrot.slane %v1813, 4
      %v1815 = vrot.slane %v539, 5
      %v1816 = vrot.slane %v535, 6
      %v1817 = vor.u32 %v1815, %v1816
      %v1818 = vsel %vm1645, %v1814, %v1817
      %v1819 = vrot.slane %v1817, 4
      %v1820 = vshrl.u32 %v234, 16
      %v1822 = vrot.slane %v1820, 5
      %v1823 = vrot.slane %v545, 6
      %v1824 = vor.u32 %v1822, %v1823
      %v1825 = vsel %vm1645, %v1819, %v1824
      %v1826 = vrot.slane %v550, 5
      %v1827 = vrot.slane %v553, 6
      %v1828 = vor.u32 %v1826, %v1827
      %v1829 = vrot.slane %v1828, 4
      %v1830 = vrot.slane %v563, 5
      %v1831 = vrot.slane %v559, 6
      %v1832 = vor.u32 %v1830, %v1831
      %v1833 = vsel %vm1645, %v1829, %v1832
      %v1834 = vrot.slane %v1832, 4
      %v1835 = vshrl.u32 %v237, 16
      %v1837 = vrot.slane %v1835, 5
      %v1838 = vrot.slane %v569, 6
      %v1839 = vor.u32 %v1837, %v1838
      %v1840 = vsel %vm1645, %v1834, %v1839
      %v1841 = vrot.slane %v574, 5
      %v1842 = vrot.slane %v577, 6
      %v1843 = vor.u32 %v1841, %v1842
      %v1844 = vrot.slane %v1843, 4
      %v1845 = vrot.slane %v587, 5
      %v1846 = vrot.slane %v583, 6
      %v1847 = vor.u32 %v1845, %v1846
      %v1848 = vsel %vm1645, %v1844, %v1847
      %v1849 = vrot.slane %v1847, 4
      %v1850 = vshrl.u32 %v240, 16
      %v1852 = vrot.slane %v1850, 5
      %v1853 = vrot.slane %v593, 6
      %v1854 = vor.u32 %v1852, %v1853
      %v1855 = vsel %vm1645, %v1849, %v1854
      %v1856 = vrot.slane %v598, 5
      %v1857 = vrot.slane %v601, 6
      %v1858 = vor.u32 %v1856, %v1857
      %v1859 = vrot.slane %v1858, 4
      %v1860 = vrot.slane %v611, 5
      %v1861 = vrot.slane %v607, 6
      %v1862 = vor.u32 %v1860, %v1861
      %v1863 = vsel %vm1645, %v1859, %v1862
      %v1864 = vrot.slane %v1862, 4
      %v1865 = vshrl.u32 %v243, 16
      %v1867 = vrot.slane %v1865, 5
      %v1868 = vrot.slane %v617, 6
      %v1869 = vor.u32 %v1867, %v1868
      %v1870 = vsel %vm1645, %v1864, %v1869
      %v1871 = vrot.slane %v622, 5
      %v1872 = vrot.slane %v625, 6
      %v1873 = vor.u32 %v1871, %v1872
      %v1874 = vrot.slane %v1873, 4
      %v1875 = vrot.slane %v635, 5
      %v1876 = vrot.slane %v631, 6
      %v1877 = vor.u32 %v1875, %v1876
      %v1878 = vsel %vm1645, %v1874, %v1877
      %v1879 = vrot.slane %v1877, 4
      %v1880 = vshrl.u32 %v246, 16
      %v1882 = vrot.slane %v1880, 5
      %v1883 = vrot.slane %v641, 6
      %v1884 = vor.u32 %v1882, %v1883
      %v1885 = vsel %vm1645, %v1879, %v1884
      %s1886 = scalar_lea.vmem %s1, 24
      %v1887 = vld [vmem:[%s1886] sm:$0xf]
      %v1888 = vld [vmem:[%s1886 + $0x4] sm:$0x3]
      %v1889 = vunpack.c.l.b16 %v1653
      %v1890 = vunpack.c.l.b16 %v1660
      %v1891 = vunpack.c.l.b16 %v1668
      %v1892 = vunpack.c.l.b16 %v1675
      %v1893 = vunpack.c.l.b16 %v1683
      %v1894 = vunpack.c.l.b16 %v1690
      %v1895 = vunpack.c.l.b16 %v1698
      %v1896 = vunpack.c.l.b16 %v1705
      %v1897 = vunpack.c.l.b16 %v1713
      %v1898 = vunpack.c.l.b16 %v1720
      %v1899 = vunpack.c.l.b16 %v1728
      %v1900 = vunpack.c.l.b16 %v1735
      %v1901 = vunpack.c.l.b16 %v1743
      %v1902 = vunpack.c.l.b16 %v1750
      %v1903 = vunpack.c.l.b16 %v1758
      %v1904 = vunpack.c.l.b16 %v1765
      %v1905 = vunpack.c.l.b16 %v1773
      %v1906 = vunpack.c.l.b16 %v1780
      %v1907 = vunpack.c.l.b16 %v1788
      %v1908 = vunpack.c.l.b16 %v1795
      %v1909 = vunpack.c.l.b16 %v1803
      %v1910 = vunpack.c.l.b16 %v1810
      %v1911 = vunpack.c.l.b16 %v1818
      %v1912 = vunpack.c.l.b16 %v1825
      %v1913 = vunpack.c.l.b16 %v1833
      %v1914 = vunpack.c.l.b16 %v1840
      %v1915 = vunpack.c.l.b16 %v1848
      %v1916 = vunpack.c.l.b16 %v1855
      %v1917 = vunpack.c.l.b16 %v1863
      %v1918 = vunpack.c.l.b16 %v1870
      %v1919 = vunpack.c.l.b16 %v1878
      %v1920 = vunpack.c.l.b16 %v1885
      %v1921 = vpack.c.b16 %v1890, %v1889
      %v1922 = vpack.c.b16 %v1892, %v1891
      %v1923 = vpack.c.b16 %v1894, %v1893
      %v1924 = vpack.c.b16 %v1896, %v1895
      %v1925 = vpack.c.b16 %v1898, %v1897
      %v1926 = vpack.c.b16 %v1900, %v1899
      %v1927 = vpack.c.b16 %v1902, %v1901
      %v1928 = vpack.c.b16 %v1904, %v1903
      %v1929 = vpack.c.b16 %v1906, %v1905
      %v1930 = vpack.c.b16 %v1908, %v1907
      %v1931 = vpack.c.b16 %v1910, %v1909
      %v1932 = vpack.c.b16 %v1912, %v1911
      %v1933 = vpack.c.b16 %v1914, %v1913
      %v1934 = vpack.c.b16 %v1916, %v1915
      %v1935 = vpack.c.b16 %v1918, %v1917
      %v1936 = vpack.c.b16 %v1920, %v1919
      %v1939 = vunpack.c.l.b16 %v1887
      %v1940 = vunpack.c.l.b16 %v1888
      %v1941 = vpack.c.b16 %v1940, %v1939
      %v1943 = vsel %vm701, %v1921, 0
      %v1946 = vsel %vm701, %v1922, 0
      %v1949 = vsel %vm701, %v1923, 0
      %v1952 = vsel %vm701, %v1924, 0
      %v1955 = vsel %vm701, %v1925, 0
      %v1958 = vsel %vm701, %v1926, 0
      %v1961 = vsel %vm701, %v1927, 0
      %v1964 = vsel %vm701, %v1928, 0
      %v1967 = vsel %vm701, %v1929, 0
      %v1970 = vsel %vm701, %v1930, 0
      %v1973 = vsel %vm701, %v1931, 0
      %v1976 = vsel %vm701, %v1932, 0
      %v1979 = vsel %vm701, %v1933, 0
      %v1982 = vsel %vm701, %v1934, 0
      %v1985 = vsel %vm701, %v1935, 0
      %v1988 = vsel %vm701, %v1936, 0
      %v1991 = vsel %vm750, %v1941, 0
      %1993 = vmatprep.subr.bf16.mxu0 0
      %1994 = vmatpush1.bf16.msra.mxu0 %v1991
      %1995 = vmatprep.subr.bf16.mxu0 0
      %1996 = vmatpush1.bf16.msra.mxu0 0
      %1997 = vmatprep.subr.bf16.mxu0 0
      %1998 = vmatpush1.bf16.msra.mxu0 0
      %1999 = vmatprep.subr.bf16.mxu0 0
      %2000 = vmatpush1.bf16.msra.mxu0 0
      %2001 = vmatprep.subr.bf16.mxu0 0
      %2002 = vmatpush1.bf16.msra.mxu0 0
      %2003 = vmatprep.subr.bf16.mxu0 0
      %2004 = vmatpush1.bf16.msra.mxu0 0
      %2005 = vmatprep.subr.bf16.mxu0 0
      %2006 = vmatpush1.bf16.msra.mxu0 0
      %2007 = vmatprep.subr.bf16.mxu0 0
      %2008 = vmatpush1.bf16.msra.mxu0 0
      %2009 = vmatprep.subr.bf16.mxu0 0
      %2010 = vmatpush1.bf16.msra.mxu0 0
      %2011 = vmatprep.subr.bf16.mxu0 0
      %2012 = vmatpush1.bf16.msra.mxu0 0
      %2013 = vmatprep.subr.bf16.mxu0 0
      %2014 = vmatpush1.bf16.msra.mxu0 0
      %2015 = vmatprep.subr.bf16.mxu0 0
      %2016 = vmatpush1.bf16.msra.mxu0 0
      %2017 = vmatprep.subr.bf16.mxu0 0
      %2018 = vmatpush1.bf16.msra.mxu0 0
      %2019 = vmatprep.subr.bf16.mxu0 0
      %2020 = vmatpush1.bf16.msra.mxu0 0
      %2021 = vmatprep.subr.bf16.mxu0 0
      %2022 = vmatpush1.bf16.msra.mxu0 0
      %2023 = vmatprep.subr.bf16.mxu0 0
      %2024 = vmatpush1.bf16.msra.mxu0 0
      %2025 = vmatprep.mubr.bf16.mxu0 0
      %2026 = vmatmul.mubr.bf16.gmra.mrb[0].mxu0 %v1943
      %v2027 = vpop.f32.mrb[0].mxu0
      %v2028 = vadd.f32 0.0, %v2027
      %v2029 = vpop.f32.mrb[0].mxu0
      %v2030 = vpop.f32.mrb[0].mxu0
      %v2031 = vadd.f32 0.0, %v2030
      %v2032 = vpop.f32.mrb[0].mxu0
      %2033 = vmatprep.mubr.bf16.mxu0 0
      %2034 = vmatmul.mubr.bf16.gmra.mrb[0].mxu0 %v1946
      %v2035 = vpop.f32.mrb[0].mxu0
      %v2036 = vadd.f32 0.0, %v2035
      %v2037 = vpop.f32.mrb[0].mxu0
      %v2038 = vpop.f32.mrb[0].mxu0
      %v2039 = vadd.f32 0.0, %v2038
      %v2040 = vpop.f32.mrb[0].mxu0
      %2041 = vmatprep.mubr.bf16.mxu0 0
      %2042 = vmatmul.mubr.bf16.gmra.mrb[0].mxu0 %v1949
      %v2043 = vpop.f32.mrb[0].mxu0
      %v2044 = vadd.f32 0.0, %v2043
      %v2045 = vpop.f32.mrb[0].mxu0
      %v2046 = vpop.f32.mrb[0].mxu0
      %v2047 = vadd.f32 0.0, %v2046
      %v2048 = vpop.f32.mrb[0].mxu0
      %2049 = vmatprep.mubr.bf16.mxu0 0
      %2050 = vmatmul.mubr.bf16.gmra.mrb[0].mxu0 %v1952
      %v2051 = vpop.f32.mrb[0].mxu0
      %v2052 = vadd.f32 0.0, %v2051
      %v2053 = vpop.f32.mrb[0].mxu0
      %v2054 = vpop.f32.mrb[0].mxu0
      %v2055 = vadd.f32 0.0, %v2054
      %v2056 = vpop.f32.mrb[0].mxu0
      %2057 = vmatprep.mubr.bf16.mxu0 0
      %2058 = vmatmul.mubr.bf16.gmra.mrb[0].mxu0 %v1955
      %v2059 = vpop.f32.mrb[0].mxu0
      %v2060 = vadd.f32 0.0, %v2059
      %v2061 = vpop.f32.mrb[0].mxu0
      %v2062 = vpop.f32.mrb[0].mxu0
      %v2063 = vadd.f32 0.0, %v2062
      %v2064 = vpop.f32.mrb[0].mxu0
      %2065 = vmatprep.mubr.bf16.mxu0 0
      %2066 = vmatmul.mubr.bf16.gmra.mrb[0].mxu0 %v1958
      %v2067 = vpop.f32.mrb[0].mxu0
      %v2068 = vadd.f32 0.0, %v2067
      %v2069 = vpop.f32.mrb[0].mxu0
      %v2070 = vpop.f32.mrb[0].mxu0
      %v2071 = vadd.f32 0.0, %v2070
      %v2072 = vpop.f32.mrb[0].mxu0
      %2073 = vmatprep.mubr.bf16.mxu0 0
      %2074 = vmatmul.mubr.bf16.gmra.mrb[0].mxu0 %v1961
      %v2075 = vpop.f32.mrb[0].mxu0
      %v2076 = vadd.f32 0.0, %v2075
      %v2077 = vpop.f32.mrb[0].mxu0
      %v2078 = vpop.f32.mrb[0].mxu0
      %v2079 = vadd.f32 0.0, %v2078
      %v2080 = vpop.f32.mrb[0].mxu0
      %2081 = vmatprep.mubr.bf16.mxu0 0
      %2082 = vmatmul.mubr.bf16.gmra.mrb[0].mxu0 %v1964
      %v2083 = vpop.f32.mrb[0].mxu0
      %v2084 = vadd.f32 0.0, %v2083
      %v2085 = vpop.f32.mrb[0].mxu0
      %v2086 = vpop.f32.mrb[0].mxu0
      %v2087 = vadd.f32 0.0, %v2086
      %v2088 = vpop.f32.mrb[0].mxu0
      %2089 = vmatprep.mubr.bf16.mxu0 0
      %2090 = vmatmul.mubr.bf16.gmra.mrb[0].mxu0 %v1967
      %v2091 = vpop.f32.mrb[0].mxu0
      %v2092 = vadd.f32 0.0, %v2091
      %v2093 = vpop.f32.mrb[0].mxu0
      %v2094 = vpop.f32.mrb[0].mxu0
      %v2095 = vadd.f32 0.0, %v2094
      %v2096 = vpop.f32.mrb[0].mxu0
      %2097 = vmatprep.mubr.bf16.mxu0 0
      %2098 = vmatmul.mubr.bf16.gmra.mrb[0].mxu0 %v1970
      %v2099 = vpop.f32.mrb[0].mxu0
      %v2100 = vadd.f32 0.0, %v2099
      %v2101 = vpop.f32.mrb[0].mxu0
      %v2102 = vpop.f32.mrb[0].mxu0
      %v2103 = vadd.f32 0.0, %v2102
      %v2104 = vpop.f32.mrb[0].mxu0
      %2105 = vmatprep.mubr.bf16.mxu0 0
      %2106 = vmatmul.mubr.bf16.gmra.mrb[0].mxu0 %v1973
      %v2107 = vpop.f32.mrb[0].mxu0
      %v2108 = vadd.f32 0.0, %v2107
      %v2109 = vpop.f32.mrb[0].mxu0
      %v2110 = vpop.f32.mrb[0].mxu0
      %v2111 = vadd.f32 0.0, %v2110
      %v2112 = vpop.f32.mrb[0].mxu0
      %2113 = vmatprep.mubr.bf16.mxu0 0
      %2114 = vmatmul.mubr.bf16.gmra.mrb[0].mxu0 %v1976
      %v2115 = vpop.f32.mrb[0].mxu0
      %v2116 = vadd.f32 0.0, %v2115
      %v2117 = vpop.f32.mrb[0].mxu0
      %v2118 = vpop.f32.mrb[0].mxu0
      %v2119 = vadd.f32 0.0, %v2118
      %v2120 = vpop.f32.mrb[0].mxu0
      %2121 = vmatprep.mubr.bf16.mxu0 0
      %2122 = vmatmul.mubr.bf16.gmra.mrb[0].mxu0 %v1979
      %v2123 = vpop.f32.mrb[0].mxu0
      %v2124 = vadd.f32 0.0, %v2123
      %v2125 = vpop.f32.mrb[0].mxu0
      %v2126 = vpop.f32.mrb[0].mxu0
      %v2127 = vadd.f32 0.0, %v2126
      %v2128 = vpop.f32.mrb[0].mxu0
      %2129 = vmatprep.mubr.bf16.mxu0 0
      %2130 = vmatmul.mubr.bf16.gmra.mrb[0].mxu0 %v1982
      %v2131 = vpop.f32.mrb[0].mxu0
      %v2132 = vadd.f32 0.0, %v2131
      %v2133 = vpop.f32.mrb[0].mxu0
      %v2134 = vpop.f32.mrb[0].mxu0
      %v2135 = vadd.f32 0.0, %v2134
      %v2136 = vpop.f32.mrb[0].mxu0
      %2137 = vmatprep.mubr.bf16.mxu0 0
      %2138 = vmatmul.mubr.bf16.gmra.mrb[0].mxu0 %v1985
      %v2139 = vpop.f32.mrb[0].mxu0
      %v2140 = vadd.f32 0.0, %v2139
      %v2141 = vpop.f32.mrb[0].mxu0
      %v2142 = vpop.f32.mrb[0].mxu0
      %v2143 = vadd.f32 0.0, %v2142
      %v2144 = vpop.f32.mrb[0].mxu0
      %2145 = vmatprep.mubr.bf16.mxu0 0
      %2146 = vmatmul.mubr.bf16.gmra.mrb[0].mxu0 %v1988
      %v2147 = vpop.f32.mrb[0].mxu0
      %v2148 = vadd.f32 0.0, %v2147
      %v2149 = vpop.f32.mrb[0].mxu0
      %v2150 = vpop.f32.mrb[0].mxu0
      %v2151 = vadd.f32 0.0, %v2150
      %v2152 = vpop.f32.mrb[0].mxu0
      %2153 = vdwg.mxu0
      %v2154 = vadd.f32 %v1611, %v2028
      %v2155 = vadd.f32 %v1612, %v2031
      %v2156 = vadd.f32 %v1613, %v2036
      %v2157 = vadd.f32 %v1614, %v2039
      %v2158 = vadd.f32 %v1615, %v2044
      %v2159 = vadd.f32 %v1616, %v2047
      %v2160 = vadd.f32 %v1617, %v2052
      %v2161 = vadd.f32 %v1618, %v2055
      %v2162 = vadd.f32 %v1619, %v2060
      %v2163 = vadd.f32 %v1620, %v2063
      %v2164 = vadd.f32 %v1621, %v2068
      %v2165 = vadd.f32 %v1622, %v2071
      %v2166 = vadd.f32 %v1623, %v2076
      %v2167 = vadd.f32 %v1624, %v2079
      %v2168 = vadd.f32 %v1625, %v2084
      %v2169 = vadd.f32 %v1626, %v2087
      %v2170 = vadd.f32 %v1627, %v2092
      %v2171 = vadd.f32 %v1628, %v2095
      %v2172 = vadd.f32 %v1629, %v2100
      %v2173 = vadd.f32 %v1630, %v2103
      %v2174 = vadd.f32 %v1631, %v2108
      %v2175 = vadd.f32 %v1632, %v2111
      %v2176 = vadd.f32 %v1633, %v2116
      %v2177 = vadd.f32 %v1634, %v2119
      %v2178 = vadd.f32 %v1635, %v2124
      %v2179 = vadd.f32 %v1636, %v2127
      %v2180 = vadd.f32 %v1637, %v2132
      %v2181 = vadd.f32 %v1638, %v2135
      %v2182 = vadd.f32 %v1639, %v2140
      %v2183 = vadd.f32 %v1640, %v2143
      %v2184 = vadd.f32 %v1641, %v2148
      %v2185 = vadd.f32 %v1642, %v2151
      %s2186 = scalar_lea.vmem %s1, 32
      %v2187 = vld [vmem:[%s2186] sm:$0xf]
      %v2188 = vld [vmem:[%s2186 + $0x4] sm:$0x3]
      %v2191 = vunpack.c.l.b16 %v247
      %v2192 = vunpack.c.l.b16 %v248
      %v2193 = vpack.c.b16 %v2192, %v2191
      %v2196 = vunpack.c.l.b16 %v2187
      %v2197 = vunpack.c.l.b16 %v2188
      %v2198 = vpack.c.b16 %v2197, %v2196
      %v2200 = vsel %vm701, %v2193, 0
      %v2203 = vsel %vm750, %v2198, 0
      %2205 = vmatprep.subr.bf16.mxu0 0
      %2206 = vmatpush1.bf16.msra.mxu0 %v2203
      %2207 = vmatprep.subr.bf16.mxu0 0
      %2208 = vmatpush1.bf16.msra.mxu0 0
      %2209 = vmatprep.subr.bf16.mxu0 0
      %2210 = vmatpush1.bf16.msra.mxu0 0
      %2211 = vmatprep.subr.bf16.mxu0 0
      %2212 = vmatpush1.bf16.msra.mxu0 0
      %2213 = vmatprep.subr.bf16.mxu0 0
      %2214 = vmatpush1.bf16.msra.mxu0 0
      %2215 = vmatprep.subr.bf16.mxu0 0
      %2216 = vmatpush1.bf16.msra.mxu0 0
      %2217 = vmatprep.subr.bf16.mxu0 0
      %2218 = vmatpush1.bf16.msra.mxu0 0
      %2219 = vmatprep.subr.bf16.mxu0 0
      %2220 = vmatpush1.bf16.msra.mxu0 0
      %2221 = vmatprep.subr.bf16.mxu0 0
      %2222 = vmatpush1.bf16.msra.mxu0 0
      %2223 = vmatprep.subr.bf16.mxu0 0
      %2224 = vmatpush1.bf16.msra.mxu0 0
      %2225 = vmatprep.subr.bf16.mxu0 0
      %2226 = vmatpush1.bf16.msra.mxu0 0
      %2227 = vmatprep.subr.bf16.mxu0 0
      %2228 = vmatpush1.bf16.msra.mxu0 0
      %2229 = vmatprep.subr.bf16.mxu0 0
      %2230 = vmatpush1.bf16.msra.mxu0 0
      %2231 = vmatprep.subr.bf16.mxu0 0
      %2232 = vmatpush1.bf16.msra.mxu0 0
      %2233 = vmatprep.subr.bf16.mxu0 0
      %2234 = vmatpush1.bf16.msra.mxu0 0
      %2235 = vmatprep.subr.bf16.mxu0 0
      %2236 = vmatpush1.bf16.msra.mxu0 0
      %2237 = vmatprep.mubr.bf16.mxu0 0
      %2238 = vmatmul.mubr.bf16.gmra.mrb[0].mxu0 %v1004
      %v2239 = vpop.f32.mrb[0].mxu0
      %v2240 = vadd.f32 0.0, %v2239
      %v2241 = vpop.f32.mrb[0].mxu0
      %v2242 = vpop.f32.mrb[0].mxu0
      %v2243 = vadd.f32 0.0, %v2242
      %v2244 = vpop.f32.mrb[0].mxu0
      %2245 = vmatprep.mubr.bf16.mxu0 0
      %2246 = vmatmul.mubr.bf16.gmra.mrb[0].mxu0 %v1007
      %v2247 = vpop.f32.mrb[0].mxu0
      %v2248 = vadd.f32 0.0, %v2247
      %v2249 = vpop.f32.mrb[0].mxu0
      %v2250 = vpop.f32.mrb[0].mxu0
      %v2251 = vadd.f32 0.0, %v2250
      %v2252 = vpop.f32.mrb[0].mxu0
      %2253 = vmatprep.mubr.bf16.mxu0 0
      %2254 = vmatmul.mubr.bf16.gmra.mrb[0].mxu0 %v1010
      %v2255 = vpop.f32.mrb[0].mxu0
      %v2256 = vadd.f32 0.0, %v2255
      %v2257 = vpop.f32.mrb[0].mxu0
      %v2258 = vpop.f32.mrb[0].mxu0
      %v2259 = vadd.f32 0.0, %v2258
      %v2260 = vpop.f32.mrb[0].mxu0
      %2261 = vmatprep.mubr.bf16.mxu0 0
      %2262 = vmatmul.mubr.bf16.gmra.mrb[0].mxu0 %v1013
      %v2263 = vpop.f32.mrb[0].mxu0
      %v2264 = vadd.f32 0.0, %v2263
      %v2265 = vpop.f32.mrb[0].mxu0
      %v2266 = vpop.f32.mrb[0].mxu0
      %v2267 = vadd.f32 0.0, %v2266
      %v2268 = vpop.f32.mrb[0].mxu0
      %2269 = vmatprep.mubr.bf16.mxu0 0
      %2270 = vmatmul.mubr.bf16.gmra.mrb[0].mxu0 %v1016
      %v2271 = vpop.f32.mrb[0].mxu0
      %v2272 = vadd.f32 0.0, %v2271
      %v2273 = vpop.f32.mrb[0].mxu0
      %v2274 = vpop.f32.mrb[0].mxu0
      %v2275 = vadd.f32 0.0, %v2274
      %v2276 = vpop.f32.mrb[0].mxu0
      %2277 = vmatprep.mubr.bf16.mxu0 0
      %2278 = vmatmul.mubr.bf16.gmra.mrb[0].mxu0 %v1019
      %v2279 = vpop.f32.mrb[0].mxu0
      %v2280 = vadd.f32 0.0, %v2279
      %v2281 = vpop.f32.mrb[0].mxu0
      %v2282 = vpop.f32.mrb[0].mxu0
      %v2283 = vadd.f32 0.0, %v2282
      %v2284 = vpop.f32.mrb[0].mxu0
      %2285 = vmatprep.mubr.bf16.mxu0 0
      %2286 = vmatmul.mubr.bf16.gmra.mrb[0].mxu0 %v1022
      %v2287 = vpop.f32.mrb[0].mxu0
      %v2288 = vadd.f32 0.0, %v2287
      %v2289 = vpop.f32.mrb[0].mxu0
      %v2290 = vpop.f32.mrb[0].mxu0
      %v2291 = vadd.f32 0.0, %v2290
      %v2292 = vpop.f32.mrb[0].mxu0
      %2293 = vmatprep.mubr.bf16.mxu0 0
      %2294 = vmatmul.mubr.bf16.gmra.mrb[0].mxu0 %v1025
      %v2295 = vpop.f32.mrb[0].mxu0
      %v2296 = vadd.f32 0.0, %v2295
      %v2297 = vpop.f32.mrb[0].mxu0
      %v2298 = vpop.f32.mrb[0].mxu0
      %v2299 = vadd.f32 0.0, %v2298
      %v2300 = vpop.f32.mrb[0].mxu0
      %2301 = vmatprep.mubr.bf16.mxu0 0
      %2302 = vmatmul.mubr.bf16.gmra.mrb[0].mxu0 %v1028
      %v2303 = vpop.f32.mrb[0].mxu0
      %v2304 = vadd.f32 0.0, %v2303
      %v2305 = vpop.f32.mrb[0].mxu0
      %v2306 = vpop.f32.mrb[0].mxu0
      %v2307 = vadd.f32 0.0, %v2306
      %v2308 = vpop.f32.mrb[0].mxu0
      %2309 = vmatprep.mubr.bf16.mxu0 0
      %2310 = vmatmul.mubr.bf16.gmra.mrb[0].mxu0 %v1031
      %v2311 = vpop.f32.mrb[0].mxu0
      %v2312 = vadd.f32 0.0, %v2311
      %v2313 = vpop.f32.mrb[0].mxu0
      %v2314 = vpop.f32.mrb[0].mxu0
      %v2315 = vadd.f32 0.0, %v2314
      %v2316 = vpop.f32.mrb[0].mxu0
      %2317 = vmatprep.mubr.bf16.mxu0 0
      %2318 = vmatmul.mubr.bf16.gmra.mrb[0].mxu0 %v1034
      %v2319 = vpop.f32.mrb[0].mxu0
      %v2320 = vadd.f32 0.0, %v2319
      %v2321 = vpop.f32.mrb[0].mxu0
      %v2322 = vpop.f32.mrb[0].mxu0
      %v2323 = vadd.f32 0.0, %v2322
      %v2324 = vpop.f32.mrb[0].mxu0
      %2325 = vmatprep.mubr.bf16.mxu0 0
      %2326 = vmatmul.mubr.bf16.gmra.mrb[0].mxu0 %v1037
      %v2327 = vpop.f32.mrb[0].mxu0
      %v2328 = vadd.f32 0.0, %v2327
      %v2329 = vpop.f32.mrb[0].mxu0
      %v2330 = vpop.f32.mrb[0].mxu0
      %v2331 = vadd.f32 0.0, %v2330
      %v2332 = vpop.f32.mrb[0].mxu0
      %2333 = vmatprep.mubr.bf16.mxu0 0
      %2334 = vmatmul.mubr.bf16.gmra.mrb[0].mxu0 %v1040
      %v2335 = vpop.f32.mrb[0].mxu0
      %v2336 = vadd.f32 0.0, %v2335
      %v2337 = vpop.f32.mrb[0].mxu0
      %v2338 = vpop.f32.mrb[0].mxu0
      %v2339 = vadd.f32 0.0, %v2338
      %v2340 = vpop.f32.mrb[0].mxu0
      %2341 = vmatprep.mubr.bf16.mxu0 0
      %2342 = vmatmul.mubr.bf16.gmra.mrb[0].mxu0 %v1043
      %v2343 = vpop.f32.mrb[0].mxu0
      %v2344 = vadd.f32 0.0, %v2343
      %v2345 = vpop.f32.mrb[0].mxu0
      %v2346 = vpop.f32.mrb[0].mxu0
      %v2347 = vadd.f32 0.0, %v2346
      %v2348 = vpop.f32.mrb[0].mxu0
      %2349 = vmatprep.mubr.bf16.mxu0 0
      %2350 = vmatmul.mubr.bf16.gmra.mrb[0].mxu0 %v1046
      %v2351 = vpop.f32.mrb[0].mxu0
      %v2352 = vadd.f32 0.0, %v2351
      %v2353 = vpop.f32.mrb[0].mxu0
      %v2354 = vpop.f32.mrb[0].mxu0
      %v2355 = vadd.f32 0.0, %v2354
      %v2356 = vpop.f32.mrb[0].mxu0
      %2357 = vmatprep.mubr.bf16.mxu0 0
      %2358 = vmatmul.mubr.bf16.gmra.mrb[0].mxu0 %v2200
      %v2359 = vpop.f32.mrb[0].mxu0
      %v2360 = vadd.f32 0.0, %v2359
      %v2361 = vpop.f32.mrb[0].mxu0
      %v2362 = vpop.f32.mrb[0].mxu0
      %v2363 = vadd.f32 0.0, %v2362
      %v2364 = vpop.f32.mrb[0].mxu0
      %2365 = vdwg.mxu0
      %v2366 = vadd.f32 %v2154, %v2240
      %v2367 = vadd.f32 %v2155, %v2243
      %v2368 = vadd.f32 %v2156, %v2248
      %v2369 = vadd.f32 %v2157, %v2251
      %v2370 = vadd.f32 %v2158, %v2256
      %v2371 = vadd.f32 %v2159, %v2259
      %v2372 = vadd.f32 %v2160, %v2264
      %v2373 = vadd.f32 %v2161, %v2267
      %v2374 = vadd.f32 %v2162, %v2272
      %v2375 = vadd.f32 %v2163, %v2275
      %v2376 = vadd.f32 %v2164, %v2280
      %v2377 = vadd.f32 %v2165, %v2283
      %v2378 = vadd.f32 %v2166, %v2288
      %v2379 = vadd.f32 %v2167, %v2291
      %v2380 = vadd.f32 %v2168, %v2296
      %v2381 = vadd.f32 %v2169, %v2299
      %v2382 = vadd.f32 %v2170, %v2304
      %v2383 = vadd.f32 %v2171, %v2307
      %v2384 = vadd.f32 %v2172, %v2312
      %v2385 = vadd.f32 %v2173, %v2315
      %v2386 = vadd.f32 %v2174, %v2320
      %v2387 = vadd.f32 %v2175, %v2323
      %v2388 = vadd.f32 %v2176, %v2328
      %v2389 = vadd.f32 %v2177, %v2331
      %v2390 = vadd.f32 %v2178, %v2336
      %v2391 = vadd.f32 %v2179, %v2339
      %v2392 = vadd.f32 %v2180, %v2344
      %v2393 = vadd.f32 %v2181, %v2347
      %v2394 = vadd.f32 %v2182, %v2352
      %v2395 = vadd.f32 %v2183, %v2355
      %v2396 = vadd.f32 %v2184, %v2360
      %v2397 = vadd.f32 %v2185, %v2363
      %v2399 = vshrl.u32 %v247, 16
      %v2401 = vrot.slane %v2399, 4
      %v2402 = vshll.u32 %v247, 16
      %v2404 = vrot.slane %v2402, 5
      %v2405 = vor.u32 %v2401, %v2404
      %v2406 = vrot.slane %v2405, 4
      %v2408 = vshll.u32 %v248, 16
      %v2410 = vrot.slane %v2408, 5
      %v2411 = vsel %vm260, %v2406, %v2410
      %v2412 = vshrl.u32 %v248, 16
      %v2414 = vrot.slane %v2412, 4
      %v2415 = vor.u32 %v2414, %v2410
      %v2416 = vrot.slane %v2415, 4
      %v2418 = vshll.u32 %v249, 16
      %v2420 = vrot.slane %v2418, 5
      %v2421 = vsel %vm260, %v2416, %v2420
      %s2422 = scalar_lea.vmem %s1, 40
      %v2423 = vld [vmem:[%s2422] sm:$0xf]
      %v2424 = vld [vmem:[%s2422 + $0x4] sm:$0x3]
      %v2425 = vunpack.c.l.b16 %v2411
      %v2426 = vunpack.c.l.b16 %v2421
      %v2427 = vpack.c.b16 %v2426, %v2425
      %v2430 = vunpack.c.l.b16 %v2423
      %v2431 = vunpack.c.l.b16 %v2424
      %v2432 = vpack.c.b16 %v2431, %v2430
      %v2434 = vsel %vm701, %v2427, 0
      %v2437 = vsel %vm750, %v2432, 0
      %2439 = vmatprep.subr.bf16.mxu0 0
      %2440 = vmatpush1.bf16.msra.mxu0 %v2437
      %2441 = vmatprep.subr.bf16.mxu0 0
      %2442 = vmatpush1.bf16.msra.mxu0 0
      %2443 = vmatprep.subr.bf16.mxu0 0
      %2444 = vmatpush1.bf16.msra.mxu0 0
      %2445 = vmatprep.subr.bf16.mxu0 0
      %2446 = vmatpush1.bf16.msra.mxu0 0
      %2447 = vmatprep.subr.bf16.mxu0 0
      %2448 = vmatpush1.bf16.msra.mxu0 0
      %2449 = vmatprep.subr.bf16.mxu0 0
      %2450 = vmatpush1.bf16.msra.mxu0 0
      %2451 = vmatprep.subr.bf16.mxu0 0
      %2452 = vmatpush1.bf16.msra.mxu0 0
      %2453 = vmatprep.subr.bf16.mxu0 0
      %2454 = vmatpush1.bf16.msra.mxu0 0
      %2455 = vmatprep.subr.bf16.mxu0 0
      %2456 = vmatpush1.bf16.msra.mxu0 0
      %2457 = vmatprep.subr.bf16.mxu0 0
      %2458 = vmatpush1.bf16.msra.mxu0 0
      %2459 = vmatprep.subr.bf16.mxu0 0
      %2460 = vmatpush1.bf16.msra.mxu0 0
      %2461 = vmatprep.subr.bf16.mxu0 0
      %2462 = vmatpush1.bf16.msra.mxu0 0
      %2463 = vmatprep.subr.bf16.mxu0 0
      %2464 = vmatpush1.bf16.msra.mxu0 0
      %2465 = vmatprep.subr.bf16.mxu0 0
      %2466 = vmatpush1.bf16.msra.mxu0 0
      %2467 = vmatprep.subr.bf16.mxu0 0
      %2468 = vmatpush1.bf16.msra.mxu0 0
      %2469 = vmatprep.subr.bf16.mxu0 0
      %2470 = vmatpush1.bf16.msra.mxu0 0
      %2471 = vmatprep.mubr.bf16.mxu0 0
      %2472 = vmatmul.mubr.bf16.gmra.mrb[0].mxu0 %v706
      %v2473 = vpop.f32.mrb[0].mxu0
      %v2474 = vadd.f32 0.0, %v2473
      %v2475 = vpop.f32.mrb[0].mxu0
      %v2476 = vpop.f32.mrb[0].mxu0
      %v2477 = vadd.f32 0.0, %v2476
      %v2478 = vpop.f32.mrb[0].mxu0
      %2479 = vmatprep.mubr.bf16.mxu0 0
      %2480 = vmatmul.mubr.bf16.gmra.mrb[0].mxu0 %v709
      %v2481 = vpop.f32.mrb[0].mxu0
      %v2482 = vadd.f32 0.0, %v2481
      %v2483 = vpop.f32.mrb[0].mxu0
      %v2484 = vpop.f32.mrb[0].mxu0
      %v2485 = vadd.f32 0.0, %v2484
      %v2486 = vpop.f32.mrb[0].mxu0
      %2487 = vmatprep.mubr.bf16.mxu0 0
      %2488 = vmatmul.mubr.bf16.gmra.mrb[0].mxu0 %v712
      %v2489 = vpop.f32.mrb[0].mxu0
      %v2490 = vadd.f32 0.0, %v2489
      %v2491 = vpop.f32.mrb[0].mxu0
      %v2492 = vpop.f32.mrb[0].mxu0
      %v2493 = vadd.f32 0.0, %v2492
      %v2494 = vpop.f32.mrb[0].mxu0
      %2495 = vmatprep.mubr.bf16.mxu0 0
      %2496 = vmatmul.mubr.bf16.gmra.mrb[0].mxu0 %v715
      %v2497 = vpop.f32.mrb[0].mxu0
      %v2498 = vadd.f32 0.0, %v2497
      %v2499 = vpop.f32.mrb[0].mxu0
      %v2500 = vpop.f32.mrb[0].mxu0
      %v2501 = vadd.f32 0.0, %v2500
      %v2502 = vpop.f32.mrb[0].mxu0
      %2503 = vmatprep.mubr.bf16.mxu0 0
      %2504 = vmatmul.mubr.bf16.gmra.mrb[0].mxu0 %v718
      %v2505 = vpop.f32.mrb[0].mxu0
      %v2506 = vadd.f32 0.0, %v2505
      %v2507 = vpop.f32.mrb[0].mxu0
      %v2508 = vpop.f32.mrb[0].mxu0
      %v2509 = vadd.f32 0.0, %v2508
      %v2510 = vpop.f32.mrb[0].mxu0
      %2511 = vmatprep.mubr.bf16.mxu0 0
      %2512 = vmatmul.mubr.bf16.gmra.mrb[0].mxu0 %v721
      %v2513 = vpop.f32.mrb[0].mxu0
      %v2514 = vadd.f32 0.0, %v2513
      %v2515 = vpop.f32.mrb[0].mxu0
      %v2516 = vpop.f32.mrb[0].mxu0
      %v2517 = vadd.f32 0.0, %v2516
      %v2518 = vpop.f32.mrb[0].mxu0
      %2519 = vmatprep.mubr.bf16.mxu0 0
      %2520 = vmatmul.mubr.bf16.gmra.mrb[0].mxu0 %v724
      %v2521 = vpop.f32.mrb[0].mxu0
      %v2522 = vadd.f32 0.0, %v2521
      %v2523 = vpop.f32.mrb[0].mxu0
      %v2524 = vpop.f32.mrb[0].mxu0
      %v2525 = vadd.f32 0.0, %v2524
      %v2526 = vpop.f32.mrb[0].mxu0
      %2527 = vmatprep.mubr.bf16.mxu0 0
      %2528 = vmatmul.mubr.bf16.gmra.mrb[0].mxu0 %v727
      %v2529 = vpop.f32.mrb[0].mxu0
      %v2530 = vadd.f32 0.0, %v2529
      %v2531 = vpop.f32.mrb[0].mxu0
      %v2532 = vpop.f32.mrb[0].mxu0
      %v2533 = vadd.f32 0.0, %v2532
      %v2534 = vpop.f32.mrb[0].mxu0
      %2535 = vmatprep.mubr.bf16.mxu0 0
      %2536 = vmatmul.mubr.bf16.gmra.mrb[0].mxu0 %v730
      %v2537 = vpop.f32.mrb[0].mxu0
      %v2538 = vadd.f32 0.0, %v2537
      %v2539 = vpop.f32.mrb[0].mxu0
      %v2540 = vpop.f32.mrb[0].mxu0
      %v2541 = vadd.f32 0.0, %v2540
      %v2542 = vpop.f32.mrb[0].mxu0
      %2543 = vmatprep.mubr.bf16.mxu0 0
      %2544 = vmatmul.mubr.bf16.gmra.mrb[0].mxu0 %v733
      %v2545 = vpop.f32.mrb[0].mxu0
      %v2546 = vadd.f32 0.0, %v2545
      %v2547 = vpop.f32.mrb[0].mxu0
      %v2548 = vpop.f32.mrb[0].mxu0
      %v2549 = vadd.f32 0.0, %v2548
      %v2550 = vpop.f32.mrb[0].mxu0
      %2551 = vmatprep.mubr.bf16.mxu0 0
      %2552 = vmatmul.mubr.bf16.gmra.mrb[0].mxu0 %v736
      %v2553 = vpop.f32.mrb[0].mxu0
      %v2554 = vadd.f32 0.0, %v2553
      %v2555 = vpop.f32.mrb[0].mxu0
      %v2556 = vpop.f32.mrb[0].mxu0
      %v2557 = vadd.f32 0.0, %v2556
      %v2558 = vpop.f32.mrb[0].mxu0
      %2559 = vmatprep.mubr.bf16.mxu0 0
      %2560 = vmatmul.mubr.bf16.gmra.mrb[0].mxu0 %v739
      %v2561 = vpop.f32.mrb[0].mxu0
      %v2562 = vadd.f32 0.0, %v2561
      %v2563 = vpop.f32.mrb[0].mxu0
      %v2564 = vpop.f32.mrb[0].mxu0
      %v2565 = vadd.f32 0.0, %v2564
      %v2566 = vpop.f32.mrb[0].mxu0
      %2567 = vmatprep.mubr.bf16.mxu0 0
      %2568 = vmatmul.mubr.bf16.gmra.mrb[0].mxu0 %v742
      %v2569 = vpop.f32.mrb[0].mxu0
      %v2570 = vadd.f32 0.0, %v2569
      %v2571 = vpop.f32.mrb[0].mxu0
      %v2572 = vpop.f32.mrb[0].mxu0
      %v2573 = vadd.f32 0.0, %v2572
      %v2574 = vpop.f32.mrb[0].mxu0
      %2575 = vmatprep.mubr.bf16.mxu0 0
      %2576 = vmatmul.mubr.bf16.gmra.mrb[0].mxu0 %v745
      %v2577 = vpop.f32.mrb[0].mxu0
      %v2578 = vadd.f32 0.0, %v2577
      %v2579 = vpop.f32.mrb[0].mxu0
      %v2580 = vpop.f32.mrb[0].mxu0
      %v2581 = vadd.f32 0.0, %v2580
      %v2582 = vpop.f32.mrb[0].mxu0
      %2583 = vmatprep.mubr.bf16.mxu0 0
      %2584 = vmatmul.mubr.bf16.gmra.mrb[0].mxu0 %v748
      %v2585 = vpop.f32.mrb[0].mxu0
      %v2586 = vadd.f32 0.0, %v2585
      %v2587 = vpop.f32.mrb[0].mxu0
      %v2588 = vpop.f32.mrb[0].mxu0
      %v2589 = vadd.f32 0.0, %v2588
      %v2590 = vpop.f32.mrb[0].mxu0
      %2591 = vmatprep.mubr.bf16.mxu0 0
      %2592 = vmatmul.mubr.bf16.gmra.mrb[0].mxu0 %v2434
      %v2593 = vpop.f32.mrb[0].mxu0
      %v2594 = vadd.f32 0.0, %v2593
      %v2595 = vpop.f32.mrb[0].mxu0
      %v2596 = vpop.f32.mrb[0].mxu0
      %v2597 = vadd.f32 0.0, %v2596
      %v2598 = vpop.f32.mrb[0].mxu0
      %2599 = vdwg.mxu0
      %v2600 = vadd.f32 %v2366, %v2474
      %v2601 = vadd.f32 %v2367, %v2477
      %v2602 = vadd.f32 %v2368, %v2482
      %v2603 = vadd.f32 %v2369, %v2485
      %v2604 = vadd.f32 %v2370, %v2490
      %v2605 = vadd.f32 %v2371, %v2493
      %v2606 = vadd.f32 %v2372, %v2498
      %v2607 = vadd.f32 %v2373, %v2501
      %v2608 = vadd.f32 %v2374, %v2506
      %v2609 = vadd.f32 %v2375, %v2509
      %v2610 = vadd.f32 %v2376, %v2514
      %v2611 = vadd.f32 %v2377, %v2517
      %v2612 = vadd.f32 %v2378, %v2522
      %v2613 = vadd.f32 %v2379, %v2525
      %v2614 = vadd.f32 %v2380, %v2530
      %v2615 = vadd.f32 %v2381, %v2533
      %v2616 = vadd.f32 %v2382, %v2538
      %v2617 = vadd.f32 %v2383, %v2541
      %v2618 = vadd.f32 %v2384, %v2546
      %v2619 = vadd.f32 %v2385, %v2549
      %v2620 = vadd.f32 %v2386, %v2554
      %v2621 = vadd.f32 %v2387, %v2557
      %v2622 = vadd.f32 %v2388, %v2562
      %v2623 = vadd.f32 %v2389, %v2565
      %v2624 = vadd.f32 %v2390, %v2570
      %v2625 = vadd.f32 %v2391, %v2573
      %v2626 = vadd.f32 %v2392, %v2578
      %v2627 = vadd.f32 %v2393, %v2581
      %v2628 = vadd.f32 %v2394, %v2586
      %v2629 = vadd.f32 %v2395, %v2589
      %v2630 = vadd.f32 %v2396, %v2594
      %v2631 = vadd.f32 %v2397, %v2597
      %v2633 = vrot.slane %v247, 5
      %v2634 = vrot.slane %v2633, 4
      %v2635 = vrot.slane %v248, 5
      %v2636 = vsel %vm1230, %v2634, %v2635
      %v2637 = vrot.slane %v2635, 4
      %v2638 = vrot.slane %v249, 5
      %v2639 = vsel %vm1230, %v2637, %v2638
      %s2640 = scalar_lea.vmem %s1, 48
      %v2641 = vld [vmem:[%s2640] sm:$0xf]
      %v2642 = vld [vmem:[%s2640 + $0x4] sm:$0x3]
      %v2643 = vunpack.c.l.b16 %v2636
      %v2644 = vunpack.c.l.b16 %v2639
      %v2645 = vpack.c.b16 %v2644, %v2643
      %v2648 = vunpack.c.l.b16 %v2641
      %v2649 = vunpack.c.l.b16 %v2642
      %v2650 = vpack.c.b16 %v2649, %v2648
      %v2652 = vsel %vm701, %v2645, 0
      %v2655 = vsel %vm750, %v2650, 0
      %2657 = vmatprep.subr.bf16.mxu0 0
      %2658 = vmatpush1.bf16.msra.mxu0 %v2655
      %2659 = vmatprep.subr.bf16.mxu0 0
      %2660 = vmatpush1.bf16.msra.mxu0 0
      %2661 = vmatprep.subr.bf16.mxu0 0
      %2662 = vmatpush1.bf16.msra.mxu0 0
      %2663 = vmatprep.subr.bf16.mxu0 0
      %2664 = vmatpush1.bf16.msra.mxu0 0
      %2665 = vmatprep.subr.bf16.mxu0 0
      %2666 = vmatpush1.bf16.msra.mxu0 0
      %2667 = vmatprep.subr.bf16.mxu0 0
      %2668 = vmatpush1.bf16.msra.mxu0 0
      %2669 = vmatprep.subr.bf16.mxu0 0
      %2670 = vmatpush1.bf16.msra.mxu0 0
      %2671 = vmatprep.subr.bf16.mxu0 0
      %2672 = vmatpush1.bf16.msra.mxu0 0
      %2673 = vmatprep.subr.bf16.mxu0 0
      %2674 = vmatpush1.bf16.msra.mxu0 0
      %2675 = vmatprep.subr.bf16.mxu0 0
      %2676 = vmatpush1.bf16.msra.mxu0 0
      %2677 = vmatprep.subr.bf16.mxu0 0
      %2678 = vmatpush1.bf16.msra.mxu0 0
      %2679 = vmatprep.subr.bf16.mxu0 0
      %2680 = vmatpush1.bf16.msra.mxu0 0
      %2681 = vmatprep.subr.bf16.mxu0 0
      %2682 = vmatpush1.bf16.msra.mxu0 0
      %2683 = vmatprep.subr.bf16.mxu0 0
      %2684 = vmatpush1.bf16.msra.mxu0 0
      %2685 = vmatprep.subr.bf16.mxu0 0
      %2686 = vmatpush1.bf16.msra.mxu0 0
      %2687 = vmatprep.subr.bf16.mxu0 0
      %2688 = vmatpush1.bf16.msra.mxu0 0
      %2689 = vmatprep.mubr.bf16.mxu0 0
      %2690 = vmatmul.mubr.bf16.gmra.mrb[0].mxu0 %v1403
      %v2691 = vpop.f32.mrb[0].mxu0
      %v2692 = vadd.f32 0.0, %v2691
      %v2693 = vpop.f32.mrb[0].mxu0
      %v2694 = vpop.f32.mrb[0].mxu0
      %v2695 = vadd.f32 0.0, %v2694
      %v2696 = vpop.f32.mrb[0].mxu0
      %2697 = vmatprep.mubr.bf16.mxu0 0
      %2698 = vmatmul.mubr.bf16.gmra.mrb[0].mxu0 %v1406
      %v2699 = vpop.f32.mrb[0].mxu0
      %v2700 = vadd.f32 0.0, %v2699
      %v2701 = vpop.f32.mrb[0].mxu0
      %v2702 = vpop.f32.mrb[0].mxu0
      %v2703 = vadd.f32 0.0, %v2702
      %v2704 = vpop.f32.mrb[0].mxu0
      %2705 = vmatprep.mubr.bf16.mxu0 0
      %2706 = vmatmul.mubr.bf16.gmra.mrb[0].mxu0 %v1409
      %v2707 = vpop.f32.mrb[0].mxu0
      %v2708 = vadd.f32 0.0, %v2707
      %v2709 = vpop.f32.mrb[0].mxu0
      %v2710 = vpop.f32.mrb[0].mxu0
      %v2711 = vadd.f32 0.0, %v2710
      %v2712 = vpop.f32.mrb[0].mxu0
      %2713 = vmatprep.mubr.bf16.mxu0 0
      %2714 = vmatmul.mubr.bf16.gmra.mrb[0].mxu0 %v1412
      %v2715 = vpop.f32.mrb[0].mxu0
      %v2716 = vadd.f32 0.0, %v2715
      %v2717 = vpop.f32.mrb[0].mxu0
      %v2718 = vpop.f32.mrb[0].mxu0
      %v2719 = vadd.f32 0.0, %v2718
      %v2720 = vpop.f32.mrb[0].mxu0
      %2721 = vmatprep.mubr.bf16.mxu0 0
      %2722 = vmatmul.mubr.bf16.gmra.mrb[0].mxu0 %v1415
      %v2723 = vpop.f32.mrb[0].mxu0
      %v2724 = vadd.f32 0.0, %v2723
      %v2725 = vpop.f32.mrb[0].mxu0
      %v2726 = vpop.f32.mrb[0].mxu0
      %v2727 = vadd.f32 0.0, %v2726
      %v2728 = vpop.f32.mrb[0].mxu0
      %2729 = vmatprep.mubr.bf16.mxu0 0
      %2730 = vmatmul.mubr.bf16.gmra.mrb[0].mxu0 %v1418
      %v2731 = vpop.f32.mrb[0].mxu0
      %v2732 = vadd.f32 0.0, %v2731
      %v2733 = vpop.f32.mrb[0].mxu0
      %v2734 = vpop.f32.mrb[0].mxu0
      %v2735 = vadd.f32 0.0, %v2734
      %v2736 = vpop.f32.mrb[0].mxu0
      %2737 = vmatprep.mubr.bf16.mxu0 0
      %2738 = vmatmul.mubr.bf16.gmra.mrb[0].mxu0 %v1421
      %v2739 = vpop.f32.mrb[0].mxu0
      %v2740 = vadd.f32 0.0, %v2739
      %v2741 = vpop.f32.mrb[0].mxu0
      %v2742 = vpop.f32.mrb[0].mxu0
      %v2743 = vadd.f32 0.0, %v2742
      %v2744 = vpop.f32.mrb[0].mxu0
      %2745 = vmatprep.mubr.bf16.mxu0 0
      %2746 = vmatmul.mubr.bf16.gmra.mrb[0].mxu0 %v1424
      %v2747 = vpop.f32.mrb[0].mxu0
      %v2748 = vadd.f32 0.0, %v2747
      %v2749 = vpop.f32.mrb[0].mxu0
      %v2750 = vpop.f32.mrb[0].mxu0
      %v2751 = vadd.f32 0.0, %v2750
      %v2752 = vpop.f32.mrb[0].mxu0
      %2753 = vmatprep.mubr.bf16.mxu0 0
      %2754 = vmatmul.mubr.bf16.gmra.mrb[0].mxu0 %v1427
      %v2755 = vpop.f32.mrb[0].mxu0
      %v2756 = vadd.f32 0.0, %v2755
      %v2757 = vpop.f32.mrb[0].mxu0
      %v2758 = vpop.f32.mrb[0].mxu0
      %v2759 = vadd.f32 0.0, %v2758
      %v2760 = vpop.f32.mrb[0].mxu0
      %2761 = vmatprep.mubr.bf16.mxu0 0
      %2762 = vmatmul.mubr.bf16.gmra.mrb[0].mxu0 %v1430
      %v2763 = vpop.f32.mrb[0].mxu0
      %v2764 = vadd.f32 0.0, %v2763
      %v2765 = vpop.f32.mrb[0].mxu0
      %v2766 = vpop.f32.mrb[0].mxu0
      %v2767 = vadd.f32 0.0, %v2766
      %v2768 = vpop.f32.mrb[0].mxu0
      %2769 = vmatprep.mubr.bf16.mxu0 0
      %2770 = vmatmul.mubr.bf16.gmra.mrb[0].mxu0 %v1433
      %v2771 = vpop.f32.mrb[0].mxu0
      %v2772 = vadd.f32 0.0, %v2771
      %v2773 = vpop.f32.mrb[0].mxu0
      %v2774 = vpop.f32.mrb[0].mxu0
      %v2775 = vadd.f32 0.0, %v2774
      %v2776 = vpop.f32.mrb[0].mxu0
      %2777 = vmatprep.mubr.bf16.mxu0 0
      %2778 = vmatmul.mubr.bf16.gmra.mrb[0].mxu0 %v1436
      %v2779 = vpop.f32.mrb[0].mxu0
      %v2780 = vadd.f32 0.0, %v2779
      %v2781 = vpop.f32.mrb[0].mxu0
      %v2782 = vpop.f32.mrb[0].mxu0
      %v2783 = vadd.f32 0.0, %v2782
      %v2784 = vpop.f32.mrb[0].mxu0
      %2785 = vmatprep.mubr.bf16.mxu0 0
      %2786 = vmatmul.mubr.bf16.gmra.mrb[0].mxu0 %v1439
      %v2787 = vpop.f32.mrb[0].mxu0
      %v2788 = vadd.f32 0.0, %v2787
      %v2789 = vpop.f32.mrb[0].mxu0
      %v2790 = vpop.f32.mrb[0].mxu0
      %v2791 = vadd.f32 0.0, %v2790
      %v2792 = vpop.f32.mrb[0].mxu0
      %2793 = vmatprep.mubr.bf16.mxu0 0
      %2794 = vmatmul.mubr.bf16.gmra.mrb[0].mxu0 %v1442
      %v2795 = vpop.f32.mrb[0].mxu0
      %v2796 = vadd.f32 0.0, %v2795
      %v2797 = vpop.f32.mrb[0].mxu0
      %v2798 = vpop.f32.mrb[0].mxu0
      %v2799 = vadd.f32 0.0, %v2798
      %v2800 = vpop.f32.mrb[0].mxu0
      %2801 = vmatprep.mubr.bf16.mxu0 0
      %2802 = vmatmul.mubr.bf16.gmra.mrb[0].mxu0 %v1445
      %v2803 = vpop.f32.mrb[0].mxu0
      %v2804 = vadd.f32 0.0, %v2803
      %v2805 = vpop.f32.mrb[0].mxu0
      %v2806 = vpop.f32.mrb[0].mxu0
      %v2807 = vadd.f32 0.0, %v2806
      %v2808 = vpop.f32.mrb[0].mxu0
      %2809 = vmatprep.mubr.bf16.mxu0 0
      %2810 = vmatmul.mubr.bf16.gmra.mrb[0].mxu0 %v2652
      %v2811 = vpop.f32.mrb[0].mxu0
      %v2812 = vadd.f32 0.0, %v2811
      %v2813 = vpop.f32.mrb[0].mxu0
      %v2814 = vpop.f32.mrb[0].mxu0
      %v2815 = vadd.f32 0.0, %v2814
      %v2816 = vpop.f32.mrb[0].mxu0
      %2817 = vdwg.mxu0
      %v2818 = vadd.f32 %v2600, %v2692
      %v2819 = vadd.f32 %v2601, %v2695
      %v2820 = vadd.f32 %v2602, %v2700
      %v2821 = vadd.f32 %v2603, %v2703
      %v2822 = vadd.f32 %v2604, %v2708
      %v2823 = vadd.f32 %v2605, %v2711
      %v2824 = vadd.f32 %v2606, %v2716
      %v2825 = vadd.f32 %v2607, %v2719
      %v2826 = vadd.f32 %v2608, %v2724
      %v2827 = vadd.f32 %v2609, %v2727
      %v2828 = vadd.f32 %v2610, %v2732
      %v2829 = vadd.f32 %v2611, %v2735
      %v2830 = vadd.f32 %v2612, %v2740
      %v2831 = vadd.f32 %v2613, %v2743
      %v2832 = vadd.f32 %v2614, %v2748
      %v2833 = vadd.f32 %v2615, %v2751
      %v2834 = vadd.f32 %v2616, %v2756
      %v2835 = vadd.f32 %v2617, %v2759
      %v2836 = vadd.f32 %v2618, %v2764
      %v2837 = vadd.f32 %v2619, %v2767
      %v2838 = vadd.f32 %v2620, %v2772
      %v2839 = vadd.f32 %v2621, %v2775
      %v2840 = vadd.f32 %v2622, %v2780
      %v2841 = vadd.f32 %v2623, %v2783
      %v2842 = vadd.f32 %v2624, %v2788
      %v2843 = vadd.f32 %v2625, %v2791
      %v2844 = vadd.f32 %v2626, %v2796
      %v2845 = vadd.f32 %v2627, %v2799
      %v2846 = vadd.f32 %v2628, %v2804
      %v2847 = vadd.f32 %v2629, %v2807
      %v2848 = vadd.f32 %v2630, %v2812
      %v2849 = vadd.f32 %v2631, %v2815
      %v2850 = vrot.slane %v2399, 5
      %v2851 = vrot.slane %v2402, 6
      %v2852 = vor.u32 %v2850, %v2851
      %v2853 = vrot.slane %v2852, 4
      %v2854 = vrot.slane %v2412, 5
      %v2855 = vrot.slane %v2408, 6
      %v2856 = vor.u32 %v2854, %v2855
      %v2857 = vsel %vm1645, %v2853, %v2856
      %v2858 = vrot.slane %v2856, 4
      %v2859 = vshrl.u32 %v249, 16
      %v2861 = vrot.slane %v2859, 5
      %v2862 = vrot.slane %v2418, 6
      %v2863 = vor.u32 %v2861, %v2862
      %v2864 = vsel %vm1645, %v2858, %v2863
      %s2865 = scalar_lea.vmem %s1, 56
      %v2866 = vld [vmem:[%s2865] sm:$0xf]
      %v2867 = vld [vmem:[%s2865 + $0x4] sm:$0x3]
      %v2868 = vunpack.c.l.b16 %v2857
      %v2869 = vunpack.c.l.b16 %v2864
      %v2870 = vpack.c.b16 %v2869, %v2868
      %v2873 = vunpack.c.l.b16 %v2866
      %v2874 = vunpack.c.l.b16 %v2867
      %v2875 = vpack.c.b16 %v2874, %v2873
      %v2877 = vsel %vm701, %v2870, 0
      %v2880 = vsel %vm750, %v2875, 0
      %2882 = vmatprep.subr.bf16.mxu0 0
      %2883 = vmatpush1.bf16.msra.mxu0 %v2880
      %2884 = vmatprep.subr.bf16.mxu0 0
      %2885 = vmatpush1.bf16.msra.mxu0 0
      %2886 = vmatprep.subr.bf16.mxu0 0
      %2887 = vmatpush1.bf16.msra.mxu0 0
      %2888 = vmatprep.subr.bf16.mxu0 0
      %2889 = vmatpush1.bf16.msra.mxu0 0
      %2890 = vmatprep.subr.bf16.mxu0 0
      %2891 = vmatpush1.bf16.msra.mxu0 0
      %2892 = vmatprep.subr.bf16.mxu0 0
      %2893 = vmatpush1.bf16.msra.mxu0 0
      %2894 = vmatprep.subr.bf16.mxu0 0
      %2895 = vmatpush1.bf16.msra.mxu0 0
      %2896 = vmatprep.subr.bf16.mxu0 0
      %2897 = vmatpush1.bf16.msra.mxu0 0
      %2898 = vmatprep.subr.bf16.mxu0 0
      %2899 = vmatpush1.bf16.msra.mxu0 0
      %2900 = vmatprep.subr.bf16.mxu0 0
      %2901 = vmatpush1.bf16.msra.mxu0 0
      %2902 = vmatprep.subr.bf16.mxu0 0
      %2903 = vmatpush1.bf16.msra.mxu0 0
      %2904 = vmatprep.subr.bf16.mxu0 0
      %2905 = vmatpush1.bf16.msra.mxu0 0
      %2906 = vmatprep.subr.bf16.mxu0 0
      %2907 = vmatpush1.bf16.msra.mxu0 0
      %2908 = vmatprep.subr.bf16.mxu0 0
      %2909 = vmatpush1.bf16.msra.mxu0 0
      %2910 = vmatprep.subr.bf16.mxu0 0
      %2911 = vmatpush1.bf16.msra.mxu0 0
      %2912 = vmatprep.subr.bf16.mxu0 0
      %2913 = vmatpush1.bf16.msra.mxu0 0
      %2914 = vmatprep.mubr.bf16.mxu0 0
      %2915 = vmatmul.mubr.bf16.gmra.mrb[0].mxu0 %v1946
      %v2916 = vpop.f32.mrb[0].mxu0
      %v2917 = vadd.f32 0.0, %v2916
      %v2918 = vpop.f32.mrb[0].mxu0
      %v2919 = vpop.f32.mrb[0].mxu0
      %v2920 = vadd.f32 0.0, %v2919
      %v2921 = vpop.f32.mrb[0].mxu0
      %2922 = vmatprep.mubr.bf16.mxu0 0
      %2923 = vmatmul.mubr.bf16.gmra.mrb[0].mxu0 %v1949
      %v2924 = vpop.f32.mrb[0].mxu0
      %v2925 = vadd.f32 0.0, %v2924
      %v2926 = vpop.f32.mrb[0].mxu0
      %v2927 = vpop.f32.mrb[0].mxu0
      %v2928 = vadd.f32 0.0, %v2927
      %v2929 = vpop.f32.mrb[0].mxu0
      %2930 = vmatprep.mubr.bf16.mxu0 0
      %2931 = vmatmul.mubr.bf16.gmra.mrb[0].mxu0 %v1952
      %v2932 = vpop.f32.mrb[0].mxu0
      %v2933 = vadd.f32 0.0, %v2932
      %v2934 = vpop.f32.mrb[0].mxu0
      %v2935 = vpop.f32.mrb[0].mxu0
      %v2936 = vadd.f32 0.0, %v2935
      %v2937 = vpop.f32.mrb[0].mxu0
      %2938 = vmatprep.mubr.bf16.mxu0 0
      %2939 = vmatmul.mubr.bf16.gmra.mrb[0].mxu0 %v1955
      %v2940 = vpop.f32.mrb[0].mxu0
      %v2941 = vadd.f32 0.0, %v2940
      %v2942 = vpop.f32.mrb[0].mxu0
      %v2943 = vpop.f32.mrb[0].mxu0
      %v2944 = vadd.f32 0.0, %v2943
      %v2945 = vpop.f32.mrb[0].mxu0
      %2946 = vmatprep.mubr.bf16.mxu0 0
      %2947 = vmatmul.mubr.bf16.gmra.mrb[0].mxu0 %v1958
      %v2948 = vpop.f32.mrb[0].mxu0
      %v2949 = vadd.f32 0.0, %v2948
      %v2950 = vpop.f32.mrb[0].mxu0
      %v2951 = vpop.f32.mrb[0].mxu0
      %v2952 = vadd.f32 0.0, %v2951
      %v2953 = vpop.f32.mrb[0].mxu0
      %2954 = vmatprep.mubr.bf16.mxu0 0
      %2955 = vmatmul.mubr.bf16.gmra.mrb[0].mxu0 %v1961
      %v2956 = vpop.f32.mrb[0].mxu0
      %v2957 = vadd.f32 0.0, %v2956
      %v2958 = vpop.f32.mrb[0].mxu0
      %v2959 = vpop.f32.mrb[0].mxu0
      %v2960 = vadd.f32 0.0, %v2959
      %v2961 = vpop.f32.mrb[0].mxu0
      %2962 = vmatprep.mubr.bf16.mxu0 0
      %2963 = vmatmul.mubr.bf16.gmra.mrb[0].mxu0 %v1964
      %v2964 = vpop.f32.mrb[0].mxu0
      %v2965 = vadd.f32 0.0, %v2964
      %v2966 = vpop.f32.mrb[0].mxu0
      %v2967 = vpop.f32.mrb[0].mxu0
      %v2968 = vadd.f32 0.0, %v2967
      %v2969 = vpop.f32.mrb[0].mxu0
      %2970 = vmatprep.mubr.bf16.mxu0 0
      %2971 = vmatmul.mubr.bf16.gmra.mrb[0].mxu0 %v1967
      %v2972 = vpop.f32.mrb[0].mxu0
      %v2973 = vadd.f32 0.0, %v2972
      %v2974 = vpop.f32.mrb[0].mxu0
      %v2975 = vpop.f32.mrb[0].mxu0
      %v2976 = vadd.f32 0.0, %v2975
      %v2977 = vpop.f32.mrb[0].mxu0
      %2978 = vmatprep.mubr.bf16.mxu0 0
      %2979 = vmatmul.mubr.bf16.gmra.mrb[0].mxu0 %v1970
      %v2980 = vpop.f32.mrb[0].mxu0
      %v2981 = vadd.f32 0.0, %v2980
      %v2982 = vpop.f32.mrb[0].mxu0
      %v2983 = vpop.f32.mrb[0].mxu0
      %v2984 = vadd.f32 0.0, %v2983
      %v2985 = vpop.f32.mrb[0].mxu0
      %2986 = vmatprep.mubr.bf16.mxu0 0
      %2987 = vmatmul.mubr.bf16.gmra.mrb[0].mxu0 %v1973
      %v2988 = vpop.f32.mrb[0].mxu0
      %v2989 = vadd.f32 0.0, %v2988
      %v2990 = vpop.f32.mrb[0].mxu0
      %v2991 = vpop.f32.mrb[0].mxu0
      %v2992 = vadd.f32 0.0, %v2991
      %v2993 = vpop.f32.mrb[0].mxu0
      %2994 = vmatprep.mubr.bf16.mxu0 0
      %2995 = vmatmul.mubr.bf16.gmra.mrb[0].mxu0 %v1976
      %v2996 = vpop.f32.mrb[0].mxu0
      %v2997 = vadd.f32 0.0, %v2996
      %v2998 = vpop.f32.mrb[0].mxu0
      %v2999 = vpop.f32.mrb[0].mxu0
      %v3000 = vadd.f32 0.0, %v2999
      %v3001 = vpop.f32.mrb[0].mxu0
      %3002 = vmatprep.mubr.bf16.mxu0 0
      %3003 = vmatmul.mubr.bf16.gmra.mrb[0].mxu0 %v1979
      %v3004 = vpop.f32.mrb[0].mxu0
      %v3005 = vadd.f32 0.0, %v3004
      %v3006 = vpop.f32.mrb[0].mxu0
      %v3007 = vpop.f32.mrb[0].mxu0
      %v3008 = vadd.f32 0.0, %v3007
      %v3009 = vpop.f32.mrb[0].mxu0
      %3010 = vmatprep.mubr.bf16.mxu0 0
      %3011 = vmatmul.mubr.bf16.gmra.mrb[0].mxu0 %v1982
      %v3012 = vpop.f32.mrb[0].mxu0
      %v3013 = vadd.f32 0.0, %v3012
      %v3014 = vpop.f32.mrb[0].mxu0
      %v3015 = vpop.f32.mrb[0].mxu0
      %v3016 = vadd.f32 0.0, %v3015
      %v3017 = vpop.f32.mrb[0].mxu0
      %3018 = vmatprep.mubr.bf16.mxu0 0
      %3019 = vmatmul.mubr.bf16.gmra.mrb[0].mxu0 %v1985
      %v3020 = vpop.f32.mrb[0].mxu0
      %v3021 = vadd.f32 0.0, %v3020
      %v3022 = vpop.f32.mrb[0].mxu0
      %v3023 = vpop.f32.mrb[0].mxu0
      %v3024 = vadd.f32 0.0, %v3023
      %v3025 = vpop.f32.mrb[0].mxu0
      %3026 = vmatprep.mubr.bf16.mxu0 0
      %3027 = vmatmul.mubr.bf16.gmra.mrb[0].mxu0 %v1988
      %v3028 = vpop.f32.mrb[0].mxu0
      %v3029 = vadd.f32 0.0, %v3028
      %v3030 = vpop.f32.mrb[0].mxu0
      %v3031 = vpop.f32.mrb[0].mxu0
      %v3032 = vadd.f32 0.0, %v3031
      %v3033 = vpop.f32.mrb[0].mxu0
      %3034 = vmatprep.mubr.bf16.mxu0 0
      %3035 = vmatmul.mubr.bf16.gmra.mrb[0].mxu0 %v2877
      %v3036 = vpop.f32.mrb[0].mxu0
      %v3037 = vadd.f32 0.0, %v3036
      %v3038 = vpop.f32.mrb[0].mxu0
      %v3039 = vpop.f32.mrb[0].mxu0
      %v3040 = vadd.f32 0.0, %v3039
      %v3041 = vpop.f32.mrb[0].mxu0
      %3042 = vdwg.mxu0
      %v3043 = vadd.f32 %v2818, %v2917
      %v3044 = vadd.f32 %v2819, %v2920
      %v3045 = vadd.f32 %v2820, %v2925
      %v3046 = vadd.f32 %v2821, %v2928
      %v3047 = vadd.f32 %v2822, %v2933
      %v3048 = vadd.f32 %v2823, %v2936
      %v3049 = vadd.f32 %v2824, %v2941
      %v3050 = vadd.f32 %v2825, %v2944
      %v3051 = vadd.f32 %v2826, %v2949
      %v3052 = vadd.f32 %v2827, %v2952
      %v3053 = vadd.f32 %v2828, %v2957
      %v3054 = vadd.f32 %v2829, %v2960
      %v3055 = vadd.f32 %v2830, %v2965
      %v3056 = vadd.f32 %v2831, %v2968
      %v3057 = vadd.f32 %v2832, %v2973
      %v3058 = vadd.f32 %v2833, %v2976
      %v3059 = vadd.f32 %v2834, %v2981
      %v3060 = vadd.f32 %v2835, %v2984
      %v3061 = vadd.f32 %v2836, %v2989
      %v3062 = vadd.f32 %v2837, %v2992
      %v3063 = vadd.f32 %v2838, %v2997
      %v3064 = vadd.f32 %v2839, %v3000
      %v3065 = vadd.f32 %v2840, %v3005
      %v3066 = vadd.f32 %v2841, %v3008
      %v3067 = vadd.f32 %v2842, %v3013
      %v3068 = vadd.f32 %v2843, %v3016
      %v3069 = vadd.f32 %v2844, %v3021
      %v3070 = vadd.f32 %v2845, %v3024
      %v3071 = vadd.f32 %v2846, %v3029
      %v3072 = vadd.f32 %v2847, %v3032
      %v3073 = vadd.f32 %v2848, %v3037
      %v3074 = vadd.f32 %v2849, %v3040
      %s3075 = scalar_lea.vmem %s1, 64
      %v3076 = vld [vmem:[%s3075] sm:$0xf]
      %v3077 = vld [vmem:[%s3075 + $0x4] sm:$0x3]
      %v3080 = vunpack.c.l.b16 %v250
      %v3081 = vunpack.c.l.b16 %v251
      %v3082 = vpack.c.b16 %v3081, %v3080
      %v3085 = vunpack.c.l.b16 %v3076
      %v3086 = vunpack.c.l.b16 %v3077
      %v3087 = vpack.c.b16 %v3086, %v3085
      %v3089 = vsel %vm701, %v3082, 0
      %v3092 = vsel %vm750, %v3087, 0
      %3094 = vmatprep.subr.bf16.mxu0 0
      %3095 = vmatpush1.bf16.msra.mxu0 %v3092
      %3096 = vmatprep.subr.bf16.mxu0 0
      %3097 = vmatpush1.bf16.msra.mxu0 0
      %3098 = vmatprep.subr.bf16.mxu0 0
      %3099 = vmatpush1.bf16.msra.mxu0 0
      %3100 = vmatprep.subr.bf16.mxu0 0
      %3101 = vmatpush1.bf16.msra.mxu0 0
      %3102 = vmatprep.subr.bf16.mxu0 0
      %3103 = vmatpush1.bf16.msra.mxu0 0
      %3104 = vmatprep.subr.bf16.mxu0 0
      %3105 = vmatpush1.bf16.msra.mxu0 0
      %3106 = vmatprep.subr.bf16.mxu0 0
      %3107 = vmatpush1.bf16.msra.mxu0 0
      %3108 = vmatprep.subr.bf16.mxu0 0
      %3109 = vmatpush1.bf16.msra.mxu0 0
      %3110 = vmatprep.subr.bf16.mxu0 0
      %3111 = vmatpush1.bf16.msra.mxu0 0
      %3112 = vmatprep.subr.bf16.mxu0 0
      %3113 = vmatpush1.bf16.msra.mxu0 0
      %3114 = vmatprep.subr.bf16.mxu0 0
      %3115 = vmatpush1.bf16.msra.mxu0 0
      %3116 = vmatprep.subr.bf16.mxu0 0
      %3117 = vmatpush1.bf16.msra.mxu0 0
      %3118 = vmatprep.subr.bf16.mxu0 0
      %3119 = vmatpush1.bf16.msra.mxu0 0
      %3120 = vmatprep.subr.bf16.mxu0 0
      %3121 = vmatpush1.bf16.msra.mxu0 0
      %3122 = vmatprep.subr.bf16.mxu0 0
      %3123 = vmatpush1.bf16.msra.mxu0 0
      %3124 = vmatprep.subr.bf16.mxu0 0
      %3125 = vmatpush1.bf16.msra.mxu0 0
      %3126 = vmatprep.mubr.bf16.mxu0 0
      %3127 = vmatmul.mubr.bf16.gmra.mrb[0].mxu0 %v1007
      %v3128 = vpop.f32.mrb[0].mxu0
      %v3129 = vadd.f32 0.0, %v3128
      %v3130 = vpop.f32.mrb[0].mxu0
      %v3131 = vpop.f32.mrb[0].mxu0
      %v3132 = vadd.f32 0.0, %v3131
      %v3133 = vpop.f32.mrb[0].mxu0
      %3134 = vmatprep.mubr.bf16.mxu0 0
      %3135 = vmatmul.mubr.bf16.gmra.mrb[0].mxu0 %v1010
      %v3136 = vpop.f32.mrb[0].mxu0
      %v3137 = vadd.f32 0.0, %v3136
      %v3138 = vpop.f32.mrb[0].mxu0
      %v3139 = vpop.f32.mrb[0].mxu0
      %v3140 = vadd.f32 0.0, %v3139
      %v3141 = vpop.f32.mrb[0].mxu0
      %3142 = vmatprep.mubr.bf16.mxu0 0
      %3143 = vmatmul.mubr.bf16.gmra.mrb[0].mxu0 %v1013
      %v3144 = vpop.f32.mrb[0].mxu0
      %v3145 = vadd.f32 0.0, %v3144
      %v3146 = vpop.f32.mrb[0].mxu0
      %v3147 = vpop.f32.mrb[0].mxu0
      %v3148 = vadd.f32 0.0, %v3147
      %v3149 = vpop.f32.mrb[0].mxu0
      %3150 = vmatprep.mubr.bf16.mxu0 0
      %3151 = vmatmul.mubr.bf16.gmra.mrb[0].mxu0 %v1016
      %v3152 = vpop.f32.mrb[0].mxu0
      %v3153 = vadd.f32 0.0, %v3152
      %v3154 = vpop.f32.mrb[0].mxu0
      %v3155 = vpop.f32.mrb[0].mxu0
      %v3156 = vadd.f32 0.0, %v3155
      %v3157 = vpop.f32.mrb[0].mxu0
      %3158 = vmatprep.mubr.bf16.mxu0 0
      %3159 = vmatmul.mubr.bf16.gmra.mrb[0].mxu0 %v1019
      %v3160 = vpop.f32.mrb[0].mxu0
      %v3161 = vadd.f32 0.0, %v3160
      %v3162 = vpop.f32.mrb[0].mxu0
      %v3163 = vpop.f32.mrb[0].mxu0
      %v3164 = vadd.f32 0.0, %v3163
      %v3165 = vpop.f32.mrb[0].mxu0
      %3166 = vmatprep.mubr.bf16.mxu0 0
      %3167 = vmatmul.mubr.bf16.gmra.mrb[0].mxu0 %v1022
      %v3168 = vpop.f32.mrb[0].mxu0
      %v3169 = vadd.f32 0.0, %v3168
      %v3170 = vpop.f32.mrb[0].mxu0
      %v3171 = vpop.f32.mrb[0].mxu0
      %v3172 = vadd.f32 0.0, %v3171
      %v3173 = vpop.f32.mrb[0].mxu0
      %3174 = vmatprep.mubr.bf16.mxu0 0
      %3175 = vmatmul.mubr.bf16.gmra.mrb[0].mxu0 %v1025
      %v3176 = vpop.f32.mrb[0].mxu0
      %v3177 = vadd.f32 0.0, %v3176
      %v3178 = vpop.f32.mrb[0].mxu0
      %v3179 = vpop.f32.mrb[0].mxu0
      %v3180 = vadd.f32 0.0, %v3179
      %v3181 = vpop.f32.mrb[0].mxu0
      %3182 = vmatprep.mubr.bf16.mxu0 0
      %3183 = vmatmul.mubr.bf16.gmra.mrb[0].mxu0 %v1028
      %v3184 = vpop.f32.mrb[0].mxu0
      %v3185 = vadd.f32 0.0, %v3184
      %v3186 = vpop.f32.mrb[0].mxu0
      %v3187 = vpop.f32.mrb[0].mxu0
      %v3188 = vadd.f32 0.0, %v3187
      %v3189 = vpop.f32.mrb[0].mxu0
      %3190 = vmatprep.mubr.bf16.mxu0 0
      %3191 = vmatmul.mubr.bf16.gmra.mrb[0].mxu0 %v1031
      %v3192 = vpop.f32.mrb[0].mxu0
      %v3193 = vadd.f32 0.0, %v3192
      %v3194 = vpop.f32.mrb[0].mxu0
      %v3195 = vpop.f32.mrb[0].mxu0
      %v3196 = vadd.f32 0.0, %v3195
      %v3197 = vpop.f32.mrb[0].mxu0
      %3198 = vmatprep.mubr.bf16.mxu0 0
      %3199 = vmatmul.mubr.bf16.gmra.mrb[0].mxu0 %v1034
      %v3200 = vpop.f32.mrb[0].mxu0
      %v3201 = vadd.f32 0.0, %v3200
      %v3202 = vpop.f32.mrb[0].mxu0
      %v3203 = vpop.f32.mrb[0].mxu0
      %v3204 = vadd.f32 0.0, %v3203
      %v3205 = vpop.f32.mrb[0].mxu0
      %3206 = vmatprep.mubr.bf16.mxu0 0
      %3207 = vmatmul.mubr.bf16.gmra.mrb[0].mxu0 %v1037
      %v3208 = vpop.f32.mrb[0].mxu0
      %v3209 = vadd.f32 0.0, %v3208
      %v3210 = vpop.f32.mrb[0].mxu0
      %v3211 = vpop.f32.mrb[0].mxu0
      %v3212 = vadd.f32 0.0, %v3211
      %v3213 = vpop.f32.mrb[0].mxu0
      %3214 = vmatprep.mubr.bf16.mxu0 0
      %3215 = vmatmul.mubr.bf16.gmra.mrb[0].mxu0 %v1040
      %v3216 = vpop.f32.mrb[0].mxu0
      %v3217 = vadd.f32 0.0, %v3216
      %v3218 = vpop.f32.mrb[0].mxu0
      %v3219 = vpop.f32.mrb[0].mxu0
      %v3220 = vadd.f32 0.0, %v3219
      %v3221 = vpop.f32.mrb[0].mxu0
      %3222 = vmatprep.mubr.bf16.mxu0 0
      %3223 = vmatmul.mubr.bf16.gmra.mrb[0].mxu0 %v1043
      %v3224 = vpop.f32.mrb[0].mxu0
      %v3225 = vadd.f32 0.0, %v3224
      %v3226 = vpop.f32.mrb[0].mxu0
      %v3227 = vpop.f32.mrb[0].mxu0
      %v3228 = vadd.f32 0.0, %v3227
      %v3229 = vpop.f32.mrb[0].mxu0
      %3230 = vmatprep.mubr.bf16.mxu0 0
      %3231 = vmatmul.mubr.bf16.gmra.mrb[0].mxu0 %v1046
      %v3232 = vpop.f32.mrb[0].mxu0
      %v3233 = vadd.f32 0.0, %v3232
      %v3234 = vpop.f32.mrb[0].mxu0
      %v3235 = vpop.f32.mrb[0].mxu0
      %v3236 = vadd.f32 0.0, %v3235
      %v3237 = vpop.f32.mrb[0].mxu0
      %3238 = vmatprep.mubr.bf16.mxu0 0
      %3239 = vmatmul.mubr.bf16.gmra.mrb[0].mxu0 %v2200
      %v3240 = vpop.f32.mrb[0].mxu0
      %v3241 = vadd.f32 0.0, %v3240
      %v3242 = vpop.f32.mrb[0].mxu0
      %v3243 = vpop.f32.mrb[0].mxu0
      %v3244 = vadd.f32 0.0, %v3243
      %v3245 = vpop.f32.mrb[0].mxu0
      %3246 = vmatprep.mubr.bf16.mxu0 0
      %3247 = vmatmul.mubr.bf16.gmra.mrb[0].mxu0 %v3089
      %v3248 = vpop.f32.mrb[0].mxu0
      %v3249 = vadd.f32 0.0, %v3248
      %v3250 = vpop.f32.mrb[0].mxu0
      %v3251 = vpop.f32.mrb[0].mxu0
      %v3252 = vadd.f32 0.0, %v3251
      %v3253 = vpop.f32.mrb[0].mxu0
      %3254 = vdwg.mxu0
      %v3255 = vadd.f32 %v3043, %v3129
      %v3256 = vadd.f32 %v3044, %v3132
      %v3257 = vadd.f32 %v3045, %v3137
      %v3258 = vadd.f32 %v3046, %v3140
      %v3259 = vadd.f32 %v3047, %v3145
      %v3260 = vadd.f32 %v3048, %v3148
      %v3261 = vadd.f32 %v3049, %v3153
      %v3262 = vadd.f32 %v3050, %v3156
      %v3263 = vadd.f32 %v3051, %v3161
      %v3264 = vadd.f32 %v3052, %v3164
      %v3265 = vadd.f32 %v3053, %v3169
      %v3266 = vadd.f32 %v3054, %v3172
      %v3267 = vadd.f32 %v3055, %v3177
      %v3268 = vadd.f32 %v3056, %v3180
      %v3269 = vadd.f32 %v3057, %v3185
      %v3270 = vadd.f32 %v3058, %v3188
      %v3271 = vadd.f32 %v3059, %v3193
      %v3272 = vadd.f32 %v3060, %v3196
      %v3273 = vadd.f32 %v3061, %v3201
      %v3274 = vadd.f32 %v3062, %v3204
      %v3275 = vadd.f32 %v3063, %v3209
      %v3276 = vadd.f32 %v3064, %v3212
      %v3277 = vadd.f32 %v3065, %v3217
      %v3278 = vadd.f32 %v3066, %v3220
      %v3279 = vadd.f32 %v3067, %v3225
      %v3280 = vadd.f32 %v3068, %v3228
      %v3281 = vadd.f32 %v3069, %v3233
      %v3282 = vadd.f32 %v3070, %v3236
      %v3283 = vadd.f32 %v3071, %v3241
      %v3284 = vadd.f32 %v3072, %v3244
      %v3285 = vadd.f32 %v3073, %v3249
      %v3286 = vadd.f32 %v3074, %v3252
      %v3288 = vshrl.u32 %v250, 16
      %v3290 = vrot.slane %v3288, 4
      %v3291 = vshll.u32 %v250, 16
      %v3293 = vrot.slane %v3291, 5
      %v3294 = vor.u32 %v3290, %v3293
      %v3295 = vrot.slane %v3294, 4
      %v3297 = vshll.u32 %v251, 16
      %v3299 = vrot.slane %v3297, 5
      %v3300 = vsel %vm260, %v3295, %v3299
      %v3301 = vshrl.u32 %v251, 16
      %v3303 = vrot.slane %v3301, 4
      %v3304 = vor.u32 %v3303, %v3299
      %v3305 = vrot.slane %v3304, 4
      %v3307 = vshll.u32 %v252, 16
      %v3309 = vrot.slane %v3307, 5
      %v3310 = vsel %vm260, %v3305, %v3309
      %s3311 = scalar_lea.vmem %s1, 72
      %v3312 = vld [vmem:[%s3311] sm:$0xf]
      %v3313 = vld [vmem:[%s3311 + $0x4] sm:$0x3]
      %v3314 = vunpack.c.l.b16 %v3300
      %v3315 = vunpack.c.l.b16 %v3310
      %v3316 = vpack.c.b16 %v3315, %v3314
      %v3319 = vunpack.c.l.b16 %v3312
      %v3320 = vunpack.c.l.b16 %v3313
      %v3321 = vpack.c.b16 %v3320, %v3319
      %v3323 = vsel %vm701, %v3316, 0
      %v3326 = vsel %vm750, %v3321, 0
      %3328 = vmatprep.subr.bf16.mxu0 0
      %3329 = vmatpush1.bf16.msra.mxu0 %v3326
      %3330 = vmatprep.subr.bf16.mxu0 0
      %3331 = vmatpush1.bf16.msra.mxu0 0
      %3332 = vmatprep.subr.bf16.mxu0 0
      %3333 = vmatpush1.bf16.msra.mxu0 0
      %3334 = vmatprep.subr.bf16.mxu0 0
      %3335 = vmatpush1.bf16.msra.mxu0 0
      %3336 = vmatprep.subr.bf16.mxu0 0
      %3337 = vmatpush1.bf16.msra.mxu0 0
      %3338 = vmatprep.subr.bf16.mxu0 0
      %3339 = vmatpush1.bf16.msra.mxu0 0
      %3340 = vmatprep.subr.bf16.mxu0 0
      %3341 = vmatpush1.bf16.msra.mxu0 0
      %3342 = vmatprep.subr.bf16.mxu0 0
      %3343 = vmatpush1.bf16.msra.mxu0 0
      %3344 = vmatprep.subr.bf16.mxu0 0
      %3345 = vmatpush1.bf16.msra.mxu0 0
      %3346 = vmatprep.subr.bf16.mxu0 0
      %3347 = vmatpush1.bf16.msra.mxu0 0
      %3348 = vmatprep.subr.bf16.mxu0 0
      %3349 = vmatpush1.bf16.msra.mxu0 0
      %3350 = vmatprep.subr.bf16.mxu0 0
      %3351 = vmatpush1.bf16.msra.mxu0 0
      %3352 = vmatprep.subr.bf16.mxu0 0
      %3353 = vmatpush1.bf16.msra.mxu0 0
      %3354 = vmatprep.subr.bf16.mxu0 0
      %3355 = vmatpush1.bf16.msra.mxu0 0
      %3356 = vmatprep.subr.bf16.mxu0 0
      %3357 = vmatpush1.bf16.msra.mxu0 0
      %3358 = vmatprep.subr.bf16.mxu0 0
      %3359 = vmatpush1.bf16.msra.mxu0 0
      %3360 = vmatprep.mubr.bf16.mxu0 0
      %3361 = vmatmul.mubr.bf16.gmra.mrb[0].mxu0 %v709
      %v3362 = vpop.f32.mrb[0].mxu0
      %v3363 = vadd.f32 0.0, %v3362
      %v3364 = vpop.f32.mrb[0].mxu0
      %v3365 = vpop.f32.mrb[0].mxu0
      %v3366 = vadd.f32 0.0, %v3365
      %v3367 = vpop.f32.mrb[0].mxu0
      %3368 = vmatprep.mubr.bf16.mxu0 0
      %3369 = vmatmul.mubr.bf16.gmra.mrb[0].mxu0 %v712
      %v3370 = vpop.f32.mrb[0].mxu0
      %v3371 = vadd.f32 0.0, %v3370
      %v3372 = vpop.f32.mrb[0].mxu0
      %v3373 = vpop.f32.mrb[0].mxu0
      %v3374 = vadd.f32 0.0, %v3373
      %v3375 = vpop.f32.mrb[0].mxu0
      %3376 = vmatprep.mubr.bf16.mxu0 0
      %3377 = vmatmul.mubr.bf16.gmra.mrb[0].mxu0 %v715
      %v3378 = vpop.f32.mrb[0].mxu0
      %v3379 = vadd.f32 0.0, %v3378
      %v3380 = vpop.f32.mrb[0].mxu0
      %v3381 = vpop.f32.mrb[0].mxu0
      %v3382 = vadd.f32 0.0, %v3381
      %v3383 = vpop.f32.mrb[0].mxu0
      %3384 = vmatprep.mubr.bf16.mxu0 0
      %3385 = vmatmul.mubr.bf16.gmra.mrb[0].mxu0 %v718
      %v3386 = vpop.f32.mrb[0].mxu0
      %v3387 = vadd.f32 0.0, %v3386
      %v3388 = vpop.f32.mrb[0].mxu0
      %v3389 = vpop.f32.mrb[0].mxu0
      %v3390 = vadd.f32 0.0, %v3389
      %v3391 = vpop.f32.mrb[0].mxu0
      %3392 = vmatprep.mubr.bf16.mxu0 0
      %3393 = vmatmul.mubr.bf16.gmra.mrb[0].mxu0 %v721
      %v3394 = vpop.f32.mrb[0].mxu0
      %v3395 = vadd.f32 0.0, %v3394
      %v3396 = vpop.f32.mrb[0].mxu0
      %v3397 = vpop.f32.mrb[0].mxu0
      %v3398 = vadd.f32 0.0, %v3397
      %v3399 = vpop.f32.mrb[0].mxu0
      %3400 = vmatprep.mubr.bf16.mxu0 0
      %3401 = vmatmul.mubr.bf16.gmra.mrb[0].mxu0 %v724
      %v3402 = vpop.f32.mrb[0].mxu0
      %v3403 = vadd.f32 0.0, %v3402
      %v3404 = vpop.f32.mrb[0].mxu0
      %v3405 = vpop.f32.mrb[0].mxu0
      %v3406 = vadd.f32 0.0, %v3405
      %v3407 = vpop.f32.mrb[0].mxu0
      %3408 = vmatprep.mubr.bf16.mxu0 0
      %3409 = vmatmul.mubr.bf16.gmra.mrb[0].mxu0 %v727
      %v3410 = vpop.f32.mrb[0].mxu0
      %v3411 = vadd.f32 0.0, %v3410
      %v3412 = vpop.f32.mrb[0].mxu0
      %v3413 = vpop.f32.mrb[0].mxu0
      %v3414 = vadd.f32 0.0, %v3413
      %v3415 = vpop.f32.mrb[0].mxu0
      %3416 = vmatprep.mubr.bf16.mxu0 0
      %3417 = vmatmul.mubr.bf16.gmra.mrb[0].mxu0 %v730
      %v3418 = vpop.f32.mrb[0].mxu0
      %v3419 = vadd.f32 0.0, %v3418
      %v3420 = vpop.f32.mrb[0].mxu0
      %v3421 = vpop.f32.mrb[0].mxu0
      %v3422 = vadd.f32 0.0, %v3421
      %v3423 = vpop.f32.mrb[0].mxu0
      %3424 = vmatprep.mubr.bf16.mxu0 0
      %3425 = vmatmul.mubr.bf16.gmra.mrb[0].mxu0 %v733
      %v3426 = vpop.f32.mrb[0].mxu0
      %v3427 = vadd.f32 0.0, %v3426
      %v3428 = vpop.f32.mrb[0].mxu0
      %v3429 = vpop.f32.mrb[0].mxu0
      %v3430 = vadd.f32 0.0, %v3429
      %v3431 = vpop.f32.mrb[0].mxu0
      %3432 = vmatprep.mubr.bf16.mxu0 0
      %3433 = vmatmul.mubr.bf16.gmra.mrb[0].mxu0 %v736
      %v3434 = vpop.f32.mrb[0].mxu0
      %v3435 = vadd.f32 0.0, %v3434
      %v3436 = vpop.f32.mrb[0].mxu0
      %v3437 = vpop.f32.mrb[0].mxu0
      %v3438 = vadd.f32 0.0, %v3437
      %v3439 = vpop.f32.mrb[0].mxu0
      %3440 = vmatprep.mubr.bf16.mxu0 0
      %3441 = vmatmul.mubr.bf16.gmra.mrb[0].mxu0 %v739
      %v3442 = vpop.f32.mrb[0].mxu0
      %v3443 = vadd.f32 0.0, %v3442
      %v3444 = vpop.f32.mrb[0].mxu0
      %v3445 = vpop.f32.mrb[0].mxu0
      %v3446 = vadd.f32 0.0, %v3445
      %v3447 = vpop.f32.mrb[0].mxu0
      %3448 = vmatprep.mubr.bf16.mxu0 0
      %3449 = vmatmul.mubr.bf16.gmra.mrb[0].mxu0 %v742
      %v3450 = vpop.f32.mrb[0].mxu0
      %v3451 = vadd.f32 0.0, %v3450
      %v3452 = vpop.f32.mrb[0].mxu0
      %v3453 = vpop.f32.mrb[0].mxu0
      %v3454 = vadd.f32 0.0, %v3453
      %v3455 = vpop.f32.mrb[0].mxu0
      %3456 = vmatprep.mubr.bf16.mxu0 0
      %3457 = vmatmul.mubr.bf16.gmra.mrb[0].mxu0 %v745
      %v3458 = vpop.f32.mrb[0].mxu0
      %v3459 = vadd.f32 0.0, %v3458
      %v3460 = vpop.f32.mrb[0].mxu0
      %v3461 = vpop.f32.mrb[0].mxu0
      %v3462 = vadd.f32 0.0, %v3461
      %v3463 = vpop.f32.mrb[0].mxu0
      %3464 = vmatprep.mubr.bf16.mxu0 0
      %3465 = vmatmul.mubr.bf16.gmra.mrb[0].mxu0 %v748
      %v3466 = vpop.f32.mrb[0].mxu0
      %v3467 = vadd.f32 0.0, %v3466
      %v3468 = vpop.f32.mrb[0].mxu0
      %v3469 = vpop.f32.mrb[0].mxu0
      %v3470 = vadd.f32 0.0, %v3469
      %v3471 = vpop.f32.mrb[0].mxu0
      %3472 = vmatprep.mubr.bf16.mxu0 0
      %3473 = vmatmul.mubr.bf16.gmra.mrb[0].mxu0 %v2434
      %v3474 = vpop.f32.mrb[0].mxu0
      %v3475 = vadd.f32 0.0, %v3474
      %v3476 = vpop.f32.mrb[0].mxu0
      %v3477 = vpop.f32.mrb[0].mxu0
      %v3478 = vadd.f32 0.0, %v3477
      %v3479 = vpop.f32.mrb[0].mxu0
      %3480 = vmatprep.mubr.bf16.mxu0 0
      %3481 = vmatmul.mubr.bf16.gmra.mrb[0].mxu0 %v3323
      %v3482 = vpop.f32.mrb[0].mxu0
      %v3483 = vadd.f32 0.0, %v3482
      %v3484 = vpop.f32.mrb[0].mxu0
      %v3485 = vpop.f32.mrb[0].mxu0
      %v3486 = vadd.f32 0.0, %v3485
      %v3487 = vpop.f32.mrb[0].mxu0
      %3488 = vdwg.mxu0
      %v3489 = vadd.f32 %v3255, %v3363
      %v3490 = vadd.f32 %v3256, %v3366
      %v3491 = vadd.f32 %v3257, %v3371
      %v3492 = vadd.f32 %v3258, %v3374
      %v3493 = vadd.f32 %v3259, %v3379
      %v3494 = vadd.f32 %v3260, %v3382
      %v3495 = vadd.f32 %v3261, %v3387
      %v3496 = vadd.f32 %v3262, %v3390
      %v3497 = vadd.f32 %v3263, %v3395
      %v3498 = vadd.f32 %v3264, %v3398
      %v3499 = vadd.f32 %v3265, %v3403
      %v3500 = vadd.f32 %v3266, %v3406
      %v3501 = vadd.f32 %v3267, %v3411
      %v3502 = vadd.f32 %v3268, %v3414
      %v3503 = vadd.f32 %v3269, %v3419
      %v3504 = vadd.f32 %v3270, %v3422
      %v3505 = vadd.f32 %v3271, %v3427
      %v3506 = vadd.f32 %v3272, %v3430
      %v3507 = vadd.f32 %v3273, %v3435
      %v3508 = vadd.f32 %v3274, %v3438
      %v3509 = vadd.f32 %v3275, %v3443
      %v3510 = vadd.f32 %v3276, %v3446
      %v3511 = vadd.f32 %v3277, %v3451
      %v3512 = vadd.f32 %v3278, %v3454
      %v3513 = vadd.f32 %v3279, %v3459
      %v3514 = vadd.f32 %v3280, %v3462
      %v3515 = vadd.f32 %v3281, %v3467
      %v3516 = vadd.f32 %v3282, %v3470
      %v3517 = vadd.f32 %v3283, %v3475
      %v3518 = vadd.f32 %v3284, %v3478
      %v3519 = vadd.f32 %v3285, %v3483
      %v3520 = vadd.f32 %v3286, %v3486
      %v3522 = vrot.slane %v250, 5
      %v3523 = vrot.slane %v3522, 4
      %v3524 = vrot.slane %v251, 5
      %v3525 = vsel %vm1230, %v3523, %v3524
      %v3526 = vrot.slane %v3524, 4
      %v3527 = vrot.slane %v252, 5
      %v3528 = vsel %vm1230, %v3526, %v3527
      %s3529 = scalar_lea.vmem %s1, 80
      %v3530 = vld [vmem:[%s3529] sm:$0xf]
      %v3531 = vld [vmem:[%s3529 + $0x4] sm:$0x3]
      %v3532 = vunpack.c.l.b16 %v3525
      %v3533 = vunpack.c.l.b16 %v3528
      %v3534 = vpack.c.b16 %v3533, %v3532
      %v3537 = vunpack.c.l.b16 %v3530
      %v3538 = vunpack.c.l.b16 %v3531
      %v3539 = vpack.c.b16 %v3538, %v3537
      %v3541 = vsel %vm701, %v3534, 0
      %v3544 = vsel %vm750, %v3539, 0
      %3546 = vmatprep.subr.bf16.mxu0 0
      %3547 = vmatpush1.bf16.msra.mxu0 %v3544
      %3548 = vmatprep.subr.bf16.mxu0 0
      %3549 = vmatpush1.bf16.msra.mxu0 0
      %3550 = vmatprep.subr.bf16.mxu0 0
      %3551 = vmatpush1.bf16.msra.mxu0 0
      %3552 = vmatprep.subr.bf16.mxu0 0
      %3553 = vmatpush1.bf16.msra.mxu0 0
      %3554 = vmatprep.subr.bf16.mxu0 0
      %3555 = vmatpush1.bf16.msra.mxu0 0
      %3556 = vmatprep.subr.bf16.mxu0 0
      %3557 = vmatpush1.bf16.msra.mxu0 0
      %3558 = vmatprep.subr.bf16.mxu0 0
      %3559 = vmatpush1.bf16.msra.mxu0 0
      %3560 = vmatprep.subr.bf16.mxu0 0
      %3561 = vmatpush1.bf16.msra.mxu0 0
      %3562 = vmatprep.subr.bf16.mxu0 0
      %3563 = vmatpush1.bf16.msra.mxu0 0
      %3564 = vmatprep.subr.bf16.mxu0 0
      %3565 = vmatpush1.bf16.msra.mxu0 0
      %3566 = vmatprep.subr.bf16.mxu0 0
      %3567 = vmatpush1.bf16.msra.mxu0 0
      %3568 = vmatprep.subr.bf16.mxu0 0
      %3569 = vmatpush1.bf16.msra.mxu0 0
      %3570 = vmatprep.subr.bf16.mxu0 0
      %3571 = vmatpush1.bf16.msra.mxu0 0
      %3572 = vmatprep.subr.bf16.mxu0 0
      %3573 = vmatpush1.bf16.msra.mxu0 0
      %3574 = vmatprep.subr.bf16.mxu0 0
      %3575 = vmatpush1.bf16.msra.mxu0 0
      %3576 = vmatprep.subr.bf16.mxu0 0
      %3577 = vmatpush1.bf16.msra.mxu0 0
      %3578 = vmatprep.mubr.bf16.mxu0 0
      %3579 = vmatmul.mubr.bf16.gmra.mrb[0].mxu0 %v1406
      %v3580 = vpop.f32.mrb[0].mxu0
      %v3581 = vadd.f32 0.0, %v3580
      %v3582 = vpop.f32.mrb[0].mxu0
      %v3583 = vpop.f32.mrb[0].mxu0
      %v3584 = vadd.f32 0.0, %v3583
      %v3585 = vpop.f32.mrb[0].mxu0
      %3586 = vmatprep.mubr.bf16.mxu0 0
      %3587 = vmatmul.mubr.bf16.gmra.mrb[0].mxu0 %v1409
      %v3588 = vpop.f32.mrb[0].mxu0
      %v3589 = vadd.f32 0.0, %v3588
      %v3590 = vpop.f32.mrb[0].mxu0
      %v3591 = vpop.f32.mrb[0].mxu0
      %v3592 = vadd.f32 0.0, %v3591
      %v3593 = vpop.f32.mrb[0].mxu0
      %3594 = vmatprep.mubr.bf16.mxu0 0
      %3595 = vmatmul.mubr.bf16.gmra.mrb[0].mxu0 %v1412
      %v3596 = vpop.f32.mrb[0].mxu0
      %v3597 = vadd.f32 0.0, %v3596
      %v3598 = vpop.f32.mrb[0].mxu0
      %v3599 = vpop.f32.mrb[0].mxu0
      %v3600 = vadd.f32 0.0, %v3599
      %v3601 = vpop.f32.mrb[0].mxu0
      %3602 = vmatprep.mubr.bf16.mxu0 0
      %3603 = vmatmul.mubr.bf16.gmra.mrb[0].mxu0 %v1415
      %v3604 = vpop.f32.mrb[0].mxu0
      %v3605 = vadd.f32 0.0, %v3604
      %v3606 = vpop.f32.mrb[0].mxu0
      %v3607 = vpop.f32.mrb[0].mxu0
      %v3608 = vadd.f32 0.0, %v3607
      %v3609 = vpop.f32.mrb[0].mxu0
      %3610 = vmatprep.mubr.bf16.mxu0 0
      %3611 = vmatmul.mubr.bf16.gmra.mrb[0].mxu0 %v1418
      %v3612 = vpop.f32.mrb[0].mxu0
      %v3613 = vadd.f32 0.0, %v3612
      %v3614 = vpop.f32.mrb[0].mxu0
      %v3615 = vpop.f32.mrb[0].mxu0
      %v3616 = vadd.f32 0.0, %v3615
      %v3617 = vpop.f32.mrb[0].mxu0
      %3618 = vmatprep.mubr.bf16.mxu0 0
      %3619 = vmatmul.mubr.bf16.gmra.mrb[0].mxu0 %v1421
      %v3620 = vpop.f32.mrb[0].mxu0
      %v3621 = vadd.f32 0.0, %v3620
      %v3622 = vpop.f32.mrb[0].mxu0
      %v3623 = vpop.f32.mrb[0].mxu0
      %v3624 = vadd.f32 0.0, %v3623
      %v3625 = vpop.f32.mrb[0].mxu0
      %3626 = vmatprep.mubr.bf16.mxu0 0
      %3627 = vmatmul.mubr.bf16.gmra.mrb[0].mxu0 %v1424
      %v3628 = vpop.f32.mrb[0].mxu0
      %v3629 = vadd.f32 0.0, %v3628
      %v3630 = vpop.f32.mrb[0].mxu0
      %v3631 = vpop.f32.mrb[0].mxu0
      %v3632 = vadd.f32 0.0, %v3631
      %v3633 = vpop.f32.mrb[0].mxu0
      %3634 = vmatprep.mubr.bf16.mxu0 0
      %3635 = vmatmul.mubr.bf16.gmra.mrb[0].mxu0 %v1427
      %v3636 = vpop.f32.mrb[0].mxu0
      %v3637 = vadd.f32 0.0, %v3636
      %v3638 = vpop.f32.mrb[0].mxu0
      %v3639 = vpop.f32.mrb[0].mxu0
      %v3640 = vadd.f32 0.0, %v3639
      %v3641 = vpop.f32.mrb[0].mxu0
      %3642 = vmatprep.mubr.bf16.mxu0 0
      %3643 = vmatmul.mubr.bf16.gmra.mrb[0].mxu0 %v1430
      %v3644 = vpop.f32.mrb[0].mxu0
      %v3645 = vadd.f32 0.0, %v3644
      %v3646 = vpop.f32.mrb[0].mxu0
      %v3647 = vpop.f32.mrb[0].mxu0
      %v3648 = vadd.f32 0.0, %v3647
      %v3649 = vpop.f32.mrb[0].mxu0
      %3650 = vmatprep.mubr.bf16.mxu0 0
      %3651 = vmatmul.mubr.bf16.gmra.mrb[0].mxu0 %v1433
      %v3652 = vpop.f32.mrb[0].mxu0
      %v3653 = vadd.f32 0.0, %v3652
      %v3654 = vpop.f32.mrb[0].mxu0
      %v3655 = vpop.f32.mrb[0].mxu0
      %v3656 = vadd.f32 0.0, %v3655
      %v3657 = vpop.f32.mrb[0].mxu0
      %3658 = vmatprep.mubr.bf16.mxu0 0
      %3659 = vmatmul.mubr.bf16.gmra.mrb[0].mxu0 %v1436
      %v3660 = vpop.f32.mrb[0].mxu0
      %v3661 = vadd.f32 0.0, %v3660
      %v3662 = vpop.f32.mrb[0].mxu0
      %v3663 = vpop.f32.mrb[0].mxu0
      %v3664 = vadd.f32 0.0, %v3663
      %v3665 = vpop.f32.mrb[0].mxu0
      %3666 = vmatprep.mubr.bf16.mxu0 0
      %3667 = vmatmul.mubr.bf16.gmra.mrb[0].mxu0 %v1439
      %v3668 = vpop.f32.mrb[0].mxu0
      %v3669 = vadd.f32 0.0, %v3668
      %v3670 = vpop.f32.mrb[0].mxu0
      %v3671 = vpop.f32.mrb[0].mxu0
      %v3672 = vadd.f32 0.0, %v3671
      %v3673 = vpop.f32.mrb[0].mxu0
      %3674 = vmatprep.mubr.bf16.mxu0 0
      %3675 = vmatmul.mubr.bf16.gmra.mrb[0].mxu0 %v1442
      %v3676 = vpop.f32.mrb[0].mxu0
      %v3677 = vadd.f32 0.0, %v3676
      %v3678 = vpop.f32.mrb[0].mxu0
      %v3679 = vpop.f32.mrb[0].mxu0
      %v3680 = vadd.f32 0.0, %v3679
      %v3681 = vpop.f32.mrb[0].mxu0
      %3682 = vmatprep.mubr.bf16.mxu0 0
      %3683 = vmatmul.mubr.bf16.gmra.mrb[0].mxu0 %v1445
      %v3684 = vpop.f32.mrb[0].mxu0
      %v3685 = vadd.f32 0.0, %v3684
      %v3686 = vpop.f32.mrb[0].mxu0
      %v3687 = vpop.f32.mrb[0].mxu0
      %v3688 = vadd.f32 0.0, %v3687
      %v3689 = vpop.f32.mrb[0].mxu0
      %3690 = vmatprep.mubr.bf16.mxu0 0
      %3691 = vmatmul.mubr.bf16.gmra.mrb[0].mxu0 %v2652
      %v3692 = vpop.f32.mrb[0].mxu0
      %v3693 = vadd.f32 0.0, %v3692
      %v3694 = vpop.f32.mrb[0].mxu0
      %v3695 = vpop.f32.mrb[0].mxu0
      %v3696 = vadd.f32 0.0, %v3695
      %v3697 = vpop.f32.mrb[0].mxu0
      %3698 = vmatprep.mubr.bf16.mxu0 0
      %3699 = vmatmul.mubr.bf16.gmra.mrb[0].mxu0 %v3541
      %v3700 = vpop.f32.mrb[0].mxu0
      %v3701 = vadd.f32 0.0, %v3700
      %v3702 = vpop.f32.mrb[0].mxu0
      %v3703 = vpop.f32.mrb[0].mxu0
      %v3704 = vadd.f32 0.0, %v3703
      %v3705 = vpop.f32.mrb[0].mxu0
      %3706 = vdwg.mxu0
      %v3707 = vadd.f32 %v3489, %v3581
      %v3708 = vadd.f32 %v3490, %v3584
      %v3709 = vadd.f32 %v3491, %v3589
      %v3710 = vadd.f32 %v3492, %v3592
      %v3711 = vadd.f32 %v3493, %v3597
      %v3712 = vadd.f32 %v3494, %v3600
      %v3713 = vadd.f32 %v3495, %v3605
      %v3714 = vadd.f32 %v3496, %v3608
      %v3715 = vadd.f32 %v3497, %v3613
      %v3716 = vadd.f32 %v3498, %v3616
      %v3717 = vadd.f32 %v3499, %v3621
      %v3718 = vadd.f32 %v3500, %v3624
      %v3719 = vadd.f32 %v3501, %v3629
      %v3720 = vadd.f32 %v3502, %v3632
      %v3721 = vadd.f32 %v3503, %v3637
      %v3722 = vadd.f32 %v3504, %v3640
      %v3723 = vadd.f32 %v3505, %v3645
      %v3724 = vadd.f32 %v3506, %v3648
      %v3725 = vadd.f32 %v3507, %v3653
      %v3726 = vadd.f32 %v3508, %v3656
      %v3727 = vadd.f32 %v3509, %v3661
      %v3728 = vadd.f32 %v3510, %v3664
      %v3729 = vadd.f32 %v3511, %v3669
      %v3730 = vadd.f32 %v3512, %v3672
      %v3731 = vadd.f32 %v3513, %v3677
      %v3732 = vadd.f32 %v3514, %v3680
      %v3733 = vadd.f32 %v3515, %v3685
      %v3734 = vadd.f32 %v3516, %v3688
      %v3735 = vadd.f32 %v3517, %v3693
      %v3736 = vadd.f32 %v3518, %v3696
      %v3737 = vadd.f32 %v3519, %v3701
      %v3738 = vadd.f32 %v3520, %v3704
      %v3739 = vrot.slane %v3288, 5
      %v3740 = vrot.slane %v3291, 6
      %v3741 = vor.u32 %v3739, %v3740
      %v3742 = vrot.slane %v3741, 4
      %v3743 = vrot.slane %v3301, 5
      %v3744 = vrot.slane %v3297, 6
      %v3745 = vor.u32 %v3743, %v3744
      %v3746 = vsel %vm1645, %v3742, %v3745
      %v3747 = vrot.slane %v3745, 4
      %v3748 = vshrl.u32 %v252, 16
      %v3750 = vrot.slane %v3748, 5
      %v3751 = vrot.slane %v3307, 6
      %v3752 = vor.u32 %v3750, %v3751
      %v3753 = vsel %vm1645, %v3747, %v3752
      %s3754 = scalar_lea.vmem %s1, 88
      %v3755 = vld [vmem:[%s3754] sm:$0xf]
      %v3756 = vld [vmem:[%s3754 + $0x4] sm:$0x3]
      %v3757 = vunpack.c.l.b16 %v3746
      %v3758 = vunpack.c.l.b16 %v3753
      %v3759 = vpack.c.b16 %v3758, %v3757
      %v3762 = vunpack.c.l.b16 %v3755
      %v3763 = vunpack.c.l.b16 %v3756
      %v3764 = vpack.c.b16 %v3763, %v3762
      %v3766 = vsel %vm701, %v3759, 0
      %v3769 = vsel %vm750, %v3764, 0
      %3771 = vmatprep.subr.bf16.mxu0 0
      %3772 = vmatpush1.bf16.msra.mxu0 %v3769
      %3773 = vmatprep.subr.bf16.mxu0 0
      %3774 = vmatpush1.bf16.msra.mxu0 0
      %3775 = vmatprep.subr.bf16.mxu0 0
      %3776 = vmatpush1.bf16.msra.mxu0 0
      %3777 = vmatprep.subr.bf16.mxu0 0
      %3778 = vmatpush1.bf16.msra.mxu0 0
      %3779 = vmatprep.subr.bf16.mxu0 0
      %3780 = vmatpush1.bf16.msra.mxu0 0
      %3781 = vmatprep.subr.bf16.mxu0 0
      %3782 = vmatpush1.bf16.msra.mxu0 0
      %3783 = vmatprep.subr.bf16.mxu0 0
      %3784 = vmatpush1.bf16.msra.mxu0 0
      %3785 = vmatprep.subr.bf16.mxu0 0
      %3786 = vmatpush1.bf16.msra.mxu0 0
      %3787 = vmatprep.subr.bf16.mxu0 0
      %3788 = vmatpush1.bf16.msra.mxu0 0
      %3789 = vmatprep.subr.bf16.mxu0 0
      %3790 = vmatpush1.bf16.msra.mxu0 0
      %3791 = vmatprep.subr.bf16.mxu0 0
      %3792 = vmatpush1.bf16.msra.mxu0 0
      %3793 = vmatprep.subr.bf16.mxu0 0
      %3794 = vmatpush1.bf16.msra.mxu0 0
      %3795 = vmatprep.subr.bf16.mxu0 0
      %3796 = vmatpush1.bf16.msra.mxu0 0
      %3797 = vmatprep.subr.bf16.mxu0 0
      %3798 = vmatpush1.bf16.msra.mxu0 0
      %3799 = vmatprep.subr.bf16.mxu0 0
      %3800 = vmatpush1.bf16.msra.mxu0 0
      %3801 = vmatprep.subr.bf16.mxu0 0
      %3802 = vmatpush1.bf16.msra.mxu0 0
      %3803 = vmatprep.mubr.bf16.mxu0 0
      %3804 = vmatmul.mubr.bf16.gmra.mrb[0].mxu0 %v1949
      %v3805 = vpop.f32.mrb[0].mxu0
      %v3806 = vadd.f32 0.0, %v3805
      %v3807 = vpop.f32.mrb[0].mxu0
      %v3808 = vpop.f32.mrb[0].mxu0
      %v3809 = vadd.f32 0.0, %v3808
      %v3810 = vpop.f32.mrb[0].mxu0
      %3811 = vmatprep.mubr.bf16.mxu0 0
      %3812 = vmatmul.mubr.bf16.gmra.mrb[0].mxu0 %v1952
      %v3813 = vpop.f32.mrb[0].mxu0
      %v3814 = vadd.f32 0.0, %v3813
      %v3815 = vpop.f32.mrb[0].mxu0
      %v3816 = vpop.f32.mrb[0].mxu0
      %v3817 = vadd.f32 0.0, %v3816
      %v3818 = vpop.f32.mrb[0].mxu0
      %3819 = vmatprep.mubr.bf16.mxu0 0
      %3820 = vmatmul.mubr.bf16.gmra.mrb[0].mxu0 %v1955
      %v3821 = vpop.f32.mrb[0].mxu0
      %v3822 = vadd.f32 0.0, %v3821
      %v3823 = vpop.f32.mrb[0].mxu0
      %v3824 = vpop.f32.mrb[0].mxu0
      %v3825 = vadd.f32 0.0, %v3824
      %v3826 = vpop.f32.mrb[0].mxu0
      %3827 = vmatprep.mubr.bf16.mxu0 0
      %3828 = vmatmul.mubr.bf16.gmra.mrb[0].mxu0 %v1958
      %v3829 = vpop.f32.mrb[0].mxu0
      %v3830 = vadd.f32 0.0, %v3829
      %v3831 = vpop.f32.mrb[0].mxu0
      %v3832 = vpop.f32.mrb[0].mxu0
      %v3833 = vadd.f32 0.0, %v3832
      %v3834 = vpop.f32.mrb[0].mxu0
      %3835 = vmatprep.mubr.bf16.mxu0 0
      %3836 = vmatmul.mubr.bf16.gmra.mrb[0].mxu0 %v1961
      %v3837 = vpop.f32.mrb[0].mxu0
      %v3838 = vadd.f32 0.0, %v3837
      %v3839 = vpop.f32.mrb[0].mxu0
      %v3840 = vpop.f32.mrb[0].mxu0
      %v3841 = vadd.f32 0.0, %v3840
      %v3842 = vpop.f32.mrb[0].mxu0
      %3843 = vmatprep.mubr.bf16.mxu0 0
      %3844 = vmatmul.mubr.bf16.gmra.mrb[0].mxu0 %v1964
      %v3845 = vpop.f32.mrb[0].mxu0
      %v3846 = vadd.f32 0.0, %v3845
      %v3847 = vpop.f32.mrb[0].mxu0
      %v3848 = vpop.f32.mrb[0].mxu0
      %v3849 = vadd.f32 0.0, %v3848
      %v3850 = vpop.f32.mrb[0].mxu0
      %3851 = vmatprep.mubr.bf16.mxu0 0
      %3852 = vmatmul.mubr.bf16.gmra.mrb[0].mxu0 %v1967
      %v3853 = vpop.f32.mrb[0].mxu0
      %v3854 = vadd.f32 0.0, %v3853
      %v3855 = vpop.f32.mrb[0].mxu0
      %v3856 = vpop.f32.mrb[0].mxu0
      %v3857 = vadd.f32 0.0, %v3856
      %v3858 = vpop.f32.mrb[0].mxu0
      %3859 = vmatprep.mubr.bf16.mxu0 0
      %3860 = vmatmul.mubr.bf16.gmra.mrb[0].mxu0 %v1970
      %v3861 = vpop.f32.mrb[0].mxu0
      %v3862 = vadd.f32 0.0, %v3861
      %v3863 = vpop.f32.mrb[0].mxu0
      %v3864 = vpop.f32.mrb[0].mxu0
      %v3865 = vadd.f32 0.0, %v3864
      %v3866 = vpop.f32.mrb[0].mxu0
      %3867 = vmatprep.mubr.bf16.mxu0 0
      %3868 = vmatmul.mubr.bf16.gmra.mrb[0].mxu0 %v1973
      %v3869 = vpop.f32.mrb[0].mxu0
      %v3870 = vadd.f32 0.0, %v3869
      %v3871 = vpop.f32.mrb[0].mxu0
      %v3872 = vpop.f32.mrb[0].mxu0
      %v3873 = vadd.f32 0.0, %v3872
      %v3874 = vpop.f32.mrb[0].mxu0
      %3875 = vmatprep.mubr.bf16.mxu0 0
      %3876 = vmatmul.mubr.bf16.gmra.mrb[0].mxu0 %v1976
      %v3877 = vpop.f32.mrb[0].mxu0
      %v3878 = vadd.f32 0.0, %v3877
      %v3879 = vpop.f32.mrb[0].mxu0
      %v3880 = vpop.f32.mrb[0].mxu0
      %v3881 = vadd.f32 0.0, %v3880
      %v3882 = vpop.f32.mrb[0].mxu0
      %3883 = vmatprep.mubr.bf16.mxu0 0
      %3884 = vmatmul.mubr.bf16.gmra.mrb[0].mxu0 %v1979
      %v3885 = vpop.f32.mrb[0].mxu0
      %v3886 = vadd.f32 0.0, %v3885
      %v3887 = vpop.f32.mrb[0].mxu0
      %v3888 = vpop.f32.mrb[0].mxu0
      %v3889 = vadd.f32 0.0, %v3888
      %v3890 = vpop.f32.mrb[0].mxu0
      %3891 = vmatprep.mubr.bf16.mxu0 0
      %3892 = vmatmul.mubr.bf16.gmra.mrb[0].mxu0 %v1982
      %v3893 = vpop.f32.mrb[0].mxu0
      %v3894 = vadd.f32 0.0, %v3893
      %v3895 = vpop.f32.mrb[0].mxu0
      %v3896 = vpop.f32.mrb[0].mxu0
      %v3897 = vadd.f32 0.0, %v3896
      %v3898 = vpop.f32.mrb[0].mxu0
      %3899 = vmatprep.mubr.bf16.mxu0 0
      %3900 = vmatmul.mubr.bf16.gmra.mrb[0].mxu0 %v1985
      %v3901 = vpop.f32.mrb[0].mxu0
      %v3902 = vadd.f32 0.0, %v3901
      %v3903 = vpop.f32.mrb[0].mxu0
      %v3904 = vpop.f32.mrb[0].mxu0
      %v3905 = vadd.f32 0.0, %v3904
      %v3906 = vpop.f32.mrb[0].mxu0
      %3907 = vmatprep.mubr.bf16.mxu0 0
      %3908 = vmatmul.mubr.bf16.gmra.mrb[0].mxu0 %v1988
      %v3909 = vpop.f32.mrb[0].mxu0
      %v3910 = vadd.f32 0.0, %v3909
      %v3911 = vpop.f32.mrb[0].mxu0
      %v3912 = vpop.f32.mrb[0].mxu0
      %v3913 = vadd.f32 0.0, %v3912
      %v3914 = vpop.f32.mrb[0].mxu0
      %3915 = vmatprep.mubr.bf16.mxu0 0
      %3916 = vmatmul.mubr.bf16.gmra.mrb[0].mxu0 %v2877
      %v3917 = vpop.f32.mrb[0].mxu0
      %v3918 = vadd.f32 0.0, %v3917
      %v3919 = vpop.f32.mrb[0].mxu0
      %v3920 = vpop.f32.mrb[0].mxu0
      %v3921 = vadd.f32 0.0, %v3920
      %v3922 = vpop.f32.mrb[0].mxu0
      %3923 = vmatprep.mubr.bf16.mxu0 0
      %3924 = vmatmul.mubr.bf16.gmra.mrb[0].mxu0 %v3766
      %v3925 = vpop.f32.mrb[0].mxu0
      %v3926 = vadd.f32 0.0, %v3925
      %v3927 = vpop.f32.mrb[0].mxu0
      %v3928 = vpop.f32.mrb[0].mxu0
      %v3929 = vadd.f32 0.0, %v3928
      %v3930 = vpop.f32.mrb[0].mxu0
      %3931 = vdwg.mxu0
      %v3932 = vadd.f32 %v3707, %v3806
      %v3933 = vadd.f32 %v3708, %v3809
      %v3934 = vadd.f32 %v3709, %v3814
      %v3935 = vadd.f32 %v3710, %v3817
      %v3936 = vadd.f32 %v3711, %v3822
      %v3937 = vadd.f32 %v3712, %v3825
      %v3938 = vadd.f32 %v3713, %v3830
      %v3939 = vadd.f32 %v3714, %v3833
      %v3940 = vadd.f32 %v3715, %v3838
      %v3941 = vadd.f32 %v3716, %v3841
      %v3942 = vadd.f32 %v3717, %v3846
      %v3943 = vadd.f32 %v3718, %v3849
      %v3944 = vadd.f32 %v3719, %v3854
      %v3945 = vadd.f32 %v3720, %v3857
      %v3946 = vadd.f32 %v3721, %v3862
      %v3947 = vadd.f32 %v3722, %v3865
      %v3948 = vadd.f32 %v3723, %v3870
      %v3949 = vadd.f32 %v3724, %v3873
      %v3950 = vadd.f32 %v3725, %v3878
      %v3951 = vadd.f32 %v3726, %v3881
      %v3952 = vadd.f32 %v3727, %v3886
      %v3953 = vadd.f32 %v3728, %v3889
      %v3954 = vadd.f32 %v3729, %v3894
      %v3955 = vadd.f32 %v3730, %v3897
      %v3956 = vadd.f32 %v3731, %v3902
      %v3957 = vadd.f32 %v3732, %v3905
      %v3958 = vadd.f32 %v3733, %v3910
      %v3959 = vadd.f32 %v3734, %v3913
      %v3960 = vadd.f32 %v3735, %v3918
      %v3961 = vadd.f32 %v3736, %v3921
      %v3962 = vadd.f32 %v3737, %v3926
      %v3963 = vadd.f32 %v3738, %v3929
      %s3964 = scalar_lea.vmem %s1, 96
      %v3965 = vld [vmem:[%s3964] sm:$0xf]
      %v3966 = vld [vmem:[%s3964 + $0x4] sm:$0x3]
      %v3969 = vunpack.c.l.b16 %v253
      %v3970 = vunpack.c.l.b16 %v254
      %v3971 = vpack.c.b16 %v3970, %v3969
      %v3974 = vunpack.c.l.b16 %v3965
      %v3975 = vunpack.c.l.b16 %v3966
      %v3976 = vpack.c.b16 %v3975, %v3974
      %v3978 = vsel %vm701, %v3971, 0
      %v3981 = vsel %vm750, %v3976, 0
      %3983 = vmatprep.subr.bf16.mxu0 0
      %3984 = vmatpush1.bf16.msra.mxu0 %v3981
      %3985 = vmatprep.subr.bf16.mxu0 0
      %3986 = vmatpush1.bf16.msra.mxu0 0
      %3987 = vmatprep.subr.bf16.mxu0 0
      %3988 = vmatpush1.bf16.msra.mxu0 0
      %3989 = vmatprep.subr.bf16.mxu0 0
      %3990 = vmatpush1.bf16.msra.mxu0 0
      %3991 = vmatprep.subr.bf16.mxu0 0
      %3992 = vmatpush1.bf16.msra.mxu0 0
      %3993 = vmatprep.subr.bf16.mxu0 0
      %3994 = vmatpush1.bf16.msra.mxu0 0
      %3995 = vmatprep.subr.bf16.mxu0 0
      %3996 = vmatpush1.bf16.msra.mxu0 0
      %3997 = vmatprep.subr.bf16.mxu0 0
      %3998 = vmatpush1.bf16.msra.mxu0 0
      %3999 = vmatprep.subr.bf16.mxu0 0
      %4000 = vmatpush1.bf16.msra.mxu0 0
      %4001 = vmatprep.subr.bf16.mxu0 0
      %4002 = vmatpush1.bf16.msra.mxu0 0
      %4003 = vmatprep.subr.bf16.mxu0 0
      %4004 = vmatpush1.bf16.msra.mxu0 0
      %4005 = vmatprep.subr.bf16.mxu0 0
      %4006 = vmatpush1.bf16.msra.mxu0 0
      %4007 = vmatprep.subr.bf16.mxu0 0
      %4008 = vmatpush1.bf16.msra.mxu0 0
      %4009 = vmatprep.subr.bf16.mxu0 0
      %4010 = vmatpush1.bf16.msra.mxu0 0
      %4011 = vmatprep.subr.bf16.mxu0 0
      %4012 = vmatpush1.bf16.msra.mxu0 0
      %4013 = vmatprep.subr.bf16.mxu0 0
      %4014 = vmatpush1.bf16.msra.mxu0 0
      %4015 = vmatprep.mubr.bf16.mxu0 0
      %4016 = vmatmul.mubr.bf16.gmra.mrb[0].mxu0 %v1010
      %v4017 = vpop.f32.mrb[0].mxu0
      %v4018 = vadd.f32 0.0, %v4017
      %v4019 = vpop.f32.mrb[0].mxu0
      %v4020 = vpop.f32.mrb[0].mxu0
      %v4021 = vadd.f32 0.0, %v4020
      %v4022 = vpop.f32.mrb[0].mxu0
      %4023 = vmatprep.mubr.bf16.mxu0 0
      %4024 = vmatmul.mubr.bf16.gmra.mrb[0].mxu0 %v1013
      %v4025 = vpop.f32.mrb[0].mxu0
      %v4026 = vadd.f32 0.0, %v4025
      %v4027 = vpop.f32.mrb[0].mxu0
      %v4028 = vpop.f32.mrb[0].mxu0
      %v4029 = vadd.f32 0.0, %v4028
      %v4030 = vpop.f32.mrb[0].mxu0
      %4031 = vmatprep.mubr.bf16.mxu0 0
      %4032 = vmatmul.mubr.bf16.gmra.mrb[0].mxu0 %v1016
      %v4033 = vpop.f32.mrb[0].mxu0
      %v4034 = vadd.f32 0.0, %v4033
      %v4035 = vpop.f32.mrb[0].mxu0
      %v4036 = vpop.f32.mrb[0].mxu0
      %v4037 = vadd.f32 0.0, %v4036
      %v4038 = vpop.f32.mrb[0].mxu0
      %4039 = vmatprep.mubr.bf16.mxu0 0
      %4040 = vmatmul.mubr.bf16.gmra.mrb[0].mxu0 %v1019
      %v4041 = vpop.f32.mrb[0].mxu0
      %v4042 = vadd.f32 0.0, %v4041
      %v4043 = vpop.f32.mrb[0].mxu0
      %v4044 = vpop.f32.mrb[0].mxu0
      %v4045 = vadd.f32 0.0, %v4044
      %v4046 = vpop.f32.mrb[0].mxu0
      %4047 = vmatprep.mubr.bf16.mxu0 0
      %4048 = vmatmul.mubr.bf16.gmra.mrb[0].mxu0 %v1022
      %v4049 = vpop.f32.mrb[0].mxu0
      %v4050 = vadd.f32 0.0, %v4049
      %v4051 = vpop.f32.mrb[0].mxu0
      %v4052 = vpop.f32.mrb[0].mxu0
      %v4053 = vadd.f32 0.0, %v4052
      %v4054 = vpop.f32.mrb[0].mxu0
      %4055 = vmatprep.mubr.bf16.mxu0 0
      %4056 = vmatmul.mubr.bf16.gmra.mrb[0].mxu0 %v1025
      %v4057 = vpop.f32.mrb[0].mxu0
      %v4058 = vadd.f32 0.0, %v4057
      %v4059 = vpop.f32.mrb[0].mxu0
      %v4060 = vpop.f32.mrb[0].mxu0
      %v4061 = vadd.f32 0.0, %v4060
      %v4062 = vpop.f32.mrb[0].mxu0
      %4063 = vmatprep.mubr.bf16.mxu0 0
      %4064 = vmatmul.mubr.bf16.gmra.mrb[0].mxu0 %v1028
      %v4065 = vpop.f32.mrb[0].mxu0
      %v4066 = vadd.f32 0.0, %v4065
      %v4067 = vpop.f32.mrb[0].mxu0
      %v4068 = vpop.f32.mrb[0].mxu0
      %v4069 = vadd.f32 0.0, %v4068
      %v4070 = vpop.f32.mrb[0].mxu0
      %4071 = vmatprep.mubr.bf16.mxu0 0
      %4072 = vmatmul.mubr.bf16.gmra.mrb[0].mxu0 %v1031
      %v4073 = vpop.f32.mrb[0].mxu0
      %v4074 = vadd.f32 0.0, %v4073
      %v4075 = vpop.f32.mrb[0].mxu0
      %v4076 = vpop.f32.mrb[0].mxu0
      %v4077 = vadd.f32 0.0, %v4076
      %v4078 = vpop.f32.mrb[0].mxu0
      %4079 = vmatprep.mubr.bf16.mxu0 0
      %4080 = vmatmul.mubr.bf16.gmra.mrb[0].mxu0 %v1034
      %v4081 = vpop.f32.mrb[0].mxu0
      %v4082 = vadd.f32 0.0, %v4081
      %v4083 = vpop.f32.mrb[0].mxu0
      %v4084 = vpop.f32.mrb[0].mxu0
      %v4085 = vadd.f32 0.0, %v4084
      %v4086 = vpop.f32.mrb[0].mxu0
      %4087 = vmatprep.mubr.bf16.mxu0 0
      %4088 = vmatmul.mubr.bf16.gmra.mrb[0].mxu0 %v1037
      %v4089 = vpop.f32.mrb[0].mxu0
      %v4090 = vadd.f32 0.0, %v4089
      %v4091 = vpop.f32.mrb[0].mxu0
      %v4092 = vpop.f32.mrb[0].mxu0
      %v4093 = vadd.f32 0.0, %v4092
      %v4094 = vpop.f32.mrb[0].mxu0
      %4095 = vmatprep.mubr.bf16.mxu0 0
      %4096 = vmatmul.mubr.bf16.gmra.mrb[0].mxu0 %v1040
      %v4097 = vpop.f32.mrb[0].mxu0
      %v4098 = vadd.f32 0.0, %v4097
      %v4099 = vpop.f32.mrb[0].mxu0
      %v4100 = vpop.f32.mrb[0].mxu0
      %v4101 = vadd.f32 0.0, %v4100
      %v4102 = vpop.f32.mrb[0].mxu0
      %4103 = vmatprep.mubr.bf16.mxu0 0
      %4104 = vmatmul.mubr.bf16.gmra.mrb[0].mxu0 %v1043
      %v4105 = vpop.f32.mrb[0].mxu0
      %v4106 = vadd.f32 0.0, %v4105
      %v4107 = vpop.f32.mrb[0].mxu0
      %v4108 = vpop.f32.mrb[0].mxu0
      %v4109 = vadd.f32 0.0, %v4108
      %v4110 = vpop.f32.mrb[0].mxu0
      %4111 = vmatprep.mubr.bf16.mxu0 0
      %4112 = vmatmul.mubr.bf16.gmra.mrb[0].mxu0 %v1046
      %v4113 = vpop.f32.mrb[0].mxu0
      %v4114 = vadd.f32 0.0, %v4113
      %v4115 = vpop.f32.mrb[0].mxu0
      %v4116 = vpop.f32.mrb[0].mxu0
      %v4117 = vadd.f32 0.0, %v4116
      %v4118 = vpop.f32.mrb[0].mxu0
      %4119 = vmatprep.mubr.bf16.mxu0 0
      %4120 = vmatmul.mubr.bf16.gmra.mrb[0].mxu0 %v2200
      %v4121 = vpop.f32.mrb[0].mxu0
      %v4122 = vadd.f32 0.0, %v4121
      %v4123 = vpop.f32.mrb[0].mxu0
      %v4124 = vpop.f32.mrb[0].mxu0
      %v4125 = vadd.f32 0.0, %v4124
      %v4126 = vpop.f32.mrb[0].mxu0
      %4127 = vmatprep.mubr.bf16.mxu0 0
      %4128 = vmatmul.mubr.bf16.gmra.mrb[0].mxu0 %v3089
      %v4129 = vpop.f32.mrb[0].mxu0
      %v4130 = vadd.f32 0.0, %v4129
      %v4131 = vpop.f32.mrb[0].mxu0
      %v4132 = vpop.f32.mrb[0].mxu0
      %v4133 = vadd.f32 0.0, %v4132
      %v4134 = vpop.f32.mrb[0].mxu0
      %4135 = vmatprep.mubr.bf16.mxu0 0
      %4136 = vmatmul.mubr.bf16.gmra.mrb[0].mxu0 %v3978
      %v4137 = vpop.f32.mrb[0].mxu0
      %v4138 = vadd.f32 0.0, %v4137
      %v4139 = vpop.f32.mrb[0].mxu0
      %v4140 = vpop.f32.mrb[0].mxu0
      %v4141 = vadd.f32 0.0, %v4140
      %v4142 = vpop.f32.mrb[0].mxu0
      %4143 = vdwg.mxu0
      %v4144 = vadd.f32 %v3932, %v4018
      %v4145 = vadd.f32 %v3933, %v4021
      %v4146 = vadd.f32 %v3934, %v4026
      %v4147 = vadd.f32 %v3935, %v4029
      %v4148 = vadd.f32 %v3936, %v4034
      %v4149 = vadd.f32 %v3937, %v4037
      %v4150 = vadd.f32 %v3938, %v4042
      %v4151 = vadd.f32 %v3939, %v4045
      %v4152 = vadd.f32 %v3940, %v4050
      %v4153 = vadd.f32 %v3941, %v4053
      %v4154 = vadd.f32 %v3942, %v4058
      %v4155 = vadd.f32 %v3943, %v4061
      %v4156 = vadd.f32 %v3944, %v4066
      %v4157 = vadd.f32 %v3945, %v4069
      %v4158 = vadd.f32 %v3946, %v4074
      %v4159 = vadd.f32 %v3947, %v4077
      %v4160 = vadd.f32 %v3948, %v4082
      %v4161 = vadd.f32 %v3949, %v4085
      %v4162 = vadd.f32 %v3950, %v4090
      %v4163 = vadd.f32 %v3951, %v4093
      %v4164 = vadd.f32 %v3952, %v4098
      %v4165 = vadd.f32 %v3953, %v4101
      %v4166 = vadd.f32 %v3954, %v4106
      %v4167 = vadd.f32 %v3955, %v4109
      %v4168 = vadd.f32 %v3956, %v4114
      %v4169 = vadd.f32 %v3957, %v4117
      %v4170 = vadd.f32 %v3958, %v4122
      %v4171 = vadd.f32 %v3959, %v4125
      %v4172 = vadd.f32 %v3960, %v4130
      %v4173 = vadd.f32 %v3961, %v4133
      %v4174 = vadd.f32 %v3962, %v4138
      %v4175 = vadd.f32 %v3963, %v4141
      %v4177 = vshrl.u32 %v253, 16
      %v4179 = vrot.slane %v4177, 4
      %v4180 = vshll.u32 %v253, 16
      %v4182 = vrot.slane %v4180, 5
      %v4183 = vor.u32 %v4179, %v4182
      %v4184 = vrot.slane %v4183, 4
      %v4186 = vshll.u32 %v254, 16
      %v4188 = vrot.slane %v4186, 5
      %v4189 = vsel %vm260, %v4184, %v4188
      %v4190 = vshrl.u32 %v254, 16
      %v4192 = vrot.slane %v4190, 4
      %v4193 = vor.u32 %v4192, %v4188
      %v4194 = vrot.slane %v4193, 4
      %v4196 = vshll.u32 %v255, 16
      %v4198 = vrot.slane %v4196, 5
      %v4199 = vsel %vm260, %v4194, %v4198
      %s4200 = scalar_lea.vmem %s1, 104
      %v4201 = vld [vmem:[%s4200] sm:$0xf]
      %v4202 = vld [vmem:[%s4200 + $0x4] sm:$0x3]
      %v4203 = vunpack.c.l.b16 %v4189
      %v4204 = vunpack.c.l.b16 %v4199
      %v4205 = vpack.c.b16 %v4204, %v4203
      %v4208 = vunpack.c.l.b16 %v4201
      %v4209 = vunpack.c.l.b16 %v4202
      %v4210 = vpack.c.b16 %v4209, %v4208
      %v4212 = vsel %vm701, %v4205, 0
      %v4215 = vsel %vm750, %v4210, 0
      %4217 = vmatprep.subr.bf16.mxu0 0
      %4218 = vmatpush1.bf16.msra.mxu0 %v4215
      %4219 = vmatprep.subr.bf16.mxu0 0
      %4220 = vmatpush1.bf16.msra.mxu0 0
      %4221 = vmatprep.subr.bf16.mxu0 0
      %4222 = vmatpush1.bf16.msra.mxu0 0
      %4223 = vmatprep.subr.bf16.mxu0 0
      %4224 = vmatpush1.bf16.msra.mxu0 0
      %4225 = vmatprep.subr.bf16.mxu0 0
      %4226 = vmatpush1.bf16.msra.mxu0 0
      %4227 = vmatprep.subr.bf16.mxu0 0
      %4228 = vmatpush1.bf16.msra.mxu0 0
      %4229 = vmatprep.subr.bf16.mxu0 0
      %4230 = vmatpush1.bf16.msra.mxu0 0
      %4231 = vmatprep.subr.bf16.mxu0 0
      %4232 = vmatpush1.bf16.msra.mxu0 0
      %4233 = vmatprep.subr.bf16.mxu0 0
      %4234 = vmatpush1.bf16.msra.mxu0 0
      %4235 = vmatprep.subr.bf16.mxu0 0
      %4236 = vmatpush1.bf16.msra.mxu0 0
      %4237 = vmatprep.subr.bf16.mxu0 0
      %4238 = vmatpush1.bf16.msra.mxu0 0
      %4239 = vmatprep.subr.bf16.mxu0 0
      %4240 = vmatpush1.bf16.msra.mxu0 0
      %4241 = vmatprep.subr.bf16.mxu0 0
      %4242 = vmatpush1.bf16.msra.mxu0 0
      %4243 = vmatprep.subr.bf16.mxu0 0
      %4244 = vmatpush1.bf16.msra.mxu0 0
      %4245 = vmatprep.subr.bf16.mxu0 0
      %4246 = vmatpush1.bf16.msra.mxu0 0
      %4247 = vmatprep.subr.bf16.mxu0 0
      %4248 = vmatpush1.bf16.msra.mxu0 0
      %4249 = vmatprep.mubr.bf16.mxu0 0
      %4250 = vmatmul.mubr.bf16.gmra.mrb[0].mxu0 %v712
      %v4251 = vpop.f32.mrb[0].mxu0
      %v4252 = vadd.f32 0.0, %v4251
      %v4253 = vpop.f32.mrb[0].mxu0
      %v4254 = vpop.f32.mrb[0].mxu0
      %v4255 = vadd.f32 0.0, %v4254
      %v4256 = vpop.f32.mrb[0].mxu0
      %4257 = vmatprep.mubr.bf16.mxu0 0
      %4258 = vmatmul.mubr.bf16.gmra.mrb[0].mxu0 %v715
      %v4259 = vpop.f32.mrb[0].mxu0
      %v4260 = vadd.f32 0.0, %v4259
      %v4261 = vpop.f32.mrb[0].mxu0
      %v4262 = vpop.f32.mrb[0].mxu0
      %v4263 = vadd.f32 0.0, %v4262
      %v4264 = vpop.f32.mrb[0].mxu0
      %4265 = vmatprep.mubr.bf16.mxu0 0
      %4266 = vmatmul.mubr.bf16.gmra.mrb[0].mxu0 %v718
      %v4267 = vpop.f32.mrb[0].mxu0
      %v4268 = vadd.f32 0.0, %v4267
      %v4269 = vpop.f32.mrb[0].mxu0
      %v4270 = vpop.f32.mrb[0].mxu0
      %v4271 = vadd.f32 0.0, %v4270
      %v4272 = vpop.f32.mrb[0].mxu0
      %4273 = vmatprep.mubr.bf16.mxu0 0
      %4274 = vmatmul.mubr.bf16.gmra.mrb[0].mxu0 %v721
      %v4275 = vpop.f32.mrb[0].mxu0
      %v4276 = vadd.f32 0.0, %v4275
      %v4277 = vpop.f32.mrb[0].mxu0
      %v4278 = vpop.f32.mrb[0].mxu0
      %v4279 = vadd.f32 0.0, %v4278
      %v4280 = vpop.f32.mrb[0].mxu0
      %4281 = vmatprep.mubr.bf16.mxu0 0
      %4282 = vmatmul.mubr.bf16.gmra.mrb[0].mxu0 %v724
      %v4283 = vpop.f32.mrb[0].mxu0
      %v4284 = vadd.f32 0.0, %v4283
      %v4285 = vpop.f32.mrb[0].mxu0
      %v4286 = vpop.f32.mrb[0].mxu0
      %v4287 = vadd.f32 0.0, %v4286
      %v4288 = vpop.f32.mrb[0].mxu0
      %4289 = vmatprep.mubr.bf16.mxu0 0
      %4290 = vmatmul.mubr.bf16.gmra.mrb[0].mxu0 %v727
      %v4291 = vpop.f32.mrb[0].mxu0
      %v4292 = vadd.f32 0.0, %v4291
      %v4293 = vpop.f32.mrb[0].mxu0
      %v4294 = vpop.f32.mrb[0].mxu0
      %v4295 = vadd.f32 0.0, %v4294
      %v4296 = vpop.f32.mrb[0].mxu0
      %4297 = vmatprep.mubr.bf16.mxu0 0
      %4298 = vmatmul.mubr.bf16.gmra.mrb[0].mxu0 %v730
      %v4299 = vpop.f32.mrb[0].mxu0
      %v4300 = vadd.f32 0.0, %v4299
      %v4301 = vpop.f32.mrb[0].mxu0
      %v4302 = vpop.f32.mrb[0].mxu0
      %v4303 = vadd.f32 0.0, %v4302
      %v4304 = vpop.f32.mrb[0].mxu0
      %4305 = vmatprep.mubr.bf16.mxu0 0
      %4306 = vmatmul.mubr.bf16.gmra.mrb[0].mxu0 %v733
      %v4307 = vpop.f32.mrb[0].mxu0
      %v4308 = vadd.f32 0.0, %v4307
      %v4309 = vpop.f32.mrb[0].mxu0
      %v4310 = vpop.f32.mrb[0].mxu0
      %v4311 = vadd.f32 0.0, %v4310
      %v4312 = vpop.f32.mrb[0].mxu0
      %4313 = vmatprep.mubr.bf16.mxu0 0
      %4314 = vmatmul.mubr.bf16.gmra.mrb[0].mxu0 %v736
      %v4315 = vpop.f32.mrb[0].mxu0
      %v4316 = vadd.f32 0.0, %v4315
      %v4317 = vpop.f32.mrb[0].mxu0
      %v4318 = vpop.f32.mrb[0].mxu0
      %v4319 = vadd.f32 0.0, %v4318
      %v4320 = vpop.f32.mrb[0].mxu0
      %4321 = vmatprep.mubr.bf16.mxu0 0
      %4322 = vmatmul.mubr.bf16.gmra.mrb[0].mxu0 %v739
      %v4323 = vpop.f32.mrb[0].mxu0
      %v4324 = vadd.f32 0.0, %v4323
      %v4325 = vpop.f32.mrb[0].mxu0
      %v4326 = vpop.f32.mrb[0].mxu0
      %v4327 = vadd.f32 0.0, %v4326
      %v4328 = vpop.f32.mrb[0].mxu0
      %4329 = vmatprep.mubr.bf16.mxu0 0
      %4330 = vmatmul.mubr.bf16.gmra.mrb[0].mxu0 %v742
      %v4331 = vpop.f32.mrb[0].mxu0
      %v4332 = vadd.f32 0.0, %v4331
      %v4333 = vpop.f32.mrb[0].mxu0
      %v4334 = vpop.f32.mrb[0].mxu0
      %v4335 = vadd.f32 0.0, %v4334
      %v4336 = vpop.f32.mrb[0].mxu0
      %4337 = vmatprep.mubr.bf16.mxu0 0
      %4338 = vmatmul.mubr.bf16.gmra.mrb[0].mxu0 %v745
      %v4339 = vpop.f32.mrb[0].mxu0
      %v4340 = vadd.f32 0.0, %v4339
      %v4341 = vpop.f32.mrb[0].mxu0
      %v4342 = vpop.f32.mrb[0].mxu0
      %v4343 = vadd.f32 0.0, %v4342
      %v4344 = vpop.f32.mrb[0].mxu0
      %4345 = vmatprep.mubr.bf16.mxu0 0
      %4346 = vmatmul.mubr.bf16.gmra.mrb[0].mxu0 %v748
      %v4347 = vpop.f32.mrb[0].mxu0
      %v4348 = vadd.f32 0.0, %v4347
      %v4349 = vpop.f32.mrb[0].mxu0
      %v4350 = vpop.f32.mrb[0].mxu0
      %v4351 = vadd.f32 0.0, %v4350
      %v4352 = vpop.f32.mrb[0].mxu0
      %4353 = vmatprep.mubr.bf16.mxu0 0
      %4354 = vmatmul.mubr.bf16.gmra.mrb[0].mxu0 %v2434
      %v4355 = vpop.f32.mrb[0].mxu0
      %v4356 = vadd.f32 0.0, %v4355
      %v4357 = vpop.f32.mrb[0].mxu0
      %v4358 = vpop.f32.mrb[0].mxu0
      %v4359 = vadd.f32 0.0, %v4358
      %v4360 = vpop.f32.mrb[0].mxu0
      %4361 = vmatprep.mubr.bf16.mxu0 0
      %4362 = vmatmul.mubr.bf16.gmra.mrb[0].mxu0 %v3323
      %v4363 = vpop.f32.mrb[0].mxu0
      %v4364 = vadd.f32 0.0, %v4363
      %v4365 = vpop.f32.mrb[0].mxu0
      %v4366 = vpop.f32.mrb[0].mxu0
      %v4367 = vadd.f32 0.0, %v4366
      %v4368 = vpop.f32.mrb[0].mxu0
      %4369 = vmatprep.mubr.bf16.mxu0 0
      %4370 = vmatmul.mubr.bf16.gmra.mrb[0].mxu0 %v4212
      %v4371 = vpop.f32.mrb[0].mxu0
      %v4372 = vadd.f32 0.0, %v4371
      %v4373 = vpop.f32.mrb[0].mxu0
      %v4374 = vpop.f32.mrb[0].mxu0
      %v4375 = vadd.f32 0.0, %v4374
      %v4376 = vpop.f32.mrb[0].mxu0
      %4377 = vdwg.mxu0
      %v4378 = vadd.f32 %v4144, %v4252
      %v4379 = vadd.f32 %v4145, %v4255
      %v4380 = vadd.f32 %v4146, %v4260
      %v4381 = vadd.f32 %v4147, %v4263
      %v4382 = vadd.f32 %v4148, %v4268
      %v4383 = vadd.f32 %v4149, %v4271
      %v4384 = vadd.f32 %v4150, %v4276
      %v4385 = vadd.f32 %v4151, %v4279
      %v4386 = vadd.f32 %v4152, %v4284
      %v4387 = vadd.f32 %v4153, %v4287
      %v4388 = vadd.f32 %v4154, %v4292
      %v4389 = vadd.f32 %v4155, %v4295
      %v4390 = vadd.f32 %v4156, %v4300
      %v4391 = vadd.f32 %v4157, %v4303
      %v4392 = vadd.f32 %v4158, %v4308
      %v4393 = vadd.f32 %v4159, %v4311
      %v4394 = vadd.f32 %v4160, %v4316
      %v4395 = vadd.f32 %v4161, %v4319
      %v4396 = vadd.f32 %v4162, %v4324
      %v4397 = vadd.f32 %v4163, %v4327
      %v4398 = vadd.f32 %v4164, %v4332
      %v4399 = vadd.f32 %v4165, %v4335
      %v4400 = vadd.f32 %v4166, %v4340
      %v4401 = vadd.f32 %v4167, %v4343
      %v4402 = vadd.f32 %v4168, %v4348
      %v4403 = vadd.f32 %v4169, %v4351
      %v4404 = vadd.f32 %v4170, %v4356
      %v4405 = vadd.f32 %v4171, %v4359
      %v4406 = vadd.f32 %v4172, %v4364
      %v4407 = vadd.f32 %v4173, %v4367
      %v4408 = vadd.f32 %v4174, %v4372
      %v4409 = vadd.f32 %v4175, %v4375
      %v4411 = vrot.slane %v253, 5
      %v4412 = vrot.slane %v4411, 4
      %v4413 = vrot.slane %v254, 5
      %v4414 = vsel %vm1230, %v4412, %v4413
      %v4415 = vrot.slane %v4413, 4
      %v4416 = vrot.slane %v255, 5
      %v4417 = vsel %vm1230, %v4415, %v4416
      %s4418 = scalar_lea.vmem %s1, 112
      %v4419 = vld [vmem:[%s4418] sm:$0xf]
      %v4420 = vld [vmem:[%s4418 + $0x4] sm:$0x3]
      %v4421 = vunpack.c.l.b16 %v4414
      %v4422 = vunpack.c.l.b16 %v4417
      %v4423 = vpack.c.b16 %v4422, %v4421
      %v4426 = vunpack.c.l.b16 %v4419
      %v4427 = vunpack.c.l.b16 %v4420
      %v4428 = vpack.c.b16 %v4427, %v4426
      %v4430 = vsel %vm701, %v4423, 0
      %v4433 = vsel %vm750, %v4428, 0
      %4435 = vmatprep.subr.bf16.mxu0 0
      %4436 = vmatpush1.bf16.msra.mxu0 %v4433
      %4437 = vmatprep.subr.bf16.mxu0 0
      %4438 = vmatpush1.bf16.msra.mxu0 0
      %4439 = vmatprep.subr.bf16.mxu0 0
      %4440 = vmatpush1.bf16.msra.mxu0 0
      %4441 = vmatprep.subr.bf16.mxu0 0
      %4442 = vmatpush1.bf16.msra.mxu0 0
      %4443 = vmatprep.subr.bf16.mxu0 0
      %4444 = vmatpush1.bf16.msra.mxu0 0
      %4445 = vmatprep.subr.bf16.mxu0 0
      %4446 = vmatpush1.bf16.msra.mxu0 0
      %4447 = vmatprep.subr.bf16.mxu0 0
      %4448 = vmatpush1.bf16.msra.mxu0 0
      %4449 = vmatprep.subr.bf16.mxu0 0
      %4450 = vmatpush1.bf16.msra.mxu0 0
      %4451 = vmatprep.subr.bf16.mxu0 0
      %4452 = vmatpush1.bf16.msra.mxu0 0
      %4453 = vmatprep.subr.bf16.mxu0 0
      %4454 = vmatpush1.bf16.msra.mxu0 0
      %4455 = vmatprep.subr.bf16.mxu0 0
      %4456 = vmatpush1.bf16.msra.mxu0 0
      %4457 = vmatprep.subr.bf16.mxu0 0
      %4458 = vmatpush1.bf16.msra.mxu0 0
      %4459 = vmatprep.subr.bf16.mxu0 0
      %4460 = vmatpush1.bf16.msra.mxu0 0
      %4461 = vmatprep.subr.bf16.mxu0 0
      %4462 = vmatpush1.bf16.msra.mxu0 0
      %4463 = vmatprep.subr.bf16.mxu0 0
      %4464 = vmatpush1.bf16.msra.mxu0 0
      %4465 = vmatprep.subr.bf16.mxu0 0
      %4466 = vmatpush1.bf16.msra.mxu0 0
      %4467 = vmatprep.mubr.bf16.mxu0 0
      %4468 = vmatmul.mubr.bf16.gmra.mrb[0].mxu0 %v1409
      %v4469 = vpop.f32.mrb[0].mxu0
      %v4470 = vadd.f32 0.0, %v4469
      %v4471 = vpop.f32.mrb[0].mxu0
      %v4472 = vpop.f32.mrb[0].mxu0
      %v4473 = vadd.f32 0.0, %v4472
      %v4474 = vpop.f32.mrb[0].mxu0
      %4475 = vmatprep.mubr.bf16.mxu0 0
      %4476 = vmatmul.mubr.bf16.gmra.mrb[0].mxu0 %v1412
      %v4477 = vpop.f32.mrb[0].mxu0
      %v4478 = vadd.f32 0.0, %v4477
      %v4479 = vpop.f32.mrb[0].mxu0
      %v4480 = vpop.f32.mrb[0].mxu0
      %v4481 = vadd.f32 0.0, %v4480
      %v4482 = vpop.f32.mrb[0].mxu0
      %4483 = vmatprep.mubr.bf16.mxu0 0
      %4484 = vmatmul.mubr.bf16.gmra.mrb[0].mxu0 %v1415
      %v4485 = vpop.f32.mrb[0].mxu0
      %v4486 = vadd.f32 0.0, %v4485
      %v4487 = vpop.f32.mrb[0].mxu0
      %v4488 = vpop.f32.mrb[0].mxu0
      %v4489 = vadd.f32 0.0, %v4488
      %v4490 = vpop.f32.mrb[0].mxu0
      %4491 = vmatprep.mubr.bf16.mxu0 0
      %4492 = vmatmul.mubr.bf16.gmra.mrb[0].mxu0 %v1418
      %v4493 = vpop.f32.mrb[0].mxu0
      %v4494 = vadd.f32 0.0, %v4493
      %v4495 = vpop.f32.mrb[0].mxu0
      %v4496 = vpop.f32.mrb[0].mxu0
      %v4497 = vadd.f32 0.0, %v4496
      %v4498 = vpop.f32.mrb[0].mxu0
      %4499 = vmatprep.mubr.bf16.mxu0 0
      %4500 = vmatmul.mubr.bf16.gmra.mrb[0].mxu0 %v1421
      %v4501 = vpop.f32.mrb[0].mxu0
      %v4502 = vadd.f32 0.0, %v4501
      %v4503 = vpop.f32.mrb[0].mxu0
      %v4504 = vpop.f32.mrb[0].mxu0
      %v4505 = vadd.f32 0.0, %v4504
      %v4506 = vpop.f32.mrb[0].mxu0
      %4507 = vmatprep.mubr.bf16.mxu0 0
      %4508 = vmatmul.mubr.bf16.gmra.mrb[0].mxu0 %v1424
      %v4509 = vpop.f32.mrb[0].mxu0
      %v4510 = vadd.f32 0.0, %v4509
      %v4511 = vpop.f32.mrb[0].mxu0
      %v4512 = vpop.f32.mrb[0].mxu0
      %v4513 = vadd.f32 0.0, %v4512
      %v4514 = vpop.f32.mrb[0].mxu0
      %4515 = vmatprep.mubr.bf16.mxu0 0
      %4516 = vmatmul.mubr.bf16.gmra.mrb[0].mxu0 %v1427
      %v4517 = vpop.f32.mrb[0].mxu0
      %v4518 = vadd.f32 0.0, %v4517
      %v4519 = vpop.f32.mrb[0].mxu0
      %v4520 = vpop.f32.mrb[0].mxu0
      %v4521 = vadd.f32 0.0, %v4520
      %v4522 = vpop.f32.mrb[0].mxu0
      %4523 = vmatprep.mubr.bf16.mxu0 0
      %4524 = vmatmul.mubr.bf16.gmra.mrb[0].mxu0 %v1430
      %v4525 = vpop.f32.mrb[0].mxu0
      %v4526 = vadd.f32 0.0, %v4525
      %v4527 = vpop.f32.mrb[0].mxu0
      %v4528 = vpop.f32.mrb[0].mxu0
      %v4529 = vadd.f32 0.0, %v4528
      %v4530 = vpop.f32.mrb[0].mxu0
      %4531 = vmatprep.mubr.bf16.mxu0 0
      %4532 = vmatmul.mubr.bf16.gmra.mrb[0].mxu0 %v1433
      %v4533 = vpop.f32.mrb[0].mxu0
      %v4534 = vadd.f32 0.0, %v4533
      %v4535 = vpop.f32.mrb[0].mxu0
      %v4536 = vpop.f32.mrb[0].mxu0
      %v4537 = vadd.f32 0.0, %v4536
      %v4538 = vpop.f32.mrb[0].mxu0
      %4539 = vmatprep.mubr.bf16.mxu0 0
      %4540 = vmatmul.mubr.bf16.gmra.mrb[0].mxu0 %v1436
      %v4541 = vpop.f32.mrb[0].mxu0
      %v4542 = vadd.f32 0.0, %v4541
      %v4543 = vpop.f32.mrb[0].mxu0
      %v4544 = vpop.f32.mrb[0].mxu0
      %v4545 = vadd.f32 0.0, %v4544
      %v4546 = vpop.f32.mrb[0].mxu0
      %4547 = vmatprep.mubr.bf16.mxu0 0
      %4548 = vmatmul.mubr.bf16.gmra.mrb[0].mxu0 %v1439
      %v4549 = vpop.f32.mrb[0].mxu0
      %v4550 = vadd.f32 0.0, %v4549
      %v4551 = vpop.f32.mrb[0].mxu0
      %v4552 = vpop.f32.mrb[0].mxu0
      %v4553 = vadd.f32 0.0, %v4552
      %v4554 = vpop.f32.mrb[0].mxu0
      %4555 = vmatprep.mubr.bf16.mxu0 0
      %4556 = vmatmul.mubr.bf16.gmra.mrb[0].mxu0 %v1442
      %v4557 = vpop.f32.mrb[0].mxu0
      %v4558 = vadd.f32 0.0, %v4557
      %v4559 = vpop.f32.mrb[0].mxu0
      %v4560 = vpop.f32.mrb[0].mxu0
      %v4561 = vadd.f32 0.0, %v4560
      %v4562 = vpop.f32.mrb[0].mxu0
      %4563 = vmatprep.mubr.bf16.mxu0 0
      %4564 = vmatmul.mubr.bf16.gmra.mrb[0].mxu0 %v1445
      %v4565 = vpop.f32.mrb[0].mxu0
      %v4566 = vadd.f32 0.0, %v4565
      %v4567 = vpop.f32.mrb[0].mxu0
      %v4568 = vpop.f32.mrb[0].mxu0
      %v4569 = vadd.f32 0.0, %v4568
      %v4570 = vpop.f32.mrb[0].mxu0
      %4571 = vmatprep.mubr.bf16.mxu0 0
      %4572 = vmatmul.mubr.bf16.gmra.mrb[0].mxu0 %v2652
      %v4573 = vpop.f32.mrb[0].mxu0
      %v4574 = vadd.f32 0.0, %v4573
      %v4575 = vpop.f32.mrb[0].mxu0
      %v4576 = vpop.f32.mrb[0].mxu0
      %v4577 = vadd.f32 0.0, %v4576
      %v4578 = vpop.f32.mrb[0].mxu0
      %4579 = vmatprep.mubr.bf16.mxu0 0
      %4580 = vmatmul.mubr.bf16.gmra.mrb[0].mxu0 %v3541
      %v4581 = vpop.f32.mrb[0].mxu0
      %v4582 = vadd.f32 0.0, %v4581
      %v4583 = vpop.f32.mrb[0].mxu0
      %v4584 = vpop.f32.mrb[0].mxu0
      %v4585 = vadd.f32 0.0, %v4584
      %v4586 = vpop.f32.mrb[0].mxu0
      %4587 = vmatprep.mubr.bf16.mxu0 0
      %4588 = vmatmul.mubr.bf16.gmra.mrb[0].mxu0 %v4430
      %v4589 = vpop.f32.mrb[0].mxu0
      %v4590 = vadd.f32 0.0, %v4589
      %v4591 = vpop.f32.mrb[0].mxu0
      %v4592 = vpop.f32.mrb[0].mxu0
      %v4593 = vadd.f32 0.0, %v4592
      %v4594 = vpop.f32.mrb[0].mxu0
      %4595 = vdwg.mxu0
      %v4596 = vadd.f32 %v4378, %v4470
      %v4597 = vadd.f32 %v4379, %v4473
      %v4598 = vadd.f32 %v4380, %v4478
      %v4599 = vadd.f32 %v4381, %v4481
      %v4600 = vadd.f32 %v4382, %v4486
      %v4601 = vadd.f32 %v4383, %v4489
      %v4602 = vadd.f32 %v4384, %v4494
      %v4603 = vadd.f32 %v4385, %v4497
      %v4604 = vadd.f32 %v4386, %v4502
      %v4605 = vadd.f32 %v4387, %v4505
      %v4606 = vadd.f32 %v4388, %v4510
      %v4607 = vadd.f32 %v4389, %v4513
      %v4608 = vadd.f32 %v4390, %v4518
      %v4609 = vadd.f32 %v4391, %v4521
      %v4610 = vadd.f32 %v4392, %v4526
      %v4611 = vadd.f32 %v4393, %v4529
      %v4612 = vadd.f32 %v4394, %v4534
      %v4613 = vadd.f32 %v4395, %v4537
      %v4614 = vadd.f32 %v4396, %v4542
      %v4615 = vadd.f32 %v4397, %v4545
      %v4616 = vadd.f32 %v4398, %v4550
      %v4617 = vadd.f32 %v4399, %v4553
      %v4618 = vadd.f32 %v4400, %v4558
      %v4619 = vadd.f32 %v4401, %v4561
      %v4620 = vadd.f32 %v4402, %v4566
      %v4621 = vadd.f32 %v4403, %v4569
      %v4622 = vadd.f32 %v4404, %v4574
      %v4623 = vadd.f32 %v4405, %v4577
      %v4624 = vadd.f32 %v4406, %v4582
      %v4625 = vadd.f32 %v4407, %v4585
      %v4626 = vadd.f32 %v4408, %v4590
      %v4627 = vadd.f32 %v4409, %v4593
      %v4628 = vrot.slane %v4177, 5
      %v4629 = vrot.slane %v4180, 6
      %v4630 = vor.u32 %v4628, %v4629
      %v4631 = vrot.slane %v4630, 4
      %v4632 = vrot.slane %v4190, 5
      %v4633 = vrot.slane %v4186, 6
      %v4634 = vor.u32 %v4632, %v4633
      %v4635 = vsel %vm1645, %v4631, %v4634
      %v4636 = vrot.slane %v4634, 4
      %v4637 = vshrl.u32 %v255, 16
      %v4639 = vrot.slane %v4637, 5
      %v4640 = vrot.slane %v4196, 6
      %v4641 = vor.u32 %v4639, %v4640
      %v4642 = vsel %vm1645, %v4636, %v4641
      %s4643 = scalar_lea.vmem %s1, 120
      %v4644 = vld [vmem:[%s4643] sm:$0xf]
      %v4645 = vld [vmem:[%s4643 + $0x4] sm:$0x3]
      %v4646 = vunpack.c.l.b16 %v4635
      %v4647 = vunpack.c.l.b16 %v4642
      %v4648 = vpack.c.b16 %v4647, %v4646
      %v4651 = vunpack.c.l.b16 %v4644
      %v4652 = vunpack.c.l.b16 %v4645
      %v4653 = vpack.c.b16 %v4652, %v4651
      %v4655 = vsel %vm701, %v4648, 0
      %v4658 = vsel %vm750, %v4653, 0
      %4660 = vmatprep.subr.bf16.mxu0 0
      %4661 = vmatpush1.bf16.msra.mxu0 %v4658
      %4662 = vmatprep.subr.bf16.mxu0 0
      %4663 = vmatpush1.bf16.msra.mxu0 0
      %4664 = vmatprep.subr.bf16.mxu0 0
      %4665 = vmatpush1.bf16.msra.mxu0 0
      %4666 = vmatprep.subr.bf16.mxu0 0
      %4667 = vmatpush1.bf16.msra.mxu0 0
      %4668 = vmatprep.subr.bf16.mxu0 0
      %4669 = vmatpush1.bf16.msra.mxu0 0
      %4670 = vmatprep.subr.bf16.mxu0 0
      %4671 = vmatpush1.bf16.msra.mxu0 0
      %4672 = vmatprep.subr.bf16.mxu0 0
      %4673 = vmatpush1.bf16.msra.mxu0 0
      %4674 = vmatprep.subr.bf16.mxu0 0
      %4675 = vmatpush1.bf16.msra.mxu0 0
      %4676 = vmatprep.subr.bf16.mxu0 0
      %4677 = vmatpush1.bf16.msra.mxu0 0
      %4678 = vmatprep.subr.bf16.mxu0 0
      %4679 = vmatpush1.bf16.msra.mxu0 0
      %4680 = vmatprep.subr.bf16.mxu0 0
      %4681 = vmatpush1.bf16.msra.mxu0 0
      %4682 = vmatprep.subr.bf16.mxu0 0
      %4683 = vmatpush1.bf16.msra.mxu0 0
      %4684 = vmatprep.subr.bf16.mxu0 0
      %4685 = vmatpush1.bf16.msra.mxu0 0
      %4686 = vmatprep.subr.bf16.mxu0 0
      %4687 = vmatpush1.bf16.msra.mxu0 0
      %4688 = vmatprep.subr.bf16.mxu0 0
      %4689 = vmatpush1.bf16.msra.mxu0 0
      %4690 = vmatprep.subr.bf16.mxu0 0
      %4691 = vmatpush1.bf16.msra.mxu0 0
      %4692 = vmatprep.mubr.bf16.mxu0 0
      %4693 = vmatmul.mubr.bf16.gmra.mrb[0].mxu0 %v1952
      %v4694 = vpop.f32.mrb[0].mxu0
      %v4695 = vadd.f32 0.0, %v4694
      %v4696 = vpop.f32.mrb[0].mxu0
      %v4697 = vpop.f32.mrb[0].mxu0
      %v4698 = vadd.f32 0.0, %v4697
      %v4699 = vpop.f32.mrb[0].mxu0
      %4700 = vmatprep.mubr.bf16.mxu0 0
      %4701 = vmatmul.mubr.bf16.gmra.mrb[0].mxu0 %v1955
      %v4702 = vpop.f32.mrb[0].mxu0
      %v4703 = vadd.f32 0.0, %v4702
      %v4704 = vpop.f32.mrb[0].mxu0
      %v4705 = vpop.f32.mrb[0].mxu0
      %v4706 = vadd.f32 0.0, %v4705
      %v4707 = vpop.f32.mrb[0].mxu0
      %4708 = vmatprep.mubr.bf16.mxu0 0
      %4709 = vmatmul.mubr.bf16.gmra.mrb[0].mxu0 %v1958
      %v4710 = vpop.f32.mrb[0].mxu0
      %v4711 = vadd.f32 0.0, %v4710
      %v4712 = vpop.f32.mrb[0].mxu0
      %v4713 = vpop.f32.mrb[0].mxu0
      %v4714 = vadd.f32 0.0, %v4713
      %v4715 = vpop.f32.mrb[0].mxu0
      %4716 = vmatprep.mubr.bf16.mxu0 0
      %4717 = vmatmul.mubr.bf16.gmra.mrb[0].mxu0 %v1961
      %v4718 = vpop.f32.mrb[0].mxu0
      %v4719 = vadd.f32 0.0, %v4718
      %v4720 = vpop.f32.mrb[0].mxu0
      %v4721 = vpop.f32.mrb[0].mxu0
      %v4722 = vadd.f32 0.0, %v4721
      %v4723 = vpop.f32.mrb[0].mxu0
      %4724 = vmatprep.mubr.bf16.mxu0 0
      %4725 = vmatmul.mubr.bf16.gmra.mrb[0].mxu0 %v1964
      %v4726 = vpop.f32.mrb[0].mxu0
      %v4727 = vadd.f32 0.0, %v4726
      %v4728 = vpop.f32.mrb[0].mxu0
      %v4729 = vpop.f32.mrb[0].mxu0
      %v4730 = vadd.f32 0.0, %v4729
      %v4731 = vpop.f32.mrb[0].mxu0
      %4732 = vmatprep.mubr.bf16.mxu0 0
      %4733 = vmatmul.mubr.bf16.gmra.mrb[0].mxu0 %v1967
      %v4734 = vpop.f32.mrb[0].mxu0
      %v4735 = vadd.f32 0.0, %v4734
      %v4736 = vpop.f32.mrb[0].mxu0
      %v4737 = vpop.f32.mrb[0].mxu0
      %v4738 = vadd.f32 0.0, %v4737
      %v4739 = vpop.f32.mrb[0].mxu0
      %4740 = vmatprep.mubr.bf16.mxu0 0
      %4741 = vmatmul.mubr.bf16.gmra.mrb[0].mxu0 %v1970
      %v4742 = vpop.f32.mrb[0].mxu0
      %v4743 = vadd.f32 0.0, %v4742
      %v4744 = vpop.f32.mrb[0].mxu0
      %v4745 = vpop.f32.mrb[0].mxu0
      %v4746 = vadd.f32 0.0, %v4745
      %v4747 = vpop.f32.mrb[0].mxu0
      %4748 = vmatprep.mubr.bf16.mxu0 0
      %4749 = vmatmul.mubr.bf16.gmra.mrb[0].mxu0 %v1973
      %v4750 = vpop.f32.mrb[0].mxu0
      %v4751 = vadd.f32 0.0, %v4750
      %v4752 = vpop.f32.mrb[0].mxu0
      %v4753 = vpop.f32.mrb[0].mxu0
      %v4754 = vadd.f32 0.0, %v4753
      %v4755 = vpop.f32.mrb[0].mxu0
      %4756 = vmatprep.mubr.bf16.mxu0 0
      %4757 = vmatmul.mubr.bf16.gmra.mrb[0].mxu0 %v1976
      %v4758 = vpop.f32.mrb[0].mxu0
      %v4759 = vadd.f32 0.0, %v4758
      %v4760 = vpop.f32.mrb[0].mxu0
      %v4761 = vpop.f32.mrb[0].mxu0
      %v4762 = vadd.f32 0.0, %v4761
      %v4763 = vpop.f32.mrb[0].mxu0
      %4764 = vmatprep.mubr.bf16.mxu0 0
      %4765 = vmatmul.mubr.bf16.gmra.mrb[0].mxu0 %v1979
      %v4766 = vpop.f32.mrb[0].mxu0
      %v4767 = vadd.f32 0.0, %v4766
      %v4768 = vpop.f32.mrb[0].mxu0
      %v4769 = vpop.f32.mrb[0].mxu0
      %v4770 = vadd.f32 0.0, %v4769
      %v4771 = vpop.f32.mrb[0].mxu0
      %4772 = vmatprep.mubr.bf16.mxu0 0
      %4773 = vmatmul.mubr.bf16.gmra.mrb[0].mxu0 %v1982
      %v4774 = vpop.f32.mrb[0].mxu0
      %v4775 = vadd.f32 0.0, %v4774
      %v4776 = vpop.f32.mrb[0].mxu0
      %v4777 = vpop.f32.mrb[0].mxu0
      %v4778 = vadd.f32 0.0, %v4777
      %v4779 = vpop.f32.mrb[0].mxu0
      %4780 = vmatprep.mubr.bf16.mxu0 0
      %4781 = vmatmul.mubr.bf16.gmra.mrb[0].mxu0 %v1985
      %v4782 = vpop.f32.mrb[0].mxu0
      %v4783 = vadd.f32 0.0, %v4782
      %v4784 = vpop.f32.mrb[0].mxu0
      %v4785 = vpop.f32.mrb[0].mxu0
      %v4786 = vadd.f32 0.0, %v4785
      %v4787 = vpop.f32.mrb[0].mxu0
      %4788 = vmatprep.mubr.bf16.mxu0 0
      %4789 = vmatmul.mubr.bf16.gmra.mrb[0].mxu0 %v1988
      %v4790 = vpop.f32.mrb[0].mxu0
      %v4791 = vadd.f32 0.0, %v4790
      %v4792 = vpop.f32.mrb[0].mxu0
      %v4793 = vpop.f32.mrb[0].mxu0
      %v4794 = vadd.f32 0.0, %v4793
      %v4795 = vpop.f32.mrb[0].mxu0
      %4796 = vmatprep.mubr.bf16.mxu0 0
      %4797 = vmatmul.mubr.bf16.gmra.mrb[0].mxu0 %v2877
      %v4798 = vpop.f32.mrb[0].mxu0
      %v4799 = vadd.f32 0.0, %v4798
      %v4800 = vpop.f32.mrb[0].mxu0
      %v4801 = vpop.f32.mrb[0].mxu0
      %v4802 = vadd.f32 0.0, %v4801
      %v4803 = vpop.f32.mrb[0].mxu0
      %4804 = vmatprep.mubr.bf16.mxu0 0
      %4805 = vmatmul.mubr.bf16.gmra.mrb[0].mxu0 %v3766
      %v4806 = vpop.f32.mrb[0].mxu0
      %v4807 = vadd.f32 0.0, %v4806
      %v4808 = vpop.f32.mrb[0].mxu0
      %v4809 = vpop.f32.mrb[0].mxu0
      %v4810 = vadd.f32 0.0, %v4809
      %v4811 = vpop.f32.mrb[0].mxu0
      %4812 = vmatprep.mubr.bf16.mxu0 0
      %4813 = vmatmul.mubr.bf16.gmra.mrb[0].mxu0 %v4655
      %v4814 = vpop.f32.mrb[0].mxu0
      %v4815 = vadd.f32 0.0, %v4814
      %v4816 = vpop.f32.mrb[0].mxu0
      %v4817 = vpop.f32.mrb[0].mxu0
      %v4818 = vadd.f32 0.0, %v4817
      %v4819 = vpop.f32.mrb[0].mxu0
      %4820 = vdwg.mxu0
      %v4821 = vadd.f32 %v4596, %v4695
      %v4822 = vadd.f32 %v4597, %v4698
      %v4823 = vadd.f32 %v4598, %v4703
      %v4824 = vadd.f32 %v4599, %v4706
      %v4825 = vadd.f32 %v4600, %v4711
      %v4826 = vadd.f32 %v4601, %v4714
      %v4827 = vadd.f32 %v4602, %v4719
      %v4828 = vadd.f32 %v4603, %v4722
      %v4829 = vadd.f32 %v4604, %v4727
      %v4830 = vadd.f32 %v4605, %v4730
      %v4831 = vadd.f32 %v4606, %v4735
      %v4832 = vadd.f32 %v4607, %v4738
      %v4833 = vadd.f32 %v4608, %v4743
      %v4834 = vadd.f32 %v4609, %v4746
      %v4835 = vadd.f32 %v4610, %v4751
      %v4836 = vadd.f32 %v4611, %v4754
      %v4837 = vadd.f32 %v4612, %v4759
      %v4838 = vadd.f32 %v4613, %v4762
      %v4839 = vadd.f32 %v4614, %v4767
      %v4840 = vadd.f32 %v4615, %v4770
      %v4841 = vadd.f32 %v4616, %v4775
      %v4842 = vadd.f32 %v4617, %v4778
      %v4843 = vadd.f32 %v4618, %v4783
      %v4844 = vadd.f32 %v4619, %v4786
      %v4845 = vadd.f32 %v4620, %v4791
      %v4846 = vadd.f32 %v4621, %v4794
      %v4847 = vadd.f32 %v4622, %v4799
      %v4848 = vadd.f32 %v4623, %v4802
      %v4849 = vadd.f32 %v4624, %v4807
      %v4850 = vadd.f32 %v4625, %v4810
      %v4851 = vadd.f32 %v4626, %v4815
      %v4852 = vadd.f32 %v4627, %v4818
      %v4853 = vld [vmem:[%s2] sm:$0x1]
      %v4855 = vlaneseq
      %v4856 = vshrl.u32 %v4855, 7
      %v4857 = vsub.s32 0, %v4856
      %v4858 = vrot.slane %v4853, %v4857
      %v4860 = vmul.f32 %v4821, %v4858
      %v4861 = vmul.f32 %v4822, %v4858
      %v4862 = vmul.f32 %v4823, %v4858
      %v4863 = vmul.f32 %v4824, %v4858
      %v4864 = vmul.f32 %v4825, %v4858
      %v4865 = vmul.f32 %v4826, %v4858
      %v4866 = vmul.f32 %v4827, %v4858
      %v4867 = vmul.f32 %v4828, %v4858
      %v4868 = vmul.f32 %v4829, %v4858
      %v4869 = vmul.f32 %v4830, %v4858
      %v4870 = vmul.f32 %v4831, %v4858
      %v4871 = vmul.f32 %v4832, %v4858
      %v4872 = vmul.f32 %v4833, %v4858
      %v4873 = vmul.f32 %v4834, %v4858
      %v4874 = vmul.f32 %v4835, %v4858
      %v4875 = vmul.f32 %v4836, %v4858
      %v4876 = vmul.f32 %v4837, %v4858
      %v4877 = vmul.f32 %v4838, %v4858
      %v4878 = vmul.f32 %v4839, %v4858
      %v4879 = vmul.f32 %v4840, %v4858
      %v4880 = vmul.f32 %v4841, %v4858
      %v4881 = vmul.f32 %v4842, %v4858
      %v4882 = vmul.f32 %v4843, %v4858
      %v4883 = vmul.f32 %v4844, %v4858
      %v4884 = vmul.f32 %v4845, %v4858
      %v4885 = vmul.f32 %v4846, %v4858
      %v4886 = vmul.f32 %v4847, %v4858
      %v4887 = vmul.f32 %v4848, %v4858
      %v4888 = vmul.f32 %v4849, %v4858
      %v4889 = vmul.f32 %v4850, %v4858
      %v4890 = vmul.f32 %v4851, %v4858
      %v4891 = vmul.f32 %v4852, %v4858
      %v4892 = vld [vmem:[%s3] sm:$0x1]
      %v4894 = vlaneseq
      %v4895 = vshrl.u32 %v4894, 7
      %v4896 = vsub.s32 0, %v4895
      %v4897 = vrot.slane %v4892, %v4896
      %v4899 = vadd.f32 %v4860, %v4897
      %v4900 = vadd.f32 %v4861, %v4897
      %v4901 = vadd.f32 %v4862, %v4897
      %v4902 = vadd.f32 %v4863, %v4897
      %v4903 = vadd.f32 %v4864, %v4897
      %v4904 = vadd.f32 %v4865, %v4897
      %v4905 = vadd.f32 %v4866, %v4897
      %v4906 = vadd.f32 %v4867, %v4897
      %v4907 = vadd.f32 %v4868, %v4897
      %v4908 = vadd.f32 %v4869, %v4897
      %v4909 = vadd.f32 %v4870, %v4897
      %v4910 = vadd.f32 %v4871, %v4897
      %v4911 = vadd.f32 %v4872, %v4897
      %v4912 = vadd.f32 %v4873, %v4897
      %v4913 = vadd.f32 %v4874, %v4897
      %v4914 = vadd.f32 %v4875, %v4897
      %v4915 = vadd.f32 %v4876, %v4897
      %v4916 = vadd.f32 %v4877, %v4897
      %v4917 = vadd.f32 %v4878, %v4897
      %v4918 = vadd.f32 %v4879, %v4897
      %v4919 = vadd.f32 %v4880, %v4897
      %v4920 = vadd.f32 %v4881, %v4897
      %v4921 = vadd.f32 %v4882, %v4897
      %v4922 = vadd.f32 %v4883, %v4897
      %v4923 = vadd.f32 %v4884, %v4897
      %v4924 = vadd.f32 %v4885, %v4897
      %v4925 = vadd.f32 %v4886, %v4897
      %v4926 = vadd.f32 %v4887, %v4897
      %v4927 = vadd.f32 %v4888, %v4897
      %v4928 = vadd.f32 %v4889, %v4897
      %v4929 = vadd.f32 %v4890, %v4897
      %v4930 = vadd.f32 %v4891, %v4897
      %v4931 = vmax.f32 %v4899, 0.0
      %v4932 = vmax.f32 %v4900, 0.0
      %v4933 = vmax.f32 %v4901, 0.0
      %v4934 = vmax.f32 %v4902, 0.0
      %v4935 = vmax.f32 %v4903, 0.0
      %v4936 = vmax.f32 %v4904, 0.0
      %v4937 = vmax.f32 %v4905, 0.0
      %v4938 = vmax.f32 %v4906, 0.0
      %v4939 = vmax.f32 %v4907, 0.0
      %v4940 = vmax.f32 %v4908, 0.0
      %v4941 = vmax.f32 %v4909, 0.0
      %v4942 = vmax.f32 %v4910, 0.0
      %v4943 = vmax.f32 %v4911, 0.0
      %v4944 = vmax.f32 %v4912, 0.0
      %v4945 = vmax.f32 %v4913, 0.0
      %v4946 = vmax.f32 %v4914, 0.0
      %v4947 = vmax.f32 %v4915, 0.0
      %v4948 = vmax.f32 %v4916, 0.0
      %v4949 = vmax.f32 %v4917, 0.0
      %v4950 = vmax.f32 %v4918, 0.0
      %v4951 = vmax.f32 %v4919, 0.0
      %v4952 = vmax.f32 %v4920, 0.0
      %v4953 = vmax.f32 %v4921, 0.0
      %v4954 = vmax.f32 %v4922, 0.0
      %v4955 = vmax.f32 %v4923, 0.0
      %v4956 = vmax.f32 %v4924, 0.0
      %v4957 = vmax.f32 %v4925, 0.0
      %v4958 = vmax.f32 %v4926, 0.0
      %v4959 = vmax.f32 %v4927, 0.0
      %v4960 = vmax.f32 %v4928, 0.0
      %v4961 = vmax.f32 %v4929, 0.0
      %v4962 = vmax.f32 %v4930, 0.0
      %v4963 = vpack.c.bf16 %v4932, %v4931
      %v4964 = vpack.c.bf16 %v4934, %v4933
      %v4965 = vpack.c.bf16 %v4936, %v4935
      %v4966 = vpack.c.bf16 %v4938, %v4937
      %v4967 = vpack.c.bf16 %v4940, %v4939
      %v4968 = vpack.c.bf16 %v4942, %v4941
      %v4969 = vpack.c.bf16 %v4944, %v4943
      %v4970 = vpack.c.bf16 %v4946, %v4945
      %v4971 = vpack.c.bf16 %v4948, %v4947
      %v4972 = vpack.c.bf16 %v4950, %v4949
      %v4973 = vpack.c.bf16 %v4952, %v4951
      %v4974 = vpack.c.bf16 %v4954, %v4953
      %v4975 = vpack.c.bf16 %v4956, %v4955
      %v4976 = vpack.c.bf16 %v4958, %v4957
      %v4977 = vpack.c.bf16 %v4960, %v4959
      %v4978 = vpack.c.bf16 %v4962, %v4961
      %v4995 = vunpack.c.l.b16 %v4963
      %v4996 = vunpack.c.h.b16 %v4963
      %v4997 = vunpack.c.l.b16 %v4964
      %v4998 = vunpack.c.h.b16 %v4964
      %v4999 = vunpack.c.l.b16 %v4965
      %v5000 = vunpack.c.h.b16 %v4965
      %v5001 = vunpack.c.l.b16 %v4966
      %v5002 = vunpack.c.h.b16 %v4966
      %v5003 = vunpack.c.l.b16 %v4967
      %v5004 = vunpack.c.h.b16 %v4967
      %v5005 = vunpack.c.l.b16 %v4968
      %v5006 = vunpack.c.h.b16 %v4968
      %v5007 = vunpack.c.l.b16 %v4969
      %v5008 = vunpack.c.h.b16 %v4969
      %v5009 = vunpack.c.l.b16 %v4970
      %v5010 = vunpack.c.h.b16 %v4970
      %v5011 = vunpack.c.l.b16 %v4971
      %v5012 = vunpack.c.h.b16 %v4971
      %v5013 = vunpack.c.l.b16 %v4972
      %v5014 = vunpack.c.h.b16 %v4972
      %v5015 = vunpack.c.l.b16 %v4973
      %v5016 = vunpack.c.h.b16 %v4973
      %v5017 = vunpack.c.l.b16 %v4974
      %v5018 = vunpack.c.h.b16 %v4974
      %v5019 = vunpack.c.l.b16 %v4975
      %v5020 = vunpack.c.h.b16 %v4975
      %v5021 = vunpack.c.l.b16 %v4976
      %v5022 = vunpack.c.h.b16 %v4976
      %v5023 = vunpack.c.l.b16 %v4977
      %v5024 = vunpack.c.h.b16 %v4977
      %v5025 = vunpack.c.l.b16 %v4978
      %v5026 = vunpack.c.h.b16 %v4978
      %v5027 = vpack.c.b16 %v4995, %v4995
      %v5028 = vpack.c.b16 %v4996, %v4996
      %v5029 = vpack.c.b16 %v4997, %v4997
      %v5030 = vpack.c.b16 %v4998, %v4998
      %v5031 = vpack.c.b16 %v4999, %v4999
      %v5032 = vpack.c.b16 %v5000, %v5000
      %v5033 = vpack.c.b16 %v5001, %v5001
      %v5034 = vpack.c.b16 %v5002, %v5002
      %v5035 = vpack.c.b16 %v5003, %v5003
      %v5036 = vpack.c.b16 %v5004, %v5004
      %v5037 = vpack.c.b16 %v5005, %v5005
      %v5038 = vpack.c.b16 %v5006, %v5006
      %v5039 = vpack.c.b16 %v5007, %v5007
      %v5040 = vpack.c.b16 %v5008, %v5008
      %v5041 = vpack.c.b16 %v5009, %v5009
      %v5042 = vpack.c.b16 %v5010, %v5010
      %v5043 = vpack.c.b16 %v5011, %v5011
      %v5044 = vpack.c.b16 %v5012, %v5012
      %v5045 = vpack.c.b16 %v5013, %v5013
      %v5046 = vpack.c.b16 %v5014, %v5014
      %v5047 = vpack.c.b16 %v5015, %v5015
      %v5048 = vpack.c.b16 %v5016, %v5016
      %v5049 = vpack.c.b16 %v5017, %v5017
      %v5050 = vpack.c.b16 %v5018, %v5018
      %v5051 = vpack.c.b16 %v5019, %v5019
      %v5052 = vpack.c.b16 %v5020, %v5020
      %v5053 = vpack.c.b16 %v5021, %v5021
      %v5054 = vpack.c.b16 %v5022, %v5022
      %v5055 = vpack.c.b16 %v5023, %v5023
      %v5056 = vpack.c.b16 %v5024, %v5024
      %v5057 = vpack.c.b16 %v5025, %v5025
      %v5058 = vpack.c.b16 %v5026, %v5026
      %vm5091 = vcmask 519168
      %5092 = vst.msk [vmem:[%s197] sm:$0xf] %vm5091, %v5027
      %5093 = vst.msk [vmem:[%s197 + $0x4] sm:$0xf] %vm5091, %v5028
      %5094 = vst.msk [vmem:[%s197 + $0x8] sm:$0xf] %vm5091, %v5029
      %5095 = vst.msk [vmem:[%s197 + $0xc] sm:$0xf] %vm5091, %v5030
      %5096 = vst.msk [vmem:[%s197 + $0x10] sm:$0xf] %vm5091, %v5031
      %5097 = vst.msk [vmem:[%s197 + $0x14] sm:$0xf] %vm5091, %v5032
      %5098 = vst.msk [vmem:[%s197 + $0x18] sm:$0xf] %vm5091, %v5033
      %5099 = vst.msk [vmem:[%s197 + $0x1c] sm:$0xf] %vm5091, %v5034
      %5100 = vst.msk [vmem:[%s197 + $0x20] sm:$0xf] %vm5091, %v5035
      %5101 = vst.msk [vmem:[%s197 + $0x24] sm:$0xf] %vm5091, %v5036
      %5102 = vst.msk [vmem:[%s197 + $0x28] sm:$0xf] %vm5091, %v5037
      %5103 = vst.msk [vmem:[%s197 + $0x2c] sm:$0xf] %vm5091, %v5038
      %5104 = vst.msk [vmem:[%s197 + $0x30] sm:$0xf] %vm5091, %v5039
      %5105 = vst.msk [vmem:[%s197 + $0x34] sm:$0xf] %vm5091, %v5040
      %5106 = vst.msk [vmem:[%s197 + $0x38] sm:$0xf] %vm5091, %v5041
      %5107 = vst.msk [vmem:[%s197 + $0x3c] sm:$0xf] %vm5091, %v5042
      %5108 = vst.msk [vmem:[%s197 + $0x40] sm:$0xf] %vm5091, %v5043
      %5109 = vst.msk [vmem:[%s197 + $0x44] sm:$0xf] %vm5091, %v5044
      %5110 = vst.msk [vmem:[%s197 + $0x48] sm:$0xf] %vm5091, %v5045
      %5111 = vst.msk [vmem:[%s197 + $0x4c] sm:$0xf] %vm5091, %v5046
      %5112 = vst.msk [vmem:[%s197 + $0x50] sm:$0xf] %vm5091, %v5047
      %5113 = vst.msk [vmem:[%s197 + $0x54] sm:$0xf] %vm5091, %v5048
      %5114 = vst.msk [vmem:[%s197 + $0x58] sm:$0xf] %vm5091, %v5049
      %5115 = vst.msk [vmem:[%s197 + $0x5c] sm:$0xf] %vm5091, %v5050
      %5116 = vst.msk [vmem:[%s197 + $0x60] sm:$0xf] %vm5091, %v5051
      %5117 = vst.msk [vmem:[%s197 + $0x64] sm:$0xf] %vm5091, %v5052
      %5118 = vst.msk [vmem:[%s197 + $0x68] sm:$0xf] %vm5091, %v5053
      %5119 = vst.msk [vmem:[%s197 + $0x6c] sm:$0xf] %vm5091, %v5054
      %5120 = vst.msk [vmem:[%s197 + $0x70] sm:$0xf] %vm5091, %v5055
      %5121 = vst.msk [vmem:[%s197 + $0x74] sm:$0xf] %vm5091, %v5056
      %5122 = vst.msk [vmem:[%s197 + $0x78] sm:$0xf] %vm5091, %v5057
      %5123 = vst.msk [vmem:[%s197 + $0x7c] sm:$0xf] %vm5091, %v5058
      %p5124 = scmp.lt.s32.totalorder %s15, 4
      %s5125 = scalar_select %p5124, %s15, 4
      %s5126 = smul.addr %s5125, 32
      %s5127 = smul.addr %s5126, 4
      %s5128 = scalar_lea.vmem %s4, %s5127
      // Predicated region
      $region37: #{tpu_custom_call.1} parent=35 // pred_check
        %p5129 = pneg %p122
      $region38: #{tpu_custom_call.1} parent=35 // pred_check_branch
        %5131 = sbr.rel (%p5129) target = $region40
      $region39: #{tpu_custom_call.1} parent=35 // pred_region
        _
      $region40: #{tpu_custom_call.1} parent=35 // pred_fallthru
        _
    $region36: #{tpu_custom_call.1} parent=5 // pred_fallthru
      _
    %p5132 = scmp.le.s32.totalorder 2, %s10
    // Predicated region
    $region41: #{tpu_custom_call.1} parent=5 // pred_check
      %p5133 = pneg %p5132
    $region42: #{tpu_custom_call.1} parent=5 // pred_check_branch
      %5135 = sbr.rel (%p5133) target = $region44
    $region43: #{tpu_custom_call.1} parent=5 // pred_region
      %s5136 = ssub.s32 %s10, 2
      // Predicated region
      $region45: #{tpu_custom_call.1} parent=43 // pred_check
        %p5137 = pneg %p128
      $region46: #{tpu_custom_call.1} parent=43 // pred_check_branch
        %5139 = sbr.rel (%p5137) target = $region48
      $region47: #{tpu_custom_call.1} parent=43 // pred_region
        %p5140 = scmp.lt.s32.totalorder %s16, 4
        %s5141 = scalar_select %p5140, %s16, 4
        %s5142 = smul.addr %s5141, 32
        %s5143 = smul.addr %s5142, 4
        %s5144 = scalar_lea.vmem %s4, %s5143
      $region48: #{tpu_custom_call.1} parent=43 // pred_fallthru
        _
    $region44: #{tpu_custom_call.1} parent=5 // pred_fallthru
      _
  $region6: #{tpu_custom_call.1} parent=0 // loop_footer
    %s14 = sadd.s32 1, %s10
  $region7: #{tpu_custom_call.1} parent=0 // loop_footer_branch
    %9 = sbr.rel target = $region3
  $region8: #{tpu_custom_call.1} parent=0 // loop_exit
    _

</llo_original>
